<compile_context>
chip_gen: v5e
topology: v5e:2x2
jax: 0.10.0
libtpu: 0.0.40
codegen_flags: <defaults>
</compile_context>

<pallas_src>
import math
import functools

import jax
import jax.numpy as jnp
from jax.experimental import pallas as pl
from jax.experimental.pallas import tpu as pltpu

EPS = 1e-15
LANE = 128


# ------------------------------ kernel helpers ------------------------------ #

def _dot(a, b):
    return jnp.dot(a, b, preferred_element_type=jnp.float32)


def _dot_tn(a, b):
    # a.T @ b without materializing the transpose (MXU trans_a path).
    return jax.lax.dot_general(a, b, (((0,), (0,)), ((), ())),
                               preferred_element_type=jnp.float32)


def _softmax_rows(z):
    m = jnp.max(z, axis=-1, keepdims=True)
    e = jnp.exp(z - m)
    return e * pl.reciprocal(jnp.sum(e, axis=-1, keepdims=True), approx=True)


def _fix_adj(a):
    # dense_mincut_pool "fix and normalize coarsened adjacency":
    #   a[i,i] = 0;  a[i,j] /= (sqrt(d_i)+eps)*(sqrt(d_j)+eps), d = rowsum(a)
    # (a = s^T A s is symmetric, so row-sums == col-sums; using both avoids an
    #  in-kernel transpose while matching the reference normalization.)
    k = a.shape[0]
    r = jax.lax.broadcasted_iota(jnp.int32, (k, k), 0)
    c = jax.lax.broadcasted_iota(jnp.int32, (k, k), 1)
    a = jnp.where(r == c, 0.0, a)
    inv_r = pl.reciprocal(jnp.sqrt(jnp.sum(a, axis=1, keepdims=True)) + EPS,
                          approx=True)                       # (k, 1)
    inv_c = pl.reciprocal(jnp.sqrt(jnp.sum(a, axis=0, keepdims=True)) + EPS,
                          approx=True)                       # (1, k)
    return a * inv_r * inv_c


# ------------------------------ fused kernel -------------------------------- #

def _mincut_net_kernel(counts_ref, x_ref, p_ref, adj_ref,
                       w_h_ref, b_h_ref, pool1_ref, pool2_ref, lin2_ref,
                       out_ref, *, G, N, FIN, H, K1, K2, out_channels):
    f32, bf16 = jnp.float32, jnp.bfloat16
    GN = G * N

    # ---- validity mask from per-graph node counts (SMEM scalars + iota) ----
    base = pl.program_id(0) * G
    node_iota = jax.lax.broadcasted_iota(jnp.int32, (N, 1), 0)
    maskf = jnp.concatenate(
        [(node_iota < counts_ref[base + g]).astype(f32) for g in range(G)],
        axis=0)                                              # (GN, 1)

    # ---- packed weight views (static slices of packed VMEM buffers) ----
    w1  = w_h_ref[0:FIN, :]                                  # GCNConv weight
    w2  = w_h_ref[FIN:FIN + 2 * H, :]                        # conv2 [Wrel;Wroot]
    w3  = w_h_ref[FIN + 2 * H:FIN + 4 * H, :]                # conv3 [Wrel;Wroot]
    wl1 = w_h_ref[FIN + 4 * H:FIN + 5 * H, :]                # lin1 weight
    b1  = b_h_ref[0:1, :]
    b2  = b_h_ref[1:2, :]
    b3  = b_h_ref[2:3, :]
    bl1 = b_h_ref[3:4, :]
    wp1, bp1 = pool1_ref[0:H, :], pool1_ref[H:H + 1, :].astype(f32)
    wp2, bp2 = pool2_ref[0:H, :], pool2_ref[H:H + 1, :].astype(f32)
    wl2, bl2 = lin2_ref[0:H, :],  lin2_ref[H:H + 1, :].astype(f32)

    # ---- conv1: GCNConv.  x@W on the flat (G*N, Fin) slab; per-graph
    #      propagation with precomputed D^-1/2(A+I)D^-1/2; bias, relu, re-mask.
    x_flat = x_ref[...].reshape(GN, FIN)                     # bf16
    xwb = _dot(x_flat, w1).astype(bf16)                      # (GN, H)
    h = jnp.concatenate(
        [_dot(p_ref[g], xwb[g * N:(g + 1) * N, :]) for g in range(G)], axis=0)
    x1 = jnp.maximum(h + b1, 0.0) * maskf                    # (GN, H) f32
    x1b = x1.astype(bf16)

    # ---- pool1 + dense_mincut_pool(x, adj, s, mask) ----
    s = _softmax_rows(_dot(x1b, wp1) + bp1) * maskf          # (GN, K1) f32
    sb = s.astype(bf16)
    x2_parts, a2_parts = [], []
    for g in range(G):
        sg = sb[g * N:(g + 1) * N, :]                        # (N, K1)
        x2_parts.append(_dot_tn(sg, x1b[g * N:(g + 1) * N, :]))   # (K1, H) f32
        sta = _dot_tn(sg, adj_ref[g]).astype(bf16)                # (K1, N)
        a2_parts.append(_fix_adj(_dot(sta, sg)))                  # (K1, K1) f32
    x2 = jnp.concatenate(x2_parts, axis=0)                   # (G*K1, H) f32
    x2b_parts = [v.astype(bf16) for v in x2_parts]
    a2b_parts = [v.astype(bf16) for v in a2_parts]

    # ---- conv2: fused DenseGraphConv -> relu(cat([A@X, X]) @ [Wrel;Wroot]+b)
    ax2 = jnp.concatenate(
        [_dot(a2b_parts[g], x2b_parts[g]) for g in range(G)], axis=0)
    cat2 = jnp.concatenate([ax2, x2], axis=-1).astype(bf16)  # (G*K1, 2H)
    x3 = jnp.maximum(_dot(cat2, w2) + b2, 0.0)               # (G*K1, H) f32
    x3b = x3.astype(bf16)

    # ---- pool2 + dense_mincut_pool(x, adj, s)  (no mask) ----
    s2 = _softmax_rows(_dot(x3b, wp2) + bp2)                 # (G*K1, K2) f32
    s2b = s2.astype(bf16)
    x4_parts, a4_parts = [], []
    for g in range(G):
        s2g = s2b[g * K1:(g + 1) * K1, :]                    # (K1, K2)
        x4_parts.append(_dot_tn(s2g, x3b[g * K1:(g + 1) * K1, :]))  # (K2, H)
        sta2 = _dot_tn(s2g, a2b_parts[g]).astype(bf16)               # (K2, K1)
        a4_parts.append(_fix_adj(_dot(sta2, s2g)))                   # (K2, K2)
    x4 = jnp.concatenate(x4_parts, axis=0)                   # (G*K2, H) f32

    # ---- conv3: fused DenseGraphConv, NO relu ----
    ax4 = jnp.concatenate(
        [_dot(a4_parts[g].astype(bf16), x4_parts[g].astype(bf16))
         for g in range(G)], axis=0)
    cat3 = jnp.concatenate([ax4, x4], axis=-1).astype(bf16)  # (G*K2, 2H)
    x5 = _dot(cat3, w3) + b3                                 # (G*K2, H) f32

    # ---- readout (batched over the G graphs of this block):
    #      mean over clusters -> lin1+relu -> lin2 -> masked log_softmax ----
    gmean = jnp.mean(x5.reshape(G, K2, H), axis=1)           # (G, H) f32
    hid = jnp.maximum(_dot(gmean.astype(bf16), wl1) + bl1, 0.0)
    logits = _dot(hid.astype(bf16), wl2) + bl2               # (G, CPAD) f32

    col = jax.lax.broadcasted_iota(jnp.int32, logits.shape, 1)
    valid = col < out_channels                               # mask lane padding
    logits = jnp.where(valid, logits, -1e30)
    m = jnp.max(logits, axis=-1, keepdims=True)
    z = logits - m
    lse = jnp.log(jnp.sum(jnp.where(valid, jnp.exp(z), 0.0),
                          axis=-1, keepdims=True))
    out_ref[0] = z - lse                                     # (G, CPAD)


# ------------------------------- JAX wrapper -------------------------------- #

def mincut_pool_net_forward(x_dense, adj, node_counts, params, *,
                            out_channels, graphs_per_step=2):
    """x_dense: (B, N, Fin); adj: (B, N, N) {0,1}; node_counts: (B,) int."""
    B, N, FIN = x_dense.shape
    H = params["conv1_w"].shape[1]
    K1 = params["pool1_w"].shape[1]
    K2 = params["pool2_w"].shape[1]
    G = graphs_per_step
    assert B % G == 0, "batch must be divisible by graphs_per_step"
    NB = B // G
    cpad = ((out_channels + LANE - 1) // LANE) * LANE
    f32, bf16 = jnp.float32, jnp.bfloat16

    # GCN propagation matrix D^-1/2 (A+I) D^-1/2, hoisted out of the kernel.
    adj_f = adj.astype(f32)
    a_hat = adj_f + jnp.eye(N, dtype=f32)[None]
    dinv = jax.lax.rsqrt(jnp.sum(a_hat, axis=-1, keepdims=True))
    p_norm = (dinv * a_hat * jnp.swapaxes(dinv, -1, -2)).astype(bf16)

    def row(v):
        return jnp.asarray(v, f32).reshape(1, -1)

    # Packed weight buffers (fewer inputs -> fewer DMA descriptors/buffers).
    w_h = jnp.concatenate([
        params["conv1_w"],
        params["conv2_w_rel"], params["conv2_w_root"],
        params["conv3_w_rel"], params["conv3_w_root"],
        params["lin1_w"],
    ], axis=0).astype(bf16)                                      # (FIN+5H, H)
    b_h = jnp.concatenate([row(params["conv1_b"]), row(params["conv2_b"]),
                           row(params["conv3_b"]), row(params["lin1_b"])],
                          axis=0)                                # (4, H) f32
    pool1_pk = jnp.concatenate([params["pool1_w"].astype(f32),
                                row(params["pool1_b"])], axis=0).astype(bf16)
    pool2_pk = jnp.concatenate([params["pool2_w"].astype(f32),
                                row(params["pool2_b"])], axis=0).astype(bf16)
    # Lane-pad the classifier so the single HBM store is 128-wide (unmasked vst).
    lin2_w = jnp.zeros((H, cpad), f32).at[:, :out_channels].set(
        params["lin2_w"].astype(f32))
    lin2_b = jnp.zeros((1, cpad), f32).at[:, :out_channels].set(
        row(params["lin2_b"]))
    lin2_pk = jnp.concatenate([lin2_w, lin2_b], axis=0).astype(bf16)

    kern = functools.partial(_mincut_net_kernel, G=G, N=N, FIN=FIN, H=H,
                             K1=K1, K2=K2, out_channels=int(out_channels))

    def per_block(shape):
        nz = len(shape) - 1
        return pl.BlockSpec((G,) + tuple(shape[1:]),
                            lambda b, cnt, _nz=nz: (b,) + (0,) * _nz)

    def shared(arr):
        nz = arr.ndim
        return pl.BlockSpec(tuple(arr.shape),
                            lambda b, cnt, _nz=nz: (0,) * _nz)

    grid_spec = pltpu.PrefetchScalarGridSpec(
        num_scalar_prefetch=1,
        grid=(NB,),
        in_specs=[per_block(x_dense.shape), per_block(p_norm.shape),
                  per_block(adj.shape),
                  shared(w_h), shared(b_h),
                  shared(pool1_pk), shared(pool2_pk), shared(lin2_pk)],
        out_specs=pl.BlockSpec((1, G, cpad), lambda b, cnt: (b, 0, 0)),
    )

    out = pl.pallas_call(
        kern,
        grid_spec=grid_spec,
        out_shape=jax.ShapeDtypeStruct((NB, G, cpad), f32),
        compiler_params=pltpu.CompilerParams(
            dimension_semantics=("parallel",)),   # shards blocks across TCs
    )(jnp.asarray(node_counts, jnp.int32),
      x_dense.astype(bf16), p_norm, adj.astype(bf16),
      w_h, b_h, pool1_pk, pool2_pk, lin2_pk)

    return out.reshape(B, cpad)[:, :out_channels]


# ---------------------------------- main ------------------------------------ #

if __name__ == "__main__":
    # Small, deterministic problem (module defaults: hidden_channels=32).
    B = 8                                # graphs
    G = 4                                # graphs per grid step -> grid=(2,)
    IN_CH = 16
    HIDDEN = 32
    OUT_CH = 8
    MAX_NODES = 64                       # constructor arg -> pool sizes
    K1 = math.ceil(0.5 * MAX_NODES)      # 32
    K2 = math.ceil(0.5 * K1)             # 16
    nodes_per_graph = [48, 64, 56, 40, 64, 32, 24, 64]
    NMAX = max(nodes_per_graph)          # 64

    key = jax.random.PRNGKey(0)
    ks = jax.random.split(key, 2 * B + 16)

    # Dense-batched inputs, i.e. what to_dense_batch / to_dense_adj produce
    # from (x, edge_index, batch).
    # TODO(synk): the sparse edge_index -> dense scatter itself is host/XLA
    # data prep, not a Pallas kernel.
    x_dense = jnp.zeros((B, NMAX, IN_CH), jnp.float32)
    adj = jnp.zeros((B, NMAX, NMAX), jnp.float32)
    for b, nb in enumerate(nodes_per_graph):
        xb = jax.random.normal(ks[b], (nb, IN_CH), jnp.float32)
        x_dense = x_dense.at[b, :nb, :].set(xb)
        e = (jax.random.uniform(ks[B + b], (nb, nb)) < 0.15).astype(jnp.float32)
        e = jnp.maximum(e, e.T) * (1.0 - jnp.eye(nb, dtype=jnp.float32))
        adj = adj.at[b, :nb, :nb].set(e)
    node_counts = jnp.asarray(nodes_per_graph, dtype=jnp.int32)

    def uni(k, shape, fan_in):
        bound = 1.0 / math.sqrt(fan_in)
        return jax.random.uniform(k, shape, jnp.float32, -bound, bound)

    kit = iter(ks[2 * B:])
    params = {
        "conv1_w":      uni(next(kit), (IN_CH, HIDDEN), IN_CH),
        "conv1_b":      uni(next(kit), (HIDDEN,), IN_CH),
        "pool1_w":      uni(next(kit), (HIDDEN, K1), HIDDEN),
        "pool1_b":      uni(next(kit), (K1,), HIDDEN),
        "conv2_w_rel":  uni(next(kit), (HIDDEN, HIDDEN), HIDDEN),
        "conv2_w_root": uni(next(kit), (HIDDEN, HIDDEN), HIDDEN),
        "conv2_b":      uni(next(kit), (HIDDEN,), HIDDEN),
        "pool2_w":      uni(next(kit), (HIDDEN, K2), HIDDEN),
        "pool2_b":      uni(next(kit), (K2,), HIDDEN),
        "conv3_w_rel":  uni(next(kit), (HIDDEN, HIDDEN), HIDDEN),
        "conv3_w_root": uni(next(kit), (HIDDEN, HIDDEN), HIDDEN),
        "conv3_b":      uni(next(kit), (HIDDEN,), HIDDEN),
        "lin1_w":       uni(next(kit), (HIDDEN, HIDDEN), HIDDEN),
        "lin1_b":       uni(next(kit), (HIDDEN,), HIDDEN),
        "lin2_w":       uni(next(kit), (HIDDEN, OUT_CH), HIDDEN),
        "lin2_b":       uni(next(kit), (OUT_CH,), HIDDEN),
    }

    out = mincut_pool_net_forward(x_dense, adj, node_counts, params,
                                  out_channels=OUT_CH, graphs_per_step=G)
    out = jax.block_until_ready(out)

    assert out.shape == (B, OUT_CH)
    assert bool(jnp.all(jnp.isfinite(out)))
    # log_softmax rows must exponentiate-sum to 1 (final softmax math is f32)
    assert bool(jnp.all(jnp.abs(jnp.sum(jnp.exp(out), axis=-1) - 1.0) < 1e-3))
    print("KERNEL_OK")
</pallas_src>

<mosaic_0001>
module attributes {stable_mosaic.version = 11 : i64} {
  func.func @_mincut_net_kernel(%arg0: i32, %arg1: memref<8xi32, #tpu.memory_space<smem>>, %arg2: memref<4x64x16xbf16, #tpu.memory_space<vmem>>, %arg3: memref<4x64x64xbf16, #tpu.memory_space<vmem>>, %arg4: memref<4x64x64xbf16, #tpu.memory_space<vmem>>, %arg5: memref<176x32xbf16, #tpu.memory_space<vmem>>, %arg6: memref<4x32xf32, #tpu.memory_space<vmem>>, %arg7: memref<33x32xbf16, #tpu.memory_space<vmem>>, %arg8: memref<33x16xbf16, #tpu.memory_space<vmem>>, %arg9: memref<33x128xbf16, #tpu.memory_space<vmem>>, %arg10: memref<1x4x128xf32, #tpu.memory_space<vmem>>) attributes {dimension_semantics = [#tpu.dimension_semantics<parallel>], iteration_bounds = array<i64: 2>, scalar_prefetch = 1 : i64, scratch_operands = 0 : i64, tpu.core_type = #tpu.core_type<tc>, window_params = [{transform_indices = @transform_0, window_bounds = array<i64: 4, 64, 16>}, {transform_indices = @transform_1, window_bounds = array<i64: 4, 64, 64>}, {transform_indices = @transform_2, window_bounds = array<i64: 4, 64, 64>}, {pipeline_mode = #tpu.pipeline_mode<synchronous>, transform_indices = @transform_3, window_bounds = array<i64: 176, 32>}, {pipeline_mode = #tpu.pipeline_mode<synchronous>, transform_indices = @transform_4, window_bounds = array<i64: 4, 32>}, {pipeline_mode = #tpu.pipeline_mode<synchronous>, transform_indices = @transform_5, window_bounds = array<i64: 33, 32>}, {pipeline_mode = #tpu.pipeline_mode<synchronous>, transform_indices = @transform_6, window_bounds = array<i64: 33, 16>}, {pipeline_mode = #tpu.pipeline_mode<synchronous>, transform_indices = @transform_7, window_bounds = array<i64: 33, 128>}, {transform_indices = @transform_8, window_bounds = array<i64: 1, 4, 128>}]} {
    %c4_i32 = arith.constant 4 : i32
    %0 = arith.muli %arg0, %c4_i32 : i32
    %1 = tpu.iota {dimensions = array<i32: 0>} : vector<64x1xi32>
    %c0_i32 = arith.constant 0 : i32
    %2 = arith.addi %0, %c0_i32 : i32
    %3 = arith.index_cast %2 : i32 to index
    %4 = memref.load %arg1[%3] : memref<8xi32, #tpu.memory_space<smem>>
    %5 = vector.broadcast %4 : i32 to vector<64x1xi32>
    %6 = arith.cmpi slt, %1, %5 : vector<64x1xi32>
    %7 = arith.extui %6 : vector<64x1xi1> to vector<64x1xi32>
    %8 = arith.sitofp %7 : vector<64x1xi32> to vector<64x1xf32>
    %c1_i32 = arith.constant 1 : i32
    %9 = arith.addi %0, %c1_i32 : i32
    %10 = arith.index_cast %9 : i32 to index
    %11 = memref.load %arg1[%10] : memref<8xi32, #tpu.memory_space<smem>>
    %12 = vector.broadcast %11 : i32 to vector<64x1xi32>
    %13 = arith.cmpi slt, %1, %12 : vector<64x1xi32>
    %14 = arith.extui %13 : vector<64x1xi1> to vector<64x1xi32>
    %15 = arith.sitofp %14 : vector<64x1xi32> to vector<64x1xf32>
    %c2_i32 = arith.constant 2 : i32
    %16 = arith.addi %0, %c2_i32 : i32
    %17 = arith.index_cast %16 : i32 to index
    %18 = memref.load %arg1[%17] : memref<8xi32, #tpu.memory_space<smem>>
    %19 = vector.broadcast %18 : i32 to vector<64x1xi32>
    %20 = arith.cmpi slt, %1, %19 : vector<64x1xi32>
    %21 = arith.extui %20 : vector<64x1xi1> to vector<64x1xi32>
    %22 = arith.sitofp %21 : vector<64x1xi32> to vector<64x1xf32>
    %c3_i32 = arith.constant 3 : i32
    %23 = arith.addi %0, %c3_i32 : i32
    %24 = arith.index_cast %23 : i32 to index
    %25 = memref.load %arg1[%24] : memref<8xi32, #tpu.memory_space<smem>>
    %26 = vector.broadcast %25 : i32 to vector<64x1xi32>
    %27 = arith.cmpi slt, %1, %26 : vector<64x1xi32>
    %28 = arith.extui %27 : vector<64x1xi1> to vector<64x1xi32>
    %29 = arith.sitofp %28 : vector<64x1xi32> to vector<64x1xf32>
    %30 = tpu.concatenate %8, %15, %22, %29 in 0 : vector<64x1xf32>, vector<64x1xf32>, vector<64x1xf32>, vector<64x1xf32> -> vector<256x1xf32>
    %c0 = arith.constant 0 : index
    %c0_0 = arith.constant 0 : index
    %31 = vector.load %arg5[%c0, %c0_0] : memref<176x32xbf16, #tpu.memory_space<vmem>>, vector<16x32xbf16>
    %c16 = arith.constant 16 : index
    %c0_1 = arith.constant 0 : index
    %32 = vector.load %arg5[%c16, %c0_1] : memref<176x32xbf16, #tpu.memory_space<vmem>>, vector<64x32xbf16>
    %c80 = arith.constant 80 : index
    %c0_2 = arith.constant 0 : index
    %33 = vector.load %arg5[%c80, %c0_2] : memref<176x32xbf16, #tpu.memory_space<vmem>>, vector<64x32xbf16>
    %c144 = arith.constant 144 : index
    %c0_3 = arith.constant 0 : index
    %34 = vector.load %arg5[%c144, %c0_3] : memref<176x32xbf16, #tpu.memory_space<vmem>>, vector<32x32xbf16>
    %c0_4 = arith.constant 0 : index
    %c0_5 = arith.constant 0 : index
    %35 = vector.load %arg6[%c0_4, %c0_5] : memref<4x32xf32, #tpu.memory_space<vmem>>, vector<1x32xf32>
    %c1 = arith.constant 1 : index
    %c0_6 = arith.constant 0 : index
    %36 = vector.load %arg6[%c1, %c0_6] : memref<4x32xf32, #tpu.memory_space<vmem>>, vector<1x32xf32>
    %c2 = arith.constant 2 : index
    %c0_7 = arith.constant 0 : index
    %37 = vector.load %arg6[%c2, %c0_7] : memref<4x32xf32, #tpu.memory_space<vmem>>, vector<1x32xf32>
    %c3 = arith.constant 3 : index
    %c0_8 = arith.constant 0 : index
    %38 = vector.load %arg6[%c3, %c0_8] : memref<4x32xf32, #tpu.memory_space<vmem>>, vector<1x32xf32>
    %c0_9 = arith.constant 0 : index
    %c0_10 = arith.constant 0 : index
    %39 = vector.load %arg7[%c0_9, %c0_10] : memref<33x32xbf16, #tpu.memory_space<vmem>>, vector<32x32xbf16>
    %c32 = arith.constant 32 : index
    %c0_11 = arith.constant 0 : index
    %40 = vector.load %arg7[%c32, %c0_11] : memref<33x32xbf16, #tpu.memory_space<vmem>>, vector<1x32xbf16>
    %41 = arith.extf %40 : vector<1x32xbf16> to vector<1x32xf32>
    %c0_12 = arith.constant 0 : index
    %c0_13 = arith.constant 0 : index
    %42 = vector.load %arg8[%c0_12, %c0_13] : memref<33x16xbf16, #tpu.memory_space<vmem>>, vector<32x16xbf16>
    %c32_14 = arith.constant 32 : index
    %c0_15 = arith.constant 0 : index
    %43 = vector.load %arg8[%c32_14, %c0_15] : memref<33x16xbf16, #tpu.memory_space<vmem>>, vector<1x16xbf16>
    %44 = arith.extf %43 : vector<1x16xbf16> to vector<1x16xf32>
    %c0_16 = arith.constant 0 : index
    %c0_17 = arith.constant 0 : index
    %45 = vector.load %arg9[%c0_16, %c0_17] : memref<33x128xbf16, #tpu.memory_space<vmem>>, vector<32x128xbf16>
    %c32_18 = arith.constant 32 : index
    %c0_19 = arith.constant 0 : index
    %46 = vector.load %arg9[%c32_18, %c0_19] : memref<33x128xbf16, #tpu.memory_space<vmem>>, vector<1x128xbf16>
    %47 = arith.extf %46 : vector<1x128xbf16> to vector<1x128xf32>
    %c0_20 = arith.constant 0 : index
    %c0_21 = arith.constant 0 : index
    %c0_22 = arith.constant 0 : index
    %48 = vector.load %arg2[%c0_20, %c0_21, %c0_22] : memref<4x64x16xbf16, #tpu.memory_space<vmem>>, vector<4x64x16xbf16>
    %49 = vector.shape_cast %48 : vector<4x64x16xbf16> to vector<256x16xbf16>
    %cst = arith.constant dense<0.000000e+00> : vector<256x32xf32>
    %50 = tpu.matmul %49, %31, %cst {dimension_numbers = #tpu.dot_dimension_numbers<[1], [0], [0], [1], [0, 0, 1, 1], [], []>} : vector<256x16xbf16>, vector<16x32xbf16>, vector<256x32xf32> -> vector<256x32xf32>
    %51 = arith.truncf %50 : vector<256x32xf32> to vector<256x32xbf16>
    %c0_23 = arith.constant 0 : index
    %c0_24 = arith.constant 0 : index
    %c0_25 = arith.constant 0 : index
    %52 = vector.load %arg3[%c0_23, %c0_24, %c0_25] : memref<4x64x64xbf16, #tpu.memory_space<vmem>>, vector<1x64x64xbf16>
    %53 = vector.shape_cast %52 : vector<1x64x64xbf16> to vector<64x64xbf16>
    %54 = vector.extract_strided_slice %51 {offsets = [0, 0], sizes = [64, 32], strides = [1, 1]} : vector<256x32xbf16> to vector<64x32xbf16>
    %cst_26 = arith.constant dense<0.000000e+00> : vector<64x32xf32>
    %55 = tpu.matmul %53, %54, %cst_26 {dimension_numbers = #tpu.dot_dimension_numbers<[1], [0], [0], [1], [0, 0, 1, 1], [], []>} : vector<64x64xbf16>, vector<64x32xbf16>, vector<64x32xf32> -> vector<64x32xf32>
    %c1_27 = arith.constant 1 : index
    %c0_28 = arith.constant 0 : index
    %c0_29 = arith.constant 0 : index
    %56 = vector.load %arg3[%c1_27, %c0_28, %c0_29] : memref<4x64x64xbf16, #tpu.memory_space<vmem>>, vector<1x64x64xbf16>
    %57 = vector.shape_cast %56 : vector<1x64x64xbf16> to vector<64x64xbf16>
    %58 = vector.extract_strided_slice %51 {offsets = [64, 0], sizes = [64, 32], strides = [1, 1]} : vector<256x32xbf16> to vector<64x32xbf16>
    %cst_30 = arith.constant dense<0.000000e+00> : vector<64x32xf32>
    %59 = tpu.matmul %57, %58, %cst_30 {dimension_numbers = #tpu.dot_dimension_numbers<[1], [0], [0], [1], [0, 0, 1, 1], [], []>} : vector<64x64xbf16>, vector<64x32xbf16>, vector<64x32xf32> -> vector<64x32xf32>
    %c2_31 = arith.constant 2 : index
    %c0_32 = arith.constant 0 : index
    %c0_33 = arith.constant 0 : index
    %60 = vector.load %arg3[%c2_31, %c0_32, %c0_33] : memref<4x64x64xbf16, #tpu.memory_space<vmem>>, vector<1x64x64xbf16>
    %61 = vector.shape_cast %60 : vector<1x64x64xbf16> to vector<64x64xbf16>
    %62 = vector.extract_strided_slice %51 {offsets = [128, 0], sizes = [64, 32], strides = [1, 1]} : vector<256x32xbf16> to vector<64x32xbf16>
    %cst_34 = arith.constant dense<0.000000e+00> : vector<64x32xf32>
    %63 = tpu.matmul %61, %62, %cst_34 {dimension_numbers = #tpu.dot_dimension_numbers<[1], [0], [0], [1], [0, 0, 1, 1], [], []>} : vector<64x64xbf16>, vector<64x32xbf16>, vector<64x32xf32> -> vector<64x32xf32>
    %c3_35 = arith.constant 3 : index
    %c0_36 = arith.constant 0 : index
    %c0_37 = arith.constant 0 : index
    %64 = vector.load %arg3[%c3_35, %c0_36, %c0_37] : memref<4x64x64xbf16, #tpu.memory_space<vmem>>, vector<1x64x64xbf16>
    %65 = vector.shape_cast %64 : vector<1x64x64xbf16> to vector<64x64xbf16>
    %66 = vector.extract_strided_slice %51 {offsets = [192, 0], sizes = [64, 32], strides = [1, 1]} : vector<256x32xbf16> to vector<64x32xbf16>
    %cst_38 = arith.constant dense<0.000000e+00> : vector<64x32xf32>
    %67 = tpu.matmul %65, %66, %cst_38 {dimension_numbers = #tpu.dot_dimension_numbers<[1], [0], [0], [1], [0, 0, 1, 1], [], []>} : vector<64x64xbf16>, vector<64x32xbf16>, vector<64x32xf32> -> vector<64x32xf32>
    %68 = tpu.concatenate %55, %59, %63, %67 in 0 : vector<64x32xf32>, vector<64x32xf32>, vector<64x32xf32>, vector<64x32xf32> -> vector<256x32xf32>
    %69 = vector.broadcast %35 : vector<1x32xf32> to vector<256x32xf32>
    %70 = arith.addf %68, %69 : vector<256x32xf32>
    %cst_39 = arith.constant 0.000000e+00 : f32
    %71 = vector.broadcast %cst_39 : f32 to vector<256x32xf32>
    %72 = arith.maximumf %70, %71 : vector<256x32xf32>
    %73 = vector.broadcast %30 : vector<256x1xf32> to vector<256x32xf32>
    %74 = arith.mulf %72, %73 : vector<256x32xf32>
    %75 = arith.truncf %74 : vector<256x32xf32> to vector<256x32xbf16>
    %cst_40 = arith.constant dense<0.000000e+00> : vector<256x32xf32>
    %76 = tpu.matmul %75, %39, %cst_40 {dimension_numbers = #tpu.dot_dimension_numbers<[1], [0], [0], [1], [0, 0, 1, 1], [], []>} : vector<256x32xbf16>, vector<32x32xbf16>, vector<256x32xf32> -> vector<256x32xf32>
    %77 = vector.broadcast %41 : vector<1x32xf32> to vector<256x32xf32>
    %78 = arith.addf %76, %77 : vector<256x32xf32>
    %cst_41 = arith.constant dense<0xFF800000> : vector<256xf32>
    %79 = vector.multi_reduction <maximumf>, %78, %cst_41 [1] : vector<256x32xf32> to vector<256xf32>
    %80 = vector.shape_cast %79 : vector<256xf32> to vector<256x1xf32>
    %81 = vector.broadcast %80 : vector<256x1xf32> to vector<256x32xf32>
    %82 = arith.subf %78, %81 : vector<256x32xf32>
    %83 = math.exp %82 : vector<256x32xf32>
    %cst_42 = arith.constant dense<0.000000e+00> : vector<256xf32>
    %84 = vector.multi_reduction <add>, %83, %cst_42 [1] : vector<256x32xf32> to vector<256xf32>
    %85 = vector.shape_cast %84 : vector<256xf32> to vector<256x1xf32>
    %86 = tpu.reciprocal %85 {approx = true} : vector<256x1xf32> -> vector<256x1xf32>
    %87 = vector.broadcast %86 : vector<256x1xf32> to vector<256x32xf32>
    %88 = arith.mulf %83, %87 : vector<256x32xf32>
    %89 = vector.broadcast %30 : vector<256x1xf32> to vector<256x32xf32>
    %90 = arith.mulf %88, %89 : vector<256x32xf32>
    %91 = arith.truncf %90 : vector<256x32xf32> to vector<256x32xbf16>
    %92 = vector.extract_strided_slice %91 {offsets = [0, 0], sizes = [64, 32], strides = [1, 1]} : vector<256x32xbf16> to vector<64x32xbf16>
    %93 = vector.extract_strided_slice %75 {offsets = [0, 0], sizes = [64, 32], strides = [1, 1]} : vector<256x32xbf16> to vector<64x32xbf16>
    %cst_43 = arith.constant dense<0.000000e+00> : vector<32x32xf32>
    %94 = tpu.matmul %92, %93, %cst_43 {dimension_numbers = #tpu.dot_dimension_numbers<[0], [0], [1], [1], [0, 1, 1, 1], [], []>} : vector<64x32xbf16>, vector<64x32xbf16>, vector<32x32xf32> -> vector<32x32xf32>
    %c0_44 = arith.constant 0 : index
    %c0_45 = arith.constant 0 : index
    %c0_46 = arith.constant 0 : index
    %95 = vector.load %arg4[%c0_44, %c0_45, %c0_46] : memref<4x64x64xbf16, #tpu.memory_space<vmem>>, vector<1x64x64xbf16>
    %96 = vector.shape_cast %95 : vector<1x64x64xbf16> to vector<64x64xbf16>
    %cst_47 = arith.constant dense<0.000000e+00> : vector<32x64xf32>
    %97 = tpu.matmul %92, %96, %cst_47 {dimension_numbers = #tpu.dot_dimension_numbers<[0], [0], [1], [1], [0, 1, 1, 1], [], []>} : vector<64x32xbf16>, vector<64x64xbf16>, vector<32x64xf32> -> vector<32x64xf32>
    %98 = arith.truncf %97 : vector<32x64xf32> to vector<32x64xbf16>
    %cst_48 = arith.constant dense<0.000000e+00> : vector<32x32xf32>
    %99 = tpu.matmul %98, %92, %cst_48 {dimension_numbers = #tpu.dot_dimension_numbers<[1], [0], [0], [1], [0, 0, 1, 1], [], []>} : vector<32x64xbf16>, vector<64x32xbf16>, vector<32x32xf32> -> vector<32x32xf32>
    %100 = tpu.iota {dimensions = array<i32: 0>} : vector<32x32xi32>
    %101 = tpu.iota {dimensions = array<i32: 1>} : vector<32x32xi32>
    %102 = arith.cmpi eq, %100, %101 : vector<32x32xi32>
    %cst_49 = arith.constant 0.000000e+00 : f32
    %103 = vector.broadcast %cst_49 : f32 to vector<32x32xf32>
    %104 = arith.select %102, %103, %99 : vector<32x32xi1>, vector<32x32xf32>
    %cst_50 = arith.constant dense<0.000000e+00> : vector<32xf32>
    %105 = vector.multi_reduction <add>, %104, %cst_50 [1] : vector<32x32xf32> to vector<32xf32>
    %106 = vector.shape_cast %105 : vector<32xf32> to vector<32x1xf32>
    %107 = math.sqrt %106 : vector<32x1xf32>
    %cst_51 = arith.constant 1.000000e-15 : f32
    %108 = vector.broadcast %cst_51 : f32 to vector<32x1xf32>
    %109 = arith.addf %107, %108 : vector<32x1xf32>
    %110 = tpu.reciprocal %109 {approx = true} : vector<32x1xf32> -> vector<32x1xf32>
    %cst_52 = arith.constant dense<0.000000e+00> : vector<32xf32>
    %111 = vector.multi_reduction <add>, %104, %cst_52 [0] : vector<32x32xf32> to vector<32xf32>
    %112 = vector.shape_cast %111 : vector<32xf32> to vector<1x32xf32>
    %113 = math.sqrt %112 : vector<1x32xf32>
    %cst_53 = arith.constant 1.000000e-15 : f32
    %114 = vector.broadcast %cst_53 : f32 to vector<1x32xf32>
    %115 = arith.addf %113, %114 : vector<1x32xf32>
    %116 = tpu.reciprocal %115 {approx = true} : vector<1x32xf32> -> vector<1x32xf32>
    %117 = vector.broadcast %110 : vector<32x1xf32> to vector<32x32xf32>
    %118 = arith.mulf %104, %117 : vector<32x32xf32>
    %119 = vector.broadcast %116 : vector<1x32xf32> to vector<32x32xf32>
    %120 = arith.mulf %118, %119 : vector<32x32xf32>
    %121 = vector.extract_strided_slice %91 {offsets = [64, 0], sizes = [64, 32], strides = [1, 1]} : vector<256x32xbf16> to vector<64x32xbf16>
    %122 = vector.extract_strided_slice %75 {offsets = [64, 0], sizes = [64, 32], strides = [1, 1]} : vector<256x32xbf16> to vector<64x32xbf16>
    %cst_54 = arith.constant dense<0.000000e+00> : vector<32x32xf32>
    %123 = tpu.matmul %121, %122, %cst_54 {dimension_numbers = #tpu.dot_dimension_numbers<[0], [0], [1], [1], [0, 1, 1, 1], [], []>} : vector<64x32xbf16>, vector<64x32xbf16>, vector<32x32xf32> -> vector<32x32xf32>
    %c1_55 = arith.constant 1 : index
    %c0_56 = arith.constant 0 : index
    %c0_57 = arith.constant 0 : index
    %124 = vector.load %arg4[%c1_55, %c0_56, %c0_57] : memref<4x64x64xbf16, #tpu.memory_space<vmem>>, vector<1x64x64xbf16>
    %125 = vector.shape_cast %124 : vector<1x64x64xbf16> to vector<64x64xbf16>
    %cst_58 = arith.constant dense<0.000000e+00> : vector<32x64xf32>
    %126 = tpu.matmul %121, %125, %cst_58 {dimension_numbers = #tpu.dot_dimension_numbers<[0], [0], [1], [1], [0, 1, 1, 1], [], []>} : vector<64x32xbf16>, vector<64x64xbf16>, vector<32x64xf32> -> vector<32x64xf32>
    %127 = arith.truncf %126 : vector<32x64xf32> to vector<32x64xbf16>
    %cst_59 = arith.constant dense<0.000000e+00> : vector<32x32xf32>
    %128 = tpu.matmul %127, %121, %cst_59 {dimension_numbers = #tpu.dot_dimension_numbers<[1], [0], [0], [1], [0, 0, 1, 1], [], []>} : vector<32x64xbf16>, vector<64x32xbf16>, vector<32x32xf32> -> vector<32x32xf32>
    %129 = tpu.iota {dimensions = array<i32: 0>} : vector<32x32xi32>
    %130 = tpu.iota {dimensions = array<i32: 1>} : vector<32x32xi32>
    %131 = arith.cmpi eq, %129, %130 : vector<32x32xi32>
    %cst_60 = arith.constant 0.000000e+00 : f32
    %132 = vector.broadcast %cst_60 : f32 to vector<32x32xf32>
    %133 = arith.select %131, %132, %128 : vector<32x32xi1>, vector<32x32xf32>
    %cst_61 = arith.constant dense<0.000000e+00> : vector<32xf32>
    %134 = vector.multi_reduction <add>, %133, %cst_61 [1] : vector<32x32xf32> to vector<32xf32>
    %135 = vector.shape_cast %134 : vector<32xf32> to vector<32x1xf32>
    %136 = math.sqrt %135 : vector<32x1xf32>
    %cst_62 = arith.constant 1.000000e-15 : f32
    %137 = vector.broadcast %cst_62 : f32 to vector<32x1xf32>
    %138 = arith.addf %136, %137 : vector<32x1xf32>
    %139 = tpu.reciprocal %138 {approx = true} : vector<32x1xf32> -> vector<32x1xf32>
    %cst_63 = arith.constant dense<0.000000e+00> : vector<32xf32>
    %140 = vector.multi_reduction <add>, %133, %cst_63 [0] : vector<32x32xf32> to vector<32xf32>
    %141 = vector.shape_cast %140 : vector<32xf32> to vector<1x32xf32>
    %142 = math.sqrt %141 : vector<1x32xf32>
    %cst_64 = arith.constant 1.000000e-15 : f32
    %143 = vector.broadcast %cst_64 : f32 to vector<1x32xf32>
    %144 = arith.addf %142, %143 : vector<1x32xf32>
    %145 = tpu.reciprocal %144 {approx = true} : vector<1x32xf32> -> vector<1x32xf32>
    %146 = vector.broadcast %139 : vector<32x1xf32> to vector<32x32xf32>
    %147 = arith.mulf %133, %146 : vector<32x32xf32>
    %148 = vector.broadcast %145 : vector<1x32xf32> to vector<32x32xf32>
    %149 = arith.mulf %147, %148 : vector<32x32xf32>
    %150 = vector.extract_strided_slice %91 {offsets = [128, 0], sizes = [64, 32], strides = [1, 1]} : vector<256x32xbf16> to vector<64x32xbf16>
    %151 = vector.extract_strided_slice %75 {offsets = [128, 0], sizes = [64, 32], strides = [1, 1]} : vector<256x32xbf16> to vector<64x32xbf16>
    %cst_65 = arith.constant dense<0.000000e+00> : vector<32x32xf32>
    %152 = tpu.matmul %150, %151, %cst_65 {dimension_numbers = #tpu.dot_dimension_numbers<[0], [0], [1], [1], [0, 1, 1, 1], [], []>} : vector<64x32xbf16>, vector<64x32xbf16>, vector<32x32xf32> -> vector<32x32xf32>
    %c2_66 = arith.constant 2 : index
    %c0_67 = arith.constant 0 : index
    %c0_68 = arith.constant 0 : index
    %153 = vector.load %arg4[%c2_66, %c0_67, %c0_68] : memref<4x64x64xbf16, #tpu.memory_space<vmem>>, vector<1x64x64xbf16>
    %154 = vector.shape_cast %153 : vector<1x64x64xbf16> to vector<64x64xbf16>
    %cst_69 = arith.constant dense<0.000000e+00> : vector<32x64xf32>
    %155 = tpu.matmul %150, %154, %cst_69 {dimension_numbers = #tpu.dot_dimension_numbers<[0], [0], [1], [1], [0, 1, 1, 1], [], []>} : vector<64x32xbf16>, vector<64x64xbf16>, vector<32x64xf32> -> vector<32x64xf32>
    %156 = arith.truncf %155 : vector<32x64xf32> to vector<32x64xbf16>
    %cst_70 = arith.constant dense<0.000000e+00> : vector<32x32xf32>
    %157 = tpu.matmul %156, %150, %cst_70 {dimension_numbers = #tpu.dot_dimension_numbers<[1], [0], [0], [1], [0, 0, 1, 1], [], []>} : vector<32x64xbf16>, vector<64x32xbf16>, vector<32x32xf32> -> vector<32x32xf32>
    %158 = tpu.iota {dimensions = array<i32: 0>} : vector<32x32xi32>
    %159 = tpu.iota {dimensions = array<i32: 1>} : vector<32x32xi32>
    %160 = arith.cmpi eq, %158, %159 : vector<32x32xi32>
    %cst_71 = arith.constant 0.000000e+00 : f32
    %161 = vector.broadcast %cst_71 : f32 to vector<32x32xf32>
    %162 = arith.select %160, %161, %157 : vector<32x32xi1>, vector<32x32xf32>
    %cst_72 = arith.constant dense<0.000000e+00> : vector<32xf32>
    %163 = vector.multi_reduction <add>, %162, %cst_72 [1] : vector<32x32xf32> to vector<32xf32>
    %164 = vector.shape_cast %163 : vector<32xf32> to vector<32x1xf32>
    %165 = math.sqrt %164 : vector<32x1xf32>
    %cst_73 = arith.constant 1.000000e-15 : f32
    %166 = vector.broadcast %cst_73 : f32 to vector<32x1xf32>
    %167 = arith.addf %165, %166 : vector<32x1xf32>
    %168 = tpu.reciprocal %167 {approx = true} : vector<32x1xf32> -> vector<32x1xf32>
    %cst_74 = arith.constant dense<0.000000e+00> : vector<32xf32>
    %169 = vector.multi_reduction <add>, %162, %cst_74 [0] : vector<32x32xf32> to vector<32xf32>
    %170 = vector.shape_cast %169 : vector<32xf32> to vector<1x32xf32>
    %171 = math.sqrt %170 : vector<1x32xf32>
    %cst_75 = arith.constant 1.000000e-15 : f32
    %172 = vector.broadcast %cst_75 : f32 to vector<1x32xf32>
    %173 = arith.addf %171, %172 : vector<1x32xf32>
    %174 = tpu.reciprocal %173 {approx = true} : vector<1x32xf32> -> vector<1x32xf32>
    %175 = vector.broadcast %168 : vector<32x1xf32> to vector<32x32xf32>
    %176 = arith.mulf %162, %175 : vector<32x32xf32>
    %177 = vector.broadcast %174 : vector<1x32xf32> to vector<32x32xf32>
    %178 = arith.mulf %176, %177 : vector<32x32xf32>
    %179 = vector.extract_strided_slice %91 {offsets = [192, 0], sizes = [64, 32], strides = [1, 1]} : vector<256x32xbf16> to vector<64x32xbf16>
    %180 = vector.extract_strided_slice %75 {offsets = [192, 0], sizes = [64, 32], strides = [1, 1]} : vector<256x32xbf16> to vector<64x32xbf16>
    %cst_76 = arith.constant dense<0.000000e+00> : vector<32x32xf32>
    %181 = tpu.matmul %179, %180, %cst_76 {dimension_numbers = #tpu.dot_dimension_numbers<[0], [0], [1], [1], [0, 1, 1, 1], [], []>} : vector<64x32xbf16>, vector<64x32xbf16>, vector<32x32xf32> -> vector<32x32xf32>
    %c3_77 = arith.constant 3 : index
    %c0_78 = arith.constant 0 : index
    %c0_79 = arith.constant 0 : index
    %182 = vector.load %arg4[%c3_77, %c0_78, %c0_79] : memref<4x64x64xbf16, #tpu.memory_space<vmem>>, vector<1x64x64xbf16>
    %183 = vector.shape_cast %182 : vector<1x64x64xbf16> to vector<64x64xbf16>
    %cst_80 = arith.constant dense<0.000000e+00> : vector<32x64xf32>
    %184 = tpu.matmul %179, %183, %cst_80 {dimension_numbers = #tpu.dot_dimension_numbers<[0], [0], [1], [1], [0, 1, 1, 1], [], []>} : vector<64x32xbf16>, vector<64x64xbf16>, vector<32x64xf32> -> vector<32x64xf32>
    %185 = arith.truncf %184 : vector<32x64xf32> to vector<32x64xbf16>
    %cst_81 = arith.constant dense<0.000000e+00> : vector<32x32xf32>
    %186 = tpu.matmul %185, %179, %cst_81 {dimension_numbers = #tpu.dot_dimension_numbers<[1], [0], [0], [1], [0, 0, 1, 1], [], []>} : vector<32x64xbf16>, vector<64x32xbf16>, vector<32x32xf32> -> vector<32x32xf32>
    %187 = tpu.iota {dimensions = array<i32: 0>} : vector<32x32xi32>
    %188 = tpu.iota {dimensions = array<i32: 1>} : vector<32x32xi32>
    %189 = arith.cmpi eq, %187, %188 : vector<32x32xi32>
    %cst_82 = arith.constant 0.000000e+00 : f32
    %190 = vector.broadcast %cst_82 : f32 to vector<32x32xf32>
    %191 = arith.select %189, %190, %186 : vector<32x32xi1>, vector<32x32xf32>
    %cst_83 = arith.constant dense<0.000000e+00> : vector<32xf32>
    %192 = vector.multi_reduction <add>, %191, %cst_83 [1] : vector<32x32xf32> to vector<32xf32>
    %193 = vector.shape_cast %192 : vector<32xf32> to vector<32x1xf32>
    %194 = math.sqrt %193 : vector<32x1xf32>
    %cst_84 = arith.constant 1.000000e-15 : f32
    %195 = vector.broadcast %cst_84 : f32 to vector<32x1xf32>
    %196 = arith.addf %194, %195 : vector<32x1xf32>
    %197 = tpu.reciprocal %196 {approx = true} : vector<32x1xf32> -> vector<32x1xf32>
    %cst_85 = arith.constant dense<0.000000e+00> : vector<32xf32>
    %198 = vector.multi_reduction <add>, %191, %cst_85 [0] : vector<32x32xf32> to vector<32xf32>
    %199 = vector.shape_cast %198 : vector<32xf32> to vector<1x32xf32>
    %200 = math.sqrt %199 : vector<1x32xf32>
    %cst_86 = arith.constant 1.000000e-15 : f32
    %201 = vector.broadcast %cst_86 : f32 to vector<1x32xf32>
    %202 = arith.addf %200, %201 : vector<1x32xf32>
    %203 = tpu.reciprocal %202 {approx = true} : vector<1x32xf32> -> vector<1x32xf32>
    %204 = vector.broadcast %197 : vector<32x1xf32> to vector<32x32xf32>
    %205 = arith.mulf %191, %204 : vector<32x32xf32>
    %206 = vector.broadcast %203 : vector<1x32xf32> to vector<32x32xf32>
    %207 = arith.mulf %205, %206 : vector<32x32xf32>
    %208 = tpu.concatenate %94, %123, %152, %181 in 0 : vector<32x32xf32>, vector<32x32xf32>, vector<32x32xf32>, vector<32x32xf32> -> vector<128x32xf32>
    %209 = arith.truncf %94 : vector<32x32xf32> to vector<32x32xbf16>
    %210 = arith.truncf %123 : vector<32x32xf32> to vector<32x32xbf16>
    %211 = arith.truncf %152 : vector<32x32xf32> to vector<32x32xbf16>
    %212 = arith.truncf %181 : vector<32x32xf32> to vector<32x32xbf16>
    %213 = arith.truncf %120 : vector<32x32xf32> to vector<32x32xbf16>
    %214 = arith.truncf %149 : vector<32x32xf32> to vector<32x32xbf16>
    %215 = arith.truncf %178 : vector<32x32xf32> to vector<32x32xbf16>
    %216 = arith.truncf %207 : vector<32x32xf32> to vector<32x32xbf16>
    %cst_87 = arith.constant dense<0.000000e+00> : vector<32x32xf32>
    %217 = tpu.matmul %213, %209, %cst_87 {dimension_numbers = #tpu.dot_dimension_numbers<[1], [0], [0], [1], [0, 0, 1, 1], [], []>} : vector<32x32xbf16>, vector<32x32xbf16>, vector<32x32xf32> -> vector<32x32xf32>
    %cst_88 = arith.constant dense<0.000000e+00> : vector<32x32xf32>
    %218 = tpu.matmul %214, %210, %cst_88 {dimension_numbers = #tpu.dot_dimension_numbers<[1], [0], [0], [1], [0, 0, 1, 1], [], []>} : vector<32x32xbf16>, vector<32x32xbf16>, vector<32x32xf32> -> vector<32x32xf32>
    %cst_89 = arith.constant dense<0.000000e+00> : vector<32x32xf32>
    %219 = tpu.matmul %215, %211, %cst_89 {dimension_numbers = #tpu.dot_dimension_numbers<[1], [0], [0], [1], [0, 0, 1, 1], [], []>} : vector<32x32xbf16>, vector<32x32xbf16>, vector<32x32xf32> -> vector<32x32xf32>
    %cst_90 = arith.constant dense<0.000000e+00> : vector<32x32xf32>
    %220 = tpu.matmul %216, %212, %cst_90 {dimension_numbers = #tpu.dot_dimension_numbers<[1], [0], [0], [1], [0, 0, 1, 1], [], []>} : vector<32x32xbf16>, vector<32x32xbf16>, vector<32x32xf32> -> vector<32x32xf32>
    %221 = tpu.concatenate %217, %218, %219, %220 in 0 : vector<32x32xf32>, vector<32x32xf32>, vector<32x32xf32>, vector<32x32xf32> -> vector<128x32xf32>
    %222 = tpu.concatenate %221, %208 in 1 : vector<128x32xf32>, vector<128x32xf32> -> vector<128x64xf32>
    %223 = arith.truncf %222 : vector<128x64xf32> to vector<128x64xbf16>
    %cst_91 = arith.constant dense<0.000000e+00> : vector<128x32xf32>
    %224 = tpu.matmul %223, %32, %cst_91 {dimension_numbers = #tpu.dot_dimension_numbers<[1], [0], [0], [1], [0, 0, 1, 1], [], []>} : vector<128x64xbf16>, vector<64x32xbf16>, vector<128x32xf32> -> vector<128x32xf32>
    %225 = vector.broadcast %36 : vector<1x32xf32> to vector<128x32xf32>
    %226 = arith.addf %224, %225 : vector<128x32xf32>
    %cst_92 = arith.constant 0.000000e+00 : f32
    %227 = vector.broadcast %cst_92 : f32 to vector<128x32xf32>
    %228 = arith.maximumf %226, %227 : vector<128x32xf32>
    %229 = arith.truncf %228 : vector<128x32xf32> to vector<128x32xbf16>
    %cst_93 = arith.constant dense<0.000000e+00> : vector<128x16xf32>
    %230 = tpu.matmul %229, %42, %cst_93 {dimension_numbers = #tpu.dot_dimension_numbers<[1], [0], [0], [1], [0, 0, 1, 1], [], []>} : vector<128x32xbf16>, vector<32x16xbf16>, vector<128x16xf32> -> vector<128x16xf32>
    %231 = vector.broadcast %44 : vector<1x16xf32> to vector<128x16xf32>
    %232 = arith.addf %230, %231 : vector<128x16xf32>
    %cst_94 = arith.constant dense<0xFF800000> : vector<128xf32>
    %233 = vector.multi_reduction <maximumf>, %232, %cst_94 [1] : vector<128x16xf32> to vector<128xf32>
    %234 = vector.shape_cast %233 : vector<128xf32> to vector<128x1xf32>
    %235 = vector.broadcast %234 : vector<128x1xf32> to vector<128x16xf32>
    %236 = arith.subf %232, %235 : vector<128x16xf32>
    %237 = math.exp %236 : vector<128x16xf32>
    %cst_95 = arith.constant dense<0.000000e+00> : vector<128xf32>
    %238 = vector.multi_reduction <add>, %237, %cst_95 [1] : vector<128x16xf32> to vector<128xf32>
    %239 = vector.shape_cast %238 : vector<128xf32> to vector<128x1xf32>
    %240 = tpu.reciprocal %239 {approx = true} : vector<128x1xf32> -> vector<128x1xf32>
    %241 = vector.broadcast %240 : vector<128x1xf32> to vector<128x16xf32>
    %242 = arith.mulf %237, %241 : vector<128x16xf32>
    %243 = arith.truncf %242 : vector<128x16xf32> to vector<128x16xbf16>
    %244 = vector.extract_strided_slice %243 {offsets = [0, 0], sizes = [32, 16], strides = [1, 1]} : vector<128x16xbf16> to vector<32x16xbf16>
    %245 = vector.extract_strided_slice %229 {offsets = [0, 0], sizes = [32, 32], strides = [1, 1]} : vector<128x32xbf16> to vector<32x32xbf16>
    %cst_96 = arith.constant dense<0.000000e+00> : vector<16x32xf32>
    %246 = tpu.matmul %244, %245, %cst_96 {dimension_numbers = #tpu.dot_dimension_numbers<[0], [0], [1], [1], [0, 1, 1, 1], [], []>} : vector<32x16xbf16>, vector<32x32xbf16>, vector<16x32xf32> -> vector<16x32xf32>
    %cst_97 = arith.constant dense<0.000000e+00> : vector<16x32xf32>
    %247 = tpu.matmul %244, %213, %cst_97 {dimension_numbers = #tpu.dot_dimension_numbers<[0], [0], [1], [1], [0, 1, 1, 1], [], []>} : vector<32x16xbf16>, vector<32x32xbf16>, vector<16x32xf32> -> vector<16x32xf32>
    %248 = arith.truncf %247 : vector<16x32xf32> to vector<16x32xbf16>
    %cst_98 = arith.constant dense<0.000000e+00> : vector<16x16xf32>
    %249 = tpu.matmul %248, %244, %cst_98 {dimension_numbers = #tpu.dot_dimension_numbers<[1], [0], [0], [1], [0, 0, 1, 1], [], []>} : vector<16x32xbf16>, vector<32x16xbf16>, vector<16x16xf32> -> vector<16x16xf32>
    %250 = tpu.iota {dimensions = array<i32: 0>} : vector<16x16xi32>
    %251 = tpu.iota {dimensions = array<i32: 1>} : vector<16x16xi32>
    %252 = arith.cmpi eq, %250, %251 : vector<16x16xi32>
    %cst_99 = arith.constant 0.000000e+00 : f32
    %253 = vector.broadcast %cst_99 : f32 to vector<16x16xf32>
    %254 = arith.select %252, %253, %249 : vector<16x16xi1>, vector<16x16xf32>
    %cst_100 = arith.constant dense<0.000000e+00> : vector<16xf32>
    %255 = vector.multi_reduction <add>, %254, %cst_100 [1] : vector<16x16xf32> to vector<16xf32>
    %256 = vector.shape_cast %255 : vector<16xf32> to vector<16x1xf32>
    %257 = math.sqrt %256 : vector<16x1xf32>
    %cst_101 = arith.constant 1.000000e-15 : f32
    %258 = vector.broadcast %cst_101 : f32 to vector<16x1xf32>
    %259 = arith.addf %257, %258 : vector<16x1xf32>
    %260 = tpu.reciprocal %259 {approx = true} : vector<16x1xf32> -> vector<16x1xf32>
    %cst_102 = arith.constant dense<0.000000e+00> : vector<16xf32>
    %261 = vector.multi_reduction <add>, %254, %cst_102 [0] : vector<16x16xf32> to vector<16xf32>
    %262 = vector.shape_cast %261 : vector<16xf32> to vector<1x16xf32>
    %263 = math.sqrt %262 : vector<1x16xf32>
    %cst_103 = arith.constant 1.000000e-15 : f32
    %264 = vector.broadcast %cst_103 : f32 to vector<1x16xf32>
    %265 = arith.addf %263, %264 : vector<1x16xf32>
    %266 = tpu.reciprocal %265 {approx = true} : vector<1x16xf32> -> vector<1x16xf32>
    %267 = vector.broadcast %260 : vector<16x1xf32> to vector<16x16xf32>
    %268 = arith.mulf %254, %267 : vector<16x16xf32>
    %269 = vector.broadcast %266 : vector<1x16xf32> to vector<16x16xf32>
    %270 = arith.mulf %268, %269 : vector<16x16xf32>
    %271 = vector.extract_strided_slice %243 {offsets = [32, 0], sizes = [32, 16], strides = [1, 1]} : vector<128x16xbf16> to vector<32x16xbf16>
    %272 = vector.extract_strided_slice %229 {offsets = [32, 0], sizes = [32, 32], strides = [1, 1]} : vector<128x32xbf16> to vector<32x32xbf16>
    %cst_104 = arith.constant dense<0.000000e+00> : vector<16x32xf32>
    %273 = tpu.matmul %271, %272, %cst_104 {dimension_numbers = #tpu.dot_dimension_numbers<[0], [0], [1], [1], [0, 1, 1, 1], [], []>} : vector<32x16xbf16>, vector<32x32xbf16>, vector<16x32xf32> -> vector<16x32xf32>
    %cst_105 = arith.constant dense<0.000000e+00> : vector<16x32xf32>
    %274 = tpu.matmul %271, %214, %cst_105 {dimension_numbers = #tpu.dot_dimension_numbers<[0], [0], [1], [1], [0, 1, 1, 1], [], []>} : vector<32x16xbf16>, vector<32x32xbf16>, vector<16x32xf32> -> vector<16x32xf32>
    %275 = arith.truncf %274 : vector<16x32xf32> to vector<16x32xbf16>
    %cst_106 = arith.constant dense<0.000000e+00> : vector<16x16xf32>
    %276 = tpu.matmul %275, %271, %cst_106 {dimension_numbers = #tpu.dot_dimension_numbers<[1], [0], [0], [1], [0, 0, 1, 1], [], []>} : vector<16x32xbf16>, vector<32x16xbf16>, vector<16x16xf32> -> vector<16x16xf32>
    %277 = tpu.iota {dimensions = array<i32: 0>} : vector<16x16xi32>
    %278 = tpu.iota {dimensions = array<i32: 1>} : vector<16x16xi32>
    %279 = arith.cmpi eq, %277, %278 : vector<16x16xi32>
    %cst_107 = arith.constant 0.000000e+00 : f32
    %280 = vector.broadcast %cst_107 : f32 to vector<16x16xf32>
    %281 = arith.select %279, %280, %276 : vector<16x16xi1>, vector<16x16xf32>
    %cst_108 = arith.constant dense<0.000000e+00> : vector<16xf32>
    %282 = vector.multi_reduction <add>, %281, %cst_108 [1] : vector<16x16xf32> to vector<16xf32>
    %283 = vector.shape_cast %282 : vector<16xf32> to vector<16x1xf32>
    %284 = math.sqrt %283 : vector<16x1xf32>
    %cst_109 = arith.constant 1.000000e-15 : f32
    %285 = vector.broadcast %cst_109 : f32 to vector<16x1xf32>
    %286 = arith.addf %284, %285 : vector<16x1xf32>
    %287 = tpu.reciprocal %286 {approx = true} : vector<16x1xf32> -> vector<16x1xf32>
    %cst_110 = arith.constant dense<0.000000e+00> : vector<16xf32>
    %288 = vector.multi_reduction <add>, %281, %cst_110 [0] : vector<16x16xf32> to vector<16xf32>
    %289 = vector.shape_cast %288 : vector<16xf32> to vector<1x16xf32>
    %290 = math.sqrt %289 : vector<1x16xf32>
    %cst_111 = arith.constant 1.000000e-15 : f32
    %291 = vector.broadcast %cst_111 : f32 to vector<1x16xf32>
    %292 = arith.addf %290, %291 : vector<1x16xf32>
    %293 = tpu.reciprocal %292 {approx = true} : vector<1x16xf32> -> vector<1x16xf32>
    %294 = vector.broadcast %287 : vector<16x1xf32> to vector<16x16xf32>
    %295 = arith.mulf %281, %294 : vector<16x16xf32>
    %296 = vector.broadcast %293 : vector<1x16xf32> to vector<16x16xf32>
    %297 = arith.mulf %295, %296 : vector<16x16xf32>
    %298 = vector.extract_strided_slice %243 {offsets = [64, 0], sizes = [32, 16], strides = [1, 1]} : vector<128x16xbf16> to vector<32x16xbf16>
    %299 = vector.extract_strided_slice %229 {offsets = [64, 0], sizes = [32, 32], strides = [1, 1]} : vector<128x32xbf16> to vector<32x32xbf16>
    %cst_112 = arith.constant dense<0.000000e+00> : vector<16x32xf32>
    %300 = tpu.matmul %298, %299, %cst_112 {dimension_numbers = #tpu.dot_dimension_numbers<[0], [0], [1], [1], [0, 1, 1, 1], [], []>} : vector<32x16xbf16>, vector<32x32xbf16>, vector<16x32xf32> -> vector<16x32xf32>
    %cst_113 = arith.constant dense<0.000000e+00> : vector<16x32xf32>
    %301 = tpu.matmul %298, %215, %cst_113 {dimension_numbers = #tpu.dot_dimension_numbers<[0], [0], [1], [1], [0, 1, 1, 1], [], []>} : vector<32x16xbf16>, vector<32x32xbf16>, vector<16x32xf32> -> vector<16x32xf32>
    %302 = arith.truncf %301 : vector<16x32xf32> to vector<16x32xbf16>
    %cst_114 = arith.constant dense<0.000000e+00> : vector<16x16xf32>
    %303 = tpu.matmul %302, %298, %cst_114 {dimension_numbers = #tpu.dot_dimension_numbers<[1], [0], [0], [1], [0, 0, 1, 1], [], []>} : vector<16x32xbf16>, vector<32x16xbf16>, vector<16x16xf32> -> vector<16x16xf32>
    %304 = tpu.iota {dimensions = array<i32: 0>} : vector<16x16xi32>
    %305 = tpu.iota {dimensions = array<i32: 1>} : vector<16x16xi32>
    %306 = arith.cmpi eq, %304, %305 : vector<16x16xi32>
    %cst_115 = arith.constant 0.000000e+00 : f32
    %307 = vector.broadcast %cst_115 : f32 to vector<16x16xf32>
    %308 = arith.select %306, %307, %303 : vector<16x16xi1>, vector<16x16xf32>
    %cst_116 = arith.constant dense<0.000000e+00> : vector<16xf32>
    %309 = vector.multi_reduction <add>, %308, %cst_116 [1] : vector<16x16xf32> to vector<16xf32>
    %310 = vector.shape_cast %309 : vector<16xf32> to vector<16x1xf32>
    %311 = math.sqrt %310 : vector<16x1xf32>
    %cst_117 = arith.constant 1.000000e-15 : f32
    %312 = vector.broadcast %cst_117 : f32 to vector<16x1xf32>
    %313 = arith.addf %311, %312 : vector<16x1xf32>
    %314 = tpu.reciprocal %313 {approx = true} : vector<16x1xf32> -> vector<16x1xf32>
    %cst_118 = arith.constant dense<0.000000e+00> : vector<16xf32>
    %315 = vector.multi_reduction <add>, %308, %cst_118 [0] : vector<16x16xf32> to vector<16xf32>
    %316 = vector.shape_cast %315 : vector<16xf32> to vector<1x16xf32>
    %317 = math.sqrt %316 : vector<1x16xf32>
    %cst_119 = arith.constant 1.000000e-15 : f32
    %318 = vector.broadcast %cst_119 : f32 to vector<1x16xf32>
    %319 = arith.addf %317, %318 : vector<1x16xf32>
    %320 = tpu.reciprocal %319 {approx = true} : vector<1x16xf32> -> vector<1x16xf32>
    %321 = vector.broadcast %314 : vector<16x1xf32> to vector<16x16xf32>
    %322 = arith.mulf %308, %321 : vector<16x16xf32>
    %323 = vector.broadcast %320 : vector<1x16xf32> to vector<16x16xf32>
    %324 = arith.mulf %322, %323 : vector<16x16xf32>
    %325 = vector.extract_strided_slice %243 {offsets = [96, 0], sizes = [32, 16], strides = [1, 1]} : vector<128x16xbf16> to vector<32x16xbf16>
    %326 = vector.extract_strided_slice %229 {offsets = [96, 0], sizes = [32, 32], strides = [1, 1]} : vector<128x32xbf16> to vector<32x32xbf16>
    %cst_120 = arith.constant dense<0.000000e+00> : vector<16x32xf32>
    %327 = tpu.matmul %325, %326, %cst_120 {dimension_numbers = #tpu.dot_dimension_numbers<[0], [0], [1], [1], [0, 1, 1, 1], [], []>} : vector<32x16xbf16>, vector<32x32xbf16>, vector<16x32xf32> -> vector<16x32xf32>
    %cst_121 = arith.constant dense<0.000000e+00> : vector<16x32xf32>
    %328 = tpu.matmul %325, %216, %cst_121 {dimension_numbers = #tpu.dot_dimension_numbers<[0], [0], [1], [1], [0, 1, 1, 1], [], []>} : vector<32x16xbf16>, vector<32x32xbf16>, vector<16x32xf32> -> vector<16x32xf32>
    %329 = arith.truncf %328 : vector<16x32xf32> to vector<16x32xbf16>
    %cst_122 = arith.constant dense<0.000000e+00> : vector<16x16xf32>
    %330 = tpu.matmul %329, %325, %cst_122 {dimension_numbers = #tpu.dot_dimension_numbers<[1], [0], [0], [1], [0, 0, 1, 1], [], []>} : vector<16x32xbf16>, vector<32x16xbf16>, vector<16x16xf32> -> vector<16x16xf32>
    %331 = tpu.iota {dimensions = array<i32: 0>} : vector<16x16xi32>
    %332 = tpu.iota {dimensions = array<i32: 1>} : vector<16x16xi32>
    %333 = arith.cmpi eq, %331, %332 : vector<16x16xi32>
    %cst_123 = arith.constant 0.000000e+00 : f32
    %334 = vector.broadcast %cst_123 : f32 to vector<16x16xf32>
    %335 = arith.select %333, %334, %330 : vector<16x16xi1>, vector<16x16xf32>
    %cst_124 = arith.constant dense<0.000000e+00> : vector<16xf32>
    %336 = vector.multi_reduction <add>, %335, %cst_124 [1] : vector<16x16xf32> to vector<16xf32>
    %337 = vector.shape_cast %336 : vector<16xf32> to vector<16x1xf32>
    %338 = math.sqrt %337 : vector<16x1xf32>
    %cst_125 = arith.constant 1.000000e-15 : f32
    %339 = vector.broadcast %cst_125 : f32 to vector<16x1xf32>
    %340 = arith.addf %338, %339 : vector<16x1xf32>
    %341 = tpu.reciprocal %340 {approx = true} : vector<16x1xf32> -> vector<16x1xf32>
    %cst_126 = arith.constant dense<0.000000e+00> : vector<16xf32>
    %342 = vector.multi_reduction <add>, %335, %cst_126 [0] : vector<16x16xf32> to vector<16xf32>
    %343 = vector.shape_cast %342 : vector<16xf32> to vector<1x16xf32>
    %344 = math.sqrt %343 : vector<1x16xf32>
    %cst_127 = arith.constant 1.000000e-15 : f32
    %345 = vector.broadcast %cst_127 : f32 to vector<1x16xf32>
    %346 = arith.addf %344, %345 : vector<1x16xf32>
    %347 = tpu.reciprocal %346 {approx = true} : vector<1x16xf32> -> vector<1x16xf32>
    %348 = vector.broadcast %341 : vector<16x1xf32> to vector<16x16xf32>
    %349 = arith.mulf %335, %348 : vector<16x16xf32>
    %350 = vector.broadcast %347 : vector<1x16xf32> to vector<16x16xf32>
    %351 = arith.mulf %349, %350 : vector<16x16xf32>
    %352 = tpu.concatenate %246, %273, %300, %327 in 0 : vector<16x32xf32>, vector<16x32xf32>, vector<16x32xf32>, vector<16x32xf32> -> vector<64x32xf32>
    %353 = arith.truncf %270 : vector<16x16xf32> to vector<16x16xbf16>
    %354 = arith.truncf %246 : vector<16x32xf32> to vector<16x32xbf16>
    %cst_128 = arith.constant dense<0.000000e+00> : vector<16x32xf32>
    %355 = tpu.matmul %353, %354, %cst_128 {dimension_numbers = #tpu.dot_dimension_numbers<[1], [0], [0], [1], [0, 0, 1, 1], [], []>} : vector<16x16xbf16>, vector<16x32xbf16>, vector<16x32xf32> -> vector<16x32xf32>
    %356 = arith.truncf %297 : vector<16x16xf32> to vector<16x16xbf16>
    %357 = arith.truncf %273 : vector<16x32xf32> to vector<16x32xbf16>
    %cst_129 = arith.constant dense<0.000000e+00> : vector<16x32xf32>
    %358 = tpu.matmul %356, %357, %cst_129 {dimension_numbers = #tpu.dot_dimension_numbers<[1], [0], [0], [1], [0, 0, 1, 1], [], []>} : vector<16x16xbf16>, vector<16x32xbf16>, vector<16x32xf32> -> vector<16x32xf32>
    %359 = arith.truncf %324 : vector<16x16xf32> to vector<16x16xbf16>
    %360 = arith.truncf %300 : vector<16x32xf32> to vector<16x32xbf16>
    %cst_130 = arith.constant dense<0.000000e+00> : vector<16x32xf32>
    %361 = tpu.matmul %359, %360, %cst_130 {dimension_numbers = #tpu.dot_dimension_numbers<[1], [0], [0], [1], [0, 0, 1, 1], [], []>} : vector<16x16xbf16>, vector<16x32xbf16>, vector<16x32xf32> -> vector<16x32xf32>
    %362 = arith.truncf %351 : vector<16x16xf32> to vector<16x16xbf16>
    %363 = arith.truncf %327 : vector<16x32xf32> to vector<16x32xbf16>
    %cst_131 = arith.constant dense<0.000000e+00> : vector<16x32xf32>
    %364 = tpu.matmul %362, %363, %cst_131 {dimension_numbers = #tpu.dot_dimension_numbers<[1], [0], [0], [1], [0, 0, 1, 1], [], []>} : vector<16x16xbf16>, vector<16x32xbf16>, vector<16x32xf32> -> vector<16x32xf32>
    %365 = tpu.concatenate %355, %358, %361, %364 in 0 : vector<16x32xf32>, vector<16x32xf32>, vector<16x32xf32>, vector<16x32xf32> -> vector<64x32xf32>
    %366 = tpu.concatenate %365, %352 in 1 : vector<64x32xf32>, vector<64x32xf32> -> vector<64x64xf32>
    %367 = arith.truncf %366 : vector<64x64xf32> to vector<64x64xbf16>
    %cst_132 = arith.constant dense<0.000000e+00> : vector<64x32xf32>
    %368 = tpu.matmul %367, %33, %cst_132 {dimension_numbers = #tpu.dot_dimension_numbers<[1], [0], [0], [1], [0, 0, 1, 1], [], []>} : vector<64x64xbf16>, vector<64x32xbf16>, vector<64x32xf32> -> vector<64x32xf32>
    %369 = vector.broadcast %37 : vector<1x32xf32> to vector<64x32xf32>
    %370 = arith.addf %368, %369 : vector<64x32xf32>
    %371 = vector.shape_cast %370 : vector<64x32xf32> to vector<4x16x32xf32>
    %cst_133 = arith.constant dense<0.000000e+00> : vector<4x32xf32>
    %372 = vector.multi_reduction <add>, %371, %cst_133 [1] : vector<4x16x32xf32> to vector<4x32xf32>
    %cst_134 = arith.constant 1.600000e+01 : f32
    %373 = vector.broadcast %cst_134 : f32 to vector<4x32xf32>
    %374 = arith.divf %372, %373 : vector<4x32xf32>
    %375 = arith.truncf %374 : vector<4x32xf32> to vector<4x32xbf16>
    %cst_135 = arith.constant dense<0.000000e+00> : vector<4x32xf32>
    %376 = tpu.matmul %375, %34, %cst_135 {dimension_numbers = #tpu.dot_dimension_numbers<[1], [0], [0], [1], [0, 0, 1, 1], [], []>} : vector<4x32xbf16>, vector<32x32xbf16>, vector<4x32xf32> -> vector<4x32xf32>
    %377 = vector.broadcast %38 : vector<1x32xf32> to vector<4x32xf32>
    %378 = arith.addf %376, %377 : vector<4x32xf32>
    %cst_136 = arith.constant 0.000000e+00 : f32
    %379 = vector.broadcast %cst_136 : f32 to vector<4x32xf32>
    %380 = arith.maximumf %378, %379 : vector<4x32xf32>
    %381 = arith.truncf %380 : vector<4x32xf32> to vector<4x32xbf16>
    %cst_137 = arith.constant dense<0.000000e+00> : vector<4x128xf32>
    %382 = tpu.matmul %381, %45, %cst_137 {dimension_numbers = #tpu.dot_dimension_numbers<[1], [0], [0], [1], [0, 0, 1, 1], [], []>} : vector<4x32xbf16>, vector<32x128xbf16>, vector<4x128xf32> -> vector<4x128xf32>
    %383 = vector.broadcast %47 : vector<1x128xf32> to vector<4x128xf32>
    %384 = arith.addf %382, %383 : vector<4x128xf32>
    %385 = tpu.iota {dimensions = array<i32: 1>} : vector<4x128xi32>
    %c8_i32 = arith.constant 8 : i32
    %386 = vector.broadcast %c8_i32 : i32 to vector<4x128xi32>
    %387 = arith.cmpi slt, %385, %386 : vector<4x128xi32>
    %cst_138 = arith.constant -1.000000e+30 : f32
    %388 = vector.broadcast %cst_138 : f32 to vector<4x128xf32>
    %389 = arith.select %387, %384, %388 : vector<4x128xi1>, vector<4x128xf32>
    %cst_139 = arith.constant dense<0xFF800000> : vector<4xf32>
    %390 = vector.multi_reduction <maximumf>, %389, %cst_139 [1] : vector<4x128xf32> to vector<4xf32>
    %391 = vector.shape_cast %390 : vector<4xf32> to vector<4x1xf32>
    %392 = vector.broadcast %391 : vector<4x1xf32> to vector<4x128xf32>
    %393 = arith.subf %389, %392 : vector<4x128xf32>
    %394 = math.exp %393 : vector<4x128xf32>
    %cst_140 = arith.constant 0.000000e+00 : f32
    %395 = vector.broadcast %cst_140 : f32 to vector<4x128xf32>
    %396 = arith.select %387, %394, %395 : vector<4x128xi1>, vector<4x128xf32>
    %cst_141 = arith.constant dense<0.000000e+00> : vector<4xf32>
    %397 = vector.multi_reduction <add>, %396, %cst_141 [1] : vector<4x128xf32> to vector<4xf32>
    %398 = vector.shape_cast %397 : vector<4xf32> to vector<4x1xf32>
    %399 = math.log %398 : vector<4x1xf32>
    %400 = vector.broadcast %399 : vector<4x1xf32> to vector<4x128xf32>
    %401 = arith.subf %393, %400 : vector<4x128xf32>
    %c0_142 = arith.constant 0 : index
    %c0_143 = arith.constant 0 : index
    %c0_144 = arith.constant 0 : index
    %402 = vector.load %arg10[%c0_142, %c0_143, %c0_144] : memref<1x4x128xf32, #tpu.memory_space<vmem>>, vector<1x4x128xf32>
    %403 = vector.shape_cast %402 : vector<1x4x128xf32> to vector<4x128xf32>
    %404 = vector.shape_cast %401 : vector<4x128xf32> to vector<1x4x128xf32>
    tpu.vector_store %arg10[%c0_142, %c0_143, %c0_144], %404 {strides = array<i32>} : memref<1x4x128xf32, #tpu.memory_space<vmem>>, vector<1x4x128xf32>,
    return
  }
  func.func @transform_0(%arg0: i32, %arg1: memref<8xi32, #tpu.memory_space<smem>>) -> (i32, i32, i32) {
    %c0_i32 = arith.constant 0 : i32
    %c0_i32_0 = arith.constant 0 : i32
    %c0_i32_1 = arith.constant 0 : i32
    return %arg0, %c0_i32, %c0_i32_0 : i32, i32, i32
  }
  func.func @transform_1(%arg0: i32, %arg1: memref<8xi32, #tpu.memory_space<smem>>) -> (i32, i32, i32) {
    %c0_i32 = arith.constant 0 : i32
    %c0_i32_0 = arith.constant 0 : i32
    %c0_i32_1 = arith.constant 0 : i32
    return %arg0, %c0_i32, %c0_i32_0 : i32, i32, i32
  }
  func.func @transform_2(%arg0: i32, %arg1: memref<8xi32, #tpu.memory_space<smem>>) -> (i32, i32, i32) {
    %c0_i32 = arith.constant 0 : i32
    %c0_i32_0 = arith.constant 0 : i32
    %c0_i32_1 = arith.constant 0 : i32
    return %arg0, %c0_i32, %c0_i32_0 : i32, i32, i32
  }
  func.func @transform_3(%arg0: i32, %arg1: memref<8xi32, #tpu.memory_space<smem>>) -> (i32, i32) {
    %c0_i32 = arith.constant 0 : i32
    %c0_i32_0 = arith.constant 0 : i32
    %c0_i32_1 = arith.constant 0 : i32
    return %c0_i32, %c0_i32_0 : i32, i32
  }
  func.func @transform_4(%arg0: i32, %arg1: memref<8xi32, #tpu.memory_space<smem>>) -> (i32, i32) {
    %c0_i32 = arith.constant 0 : i32
    %c0_i32_0 = arith.constant 0 : i32
    %c0_i32_1 = arith.constant 0 : i32
    return %c0_i32, %c0_i32_0 : i32, i32
  }
  func.func @transform_5(%arg0: i32, %arg1: memref<8xi32, #tpu.memory_space<smem>>) -> (i32, i32) {
    %c0_i32 = arith.constant 0 : i32
    %c0_i32_0 = arith.constant 0 : i32
    %c0_i32_1 = arith.constant 0 : i32
    return %c0_i32, %c0_i32_0 : i32, i32
  }
  func.func @transform_6(%arg0: i32, %arg1: memref<8xi32, #tpu.memory_space<smem>>) -> (i32, i32) {
    %c0_i32 = arith.constant 0 : i32
    %c0_i32_0 = arith.constant 0 : i32
    %c0_i32_1 = arith.constant 0 : i32
    return %c0_i32, %c0_i32_0 : i32, i32
  }
  func.func @transform_7(%arg0: i32, %arg1: memref<8xi32, #tpu.memory_space<smem>>) -> (i32, i32) {
    %c0_i32 = arith.constant 0 : i32
    %c0_i32_0 = arith.constant 0 : i32
    %c0_i32_1 = arith.constant 0 : i32
    return %c0_i32, %c0_i32_0 : i32, i32
  }
  func.func @transform_8(%arg0: i32, %arg1: memref<8xi32, #tpu.memory_space<smem>>) -> (i32, i32, i32) {
    %c0_i32 = arith.constant 0 : i32
    %c0_i32_0 = arith.constant 0 : i32
    %c0_i32_1 = arith.constant 0 : i32
    return %arg0, %c0_i32, %c0_i32_0 : i32, i32, i32
  }
}

</mosaic_0001>

<llo_original>
// kernel: tpu_custom_call.1
$region0: #{tpu_custom_call.1}
  #allocation0 [shape = 'u32[]', space=smem, size = 0x4, offset = 0x4, fixed_abs, tag = 'smem constant byte address 0x4 - core index']
  #allocation1 [shape = 'u32[72,128]{1,0:T(1,128)}', space=vmem, size = 0x9000, scoped, tag = 'internal scratch']
  #allocation2 [shape = 's32[1]{0}', space=sflag, size = 0x4, scoped, tag = 'scoped memory for tpu_custom_call.1']
  #allocation3 [shape = 'u8[512]{0}', space=smem, size = 0x200, scoped, tag = 'prefetched SMEM operand 0']
  %s0 = inlined_call_operand.vmem [shape: s32[8], index: 0, kind: input, shape index: {}]
  %s1 = inlined_call_operand.vmem [shape: bf16[8,64,16], index: 1, kind: input, shape index: {}]
  %s2 = inlined_call_operand.vmem [shape: bf16[8,64,64], index: 2, kind: input, shape index: {}]
  %s3 = inlined_call_operand.hbm [shape: bf16[8,64,64], index: 3, kind: input, shape index: {}]
  %s4 = inlined_call_operand.vmem [shape: bf16[176,32], index: 4, kind: input, shape index: {}]
  %s5 = inlined_call_operand.vmem [shape: f32[4,32], index: 5, kind: input, shape index: {}]
  %s6 = inlined_call_operand.vmem [shape: bf16[33,32], index: 6, kind: input, shape index: {}]
  %s7 = inlined_call_operand.vmem [shape: bf16[33,16], index: 7, kind: input, shape index: {}]
  %s8 = inlined_call_operand.vmem [shape: bf16[33,128], index: 8, kind: input, shape index: {}]
  %s9 = inlined_call_operand.hbm [shape: f32[2,4,128], index: 9, kind: output, shape index: {}]
  %s10 = sld [smem:[#allocation0]]
  $region69: #{tpu_custom_call.1} parent=0
    _
  %s12 = ssub.s32 1, %s10
  %s13 = scalar_select 0, %s12, %s10
  %s15 = sshll.u32 %s0, 4
  %s16 = int_to_ptr.vmem [resolvable:$true] %s15
  %18 = dma.vmem_to_smem %s16, 16, [#allocation3], [#allocation2]
  %20 = dma.done [#allocation2], 16
  %21 = sfence
  $region1: #{tpu_custom_call.1} parent=0
    #allocation4 [shape = 'u8[131072]{0}', space=vmem, size = 0x20000, scoped, tag = 'input window, operand 3']
    #allocation5 [shape = 's32[2]{0}', space=sflag, size = 0x8, scoped, tag = 'scoped memory for tpu_custom_call.1']
    #allocation6 [shape = 's32[2]{0}', space=sflag, size = 0x8, scoped, tag = 'scoped memory for tpu_custom_call.1']
    #allocation7 [shape = 'u8[4096]{0}', space=vmem, size = 0x1000, scoped, tag = 'output window, operand 0']
    %22 = vsyncpa [#allocation5], 0
    %s23 = scalar_lea.sflag [#allocation5], 1
    %24 = vsyncpa %s23, 0
    %25 = vsyncpa [#allocation6], 0
    %s26 = scalar_lea.sflag [#allocation6], 1
    %27 = vsyncpa %s26, 0
    loop: start=0, step=1, limit=4
    $region2: #{tpu_custom_call.1} parent=1 // loop_pre_header
      _
    $region3: #{tpu_custom_call.1} parent=1 // loop_header
      %s29 = sphi 0, %s33
      %p30 = scmp.ge.s32.totalorder %s29, 4
      %s39 = sphi 0, %s41
      %s42 = sphi 0, %s39
      %s43 = sphi 0, %s42
      %s59 = sphi 0, %s43
      %s65 = sphi 0, %s67
      %s68 = sphi 0, %s65
      %s69 = sphi 0, %s68
      %s85 = sphi 0, %s69
      %s91 = sphi 0, %s93
      %s94 = sphi 0, %s91
      %s95 = sphi 0, %s94
      %s111 = sphi 0, %s95
      %s115 = sphi 0, %s115
      %s117 = sphi 0, %s115
      %s118 = sphi 0, %s117
      %s132 = sphi 0, %s118
      %s136 = sphi 0, %s136
      %s138 = sphi 0, %s136
      %s139 = sphi 0, %s138
      %s153 = sphi 0, %s139
      %s157 = sphi 0, %s157
      %s159 = sphi 0, %s157
      %s160 = sphi 0, %s159
      %s174 = sphi 0, %s160
      %s178 = sphi 0, %s178
      %s180 = sphi 0, %s178
      %s181 = sphi 0, %s180
      %s195 = sphi 0, %s181
      %s199 = sphi 0, %s199
      %s201 = sphi 0, %s199
      %s202 = sphi 0, %s201
      %s216 = sphi 0, %s202
      %s222 = sphi 0, %s224
      %s225 = sphi 0, %s222
      %s226 = sphi 0, %s225
      %s242 = sphi 0, %s226
    $region4: #{tpu_custom_call.1} parent=1 // loop_header_branch
      %32 = sbr.rel (%p30) target = $region8
    $region5: #{tpu_custom_call.1} parent=1 // loop_body
      %s34 = ssub.s32 %s29, 1
      %s35 = ssub.s32 %s29, 2
      %s36 = sadd.s32 %s29, 1
      %s37 = ssub.s32 %s29, %s36
      %p38 = scmp.eq.s32.totalorder %s37, 0
      %s40 = sadd.s32 %s39, 1
      %s41 = scalar_select %p38, %s39, %s40
      %p44 = pneg %p38
      %p45 = scmp.eq.s32.totalorder %s29, 1
      %p46 = por %p44, %p45
      %p47 = scmp.ne.s32.totalorder %s39, %s42
      %p48 = scmp.eq.s32.totalorder %s29, 0
      %p49 = por %p47, %p48
      %p50 = scmp.ne.s32.totalorder %s39, %s42
      %p51 = scmp.eq.s32.totalorder %s34, 1
      %p52 = por %p50, %p51
      %p53 = scmp.ne.s32.totalorder %s42, %s43
      %p54 = scmp.eq.s32.totalorder %s34, 0
      %p55 = por %p53, %p54
      %p56 = scmp.ne.s32.totalorder %s42, %s43
      %p57 = scmp.eq.s32.totalorder %s35, 1
      %p58 = por %p56, %p57
      %p60 = scmp.ne.s32.totalorder %s43, %s59
      %p61 = scmp.eq.s32.totalorder %s35, 0
      %p62 = por %p60, %p61
      %s63 = ssub.s32 %s29, %s36
      %p64 = scmp.eq.s32.totalorder %s63, 0
      %s66 = sadd.s32 %s65, 1
      %s67 = scalar_select %p64, %s65, %s66
      %p70 = pneg %p64
      %p71 = scmp.eq.s32.totalorder %s29, 1
      %p72 = por %p70, %p71
      %p73 = scmp.ne.s32.totalorder %s65, %s68
      %p74 = scmp.eq.s32.totalorder %s29, 0
      %p75 = por %p73, %p74
      %p76 = scmp.ne.s32.totalorder %s65, %s68
      %p77 = scmp.eq.s32.totalorder %s34, 1
      %p78 = por %p76, %p77
      %p79 = scmp.ne.s32.totalorder %s68, %s69
      %p80 = scmp.eq.s32.totalorder %s34, 0
      %p81 = por %p79, %p80
      %p82 = scmp.ne.s32.totalorder %s68, %s69
      %p83 = scmp.eq.s32.totalorder %s35, 1
      %p84 = por %p82, %p83
      %p86 = scmp.ne.s32.totalorder %s69, %s85
      %p87 = scmp.eq.s32.totalorder %s35, 0
      %p88 = por %p86, %p87
      %s89 = ssub.s32 %s29, %s36
      %p90 = scmp.eq.s32.totalorder %s89, 0
      %s92 = sadd.s32 %s91, 1
      %s93 = scalar_select %p90, %s91, %s92
      %p96 = pneg %p90
      %p97 = scmp.eq.s32.totalorder %s29, 1
      %p98 = por %p96, %p97
      %p99 = scmp.ne.s32.totalorder %s91, %s94
      %p100 = scmp.eq.s32.totalorder %s29, 0
      %p101 = por %p99, %p100
      %p102 = scmp.ne.s32.totalorder %s91, %s94
      %p103 = scmp.eq.s32.totalorder %s34, 1
      %p104 = por %p102, %p103
      %p105 = scmp.ne.s32.totalorder %s94, %s95
      %p106 = scmp.eq.s32.totalorder %s34, 0
      %p107 = por %p105, %p106
      %p108 = scmp.ne.s32.totalorder %s94, %s95
      %p109 = scmp.eq.s32.totalorder %s35, 1
      %p110 = por %p108, %p109
      %p112 = scmp.ne.s32.totalorder %s95, %s111
      %p113 = scmp.eq.s32.totalorder %s35, 0
      %p114 = por %p112, %p113
      %s116 = sadd.s32 %s115, 1
      %p119 = scmp.eq.s32.totalorder %s29, 1
      %p120 = scmp.ne.s32.totalorder %s115, %s117
      %p121 = scmp.eq.s32.totalorder %s29, 0
      %p122 = por %p120, %p121
      %p123 = scmp.ne.s32.totalorder %s115, %s117
      %p124 = scmp.eq.s32.totalorder %s34, 1
      %p125 = por %p123, %p124
      %p126 = scmp.ne.s32.totalorder %s117, %s118
      %p127 = scmp.eq.s32.totalorder %s34, 0
      %p128 = por %p126, %p127
      %p129 = scmp.ne.s32.totalorder %s117, %s118
      %p130 = scmp.eq.s32.totalorder %s35, 1
      %p131 = por %p129, %p130
      %p133 = scmp.ne.s32.totalorder %s118, %s132
      %p134 = scmp.eq.s32.totalorder %s35, 0
      %p135 = por %p133, %p134
      %s137 = sadd.s32 %s136, 1
      %p140 = scmp.eq.s32.totalorder %s29, 1
      %p141 = scmp.ne.s32.totalorder %s136, %s138
      %p142 = scmp.eq.s32.totalorder %s29, 0
      %p143 = por %p141, %p142
      %p144 = scmp.ne.s32.totalorder %s136, %s138
      %p145 = scmp.eq.s32.totalorder %s34, 1
      %p146 = por %p144, %p145
      %p147 = scmp.ne.s32.totalorder %s138, %s139
      %p148 = scmp.eq.s32.totalorder %s34, 0
      %p149 = por %p147, %p148
      %p150 = scmp.ne.s32.totalorder %s138, %s139
      %p151 = scmp.eq.s32.totalorder %s35, 1
      %p152 = por %p150, %p151
      %p154 = scmp.ne.s32.totalorder %s139, %s153
      %p155 = scmp.eq.s32.totalorder %s35, 0
      %p156 = por %p154, %p155
      %s158 = sadd.s32 %s157, 1
      %p161 = scmp.eq.s32.totalorder %s29, 1
      %p162 = scmp.ne.s32.totalorder %s157, %s159
      %p163 = scmp.eq.s32.totalorder %s29, 0
      %p164 = por %p162, %p163
      %p165 = scmp.ne.s32.totalorder %s157, %s159
      %p166 = scmp.eq.s32.totalorder %s34, 1
      %p167 = por %p165, %p166
      %p168 = scmp.ne.s32.totalorder %s159, %s160
      %p169 = scmp.eq.s32.totalorder %s34, 0
      %p170 = por %p168, %p169
      %p171 = scmp.ne.s32.totalorder %s159, %s160
      %p172 = scmp.eq.s32.totalorder %s35, 1
      %p173 = por %p171, %p172
      %p175 = scmp.ne.s32.totalorder %s160, %s174
      %p176 = scmp.eq.s32.totalorder %s35, 0
      %p177 = por %p175, %p176
      %s179 = sadd.s32 %s178, 1
      %p182 = scmp.eq.s32.totalorder %s29, 1
      %p183 = scmp.ne.s32.totalorder %s178, %s180
      %p184 = scmp.eq.s32.totalorder %s29, 0
      %p185 = por %p183, %p184
      %p186 = scmp.ne.s32.totalorder %s178, %s180
      %p187 = scmp.eq.s32.totalorder %s34, 1
      %p188 = por %p186, %p187
      %p189 = scmp.ne.s32.totalorder %s180, %s181
      %p190 = scmp.eq.s32.totalorder %s34, 0
      %p191 = por %p189, %p190
      %p192 = scmp.ne.s32.totalorder %s180, %s181
      %p193 = scmp.eq.s32.totalorder %s35, 1
      %p194 = por %p192, %p193
      %p196 = scmp.ne.s32.totalorder %s181, %s195
      %p197 = scmp.eq.s32.totalorder %s35, 0
      %p198 = por %p196, %p197
      %s200 = sadd.s32 %s199, 1
      %p203 = scmp.eq.s32.totalorder %s29, 1
      %p204 = scmp.ne.s32.totalorder %s199, %s201
      %p205 = scmp.eq.s32.totalorder %s29, 0
      %p206 = por %p204, %p205
      %p207 = scmp.ne.s32.totalorder %s199, %s201
      %p208 = scmp.eq.s32.totalorder %s34, 1
      %p209 = por %p207, %p208
      %p210 = scmp.ne.s32.totalorder %s201, %s202
      %p211 = scmp.eq.s32.totalorder %s34, 0
      %p212 = por %p210, %p211
      %p213 = scmp.ne.s32.totalorder %s201, %s202
      %p214 = scmp.eq.s32.totalorder %s35, 1
      %p215 = por %p213, %p214
      %p217 = scmp.ne.s32.totalorder %s202, %s216
      %p218 = scmp.eq.s32.totalorder %s35, 0
      %p219 = por %p217, %p218
      %s220 = ssub.s32 %s29, %s36
      %p221 = scmp.eq.s32.totalorder %s220, 0
      %s223 = sadd.s32 %s222, 1
      %s224 = scalar_select %p221, %s222, %s223
      %p227 = pneg %p221
      %p228 = scmp.eq.s32.totalorder %s29, 1
      %p229 = por %p227, %p228
      %p230 = scmp.ne.s32.totalorder %s222, %s225
      %p231 = scmp.eq.s32.totalorder %s29, 0
      %p232 = por %p230, %p231
      %p233 = scmp.ne.s32.totalorder %s222, %s225
      %p234 = scmp.eq.s32.totalorder %s34, 1
      %p235 = por %p233, %p234
      %p236 = scmp.ne.s32.totalorder %s225, %s226
      %p237 = scmp.eq.s32.totalorder %s34, 0
      %p238 = por %p236, %p237
      %p239 = scmp.ne.s32.totalorder %s225, %s226
      %p240 = scmp.eq.s32.totalorder %s35, 1
      %p241 = por %p239, %p240
      %p243 = scmp.ne.s32.totalorder %s226, %s242
      %p244 = scmp.eq.s32.totalorder %s35, 0
      %p245 = por %p243, %p244
      %p246 = scmp.le.s32.totalorder 1, %s29
      %p247 = scmp.lt.s32.totalorder %s29, 3
      %p248 = pnand %p246, %p247
      %p249 = pneg %p248
      // Predicated region
      $region9: #{tpu_custom_call.1} parent=5 // pred_check
        _
      $region10: #{tpu_custom_call.1} parent=5 // pred_check_branch
        %251 = sbr.rel (%p248) target = $region12
      $region11: #{tpu_custom_call.1} parent=5 // pred_region
        %s252 = ssub.s32 %s29, 1
        // Predicated region
        $region13: #{tpu_custom_call.1} parent=11 // pred_check
          %p253 = pneg %p128
        $region14: #{tpu_custom_call.1} parent=11 // pred_check_branch
          %255 = sbr.rel (%p253) target = $region16
        $region15: #{tpu_custom_call.1} parent=11 // pred_region
          _
        $region16: #{tpu_custom_call.1} parent=11 // pred_fallthru
          _
        // Predicated region
        $region17: #{tpu_custom_call.1} parent=11 // pred_check
          %p256 = pneg %p149
        $region18: #{tpu_custom_call.1} parent=11 // pred_check_branch
          %258 = sbr.rel (%p256) target = $region20
        $region19: #{tpu_custom_call.1} parent=11 // pred_region
          _
        $region20: #{tpu_custom_call.1} parent=11 // pred_fallthru
          _
        // Predicated region
        $region21: #{tpu_custom_call.1} parent=11 // pred_check
          %p259 = pneg %p170
        $region22: #{tpu_custom_call.1} parent=11 // pred_check_branch
          %261 = sbr.rel (%p259) target = $region24
        $region23: #{tpu_custom_call.1} parent=11 // pred_region
          _
        $region24: #{tpu_custom_call.1} parent=11 // pred_fallthru
          _
        // Predicated region
        $region25: #{tpu_custom_call.1} parent=11 // pred_check
          %p262 = pneg %p191
        $region26: #{tpu_custom_call.1} parent=11 // pred_check_branch
          %264 = sbr.rel (%p262) target = $region28
        $region27: #{tpu_custom_call.1} parent=11 // pred_region
          _
        $region28: #{tpu_custom_call.1} parent=11 // pred_fallthru
          _
        // Predicated region
        $region29: #{tpu_custom_call.1} parent=11 // pred_check
          %p265 = pneg %p212
        $region30: #{tpu_custom_call.1} parent=11 // pred_check_branch
          %267 = sbr.rel (%p265) target = $region32
        $region31: #{tpu_custom_call.1} parent=11 // pred_region
          _
        $region32: #{tpu_custom_call.1} parent=11 // pred_fallthru
          _
      $region12: #{tpu_custom_call.1} parent=5 // pred_fallthru
        _
      %p268 = scmp.lt.s32.totalorder %s29, 2
      // Predicated region
      $region33: #{tpu_custom_call.1} parent=5 // pred_check
        %p269 = pneg %p268
      $region34: #{tpu_custom_call.1} parent=5 // pred_check_branch
        %271 = sbr.rel (%p269) target = $region36
      $region35: #{tpu_custom_call.1} parent=5 // pred_region
        // Predicated region
        $region37: #{tpu_custom_call.1} parent=35 // pred_check
          %p272 = pneg %p49
        $region38: #{tpu_custom_call.1} parent=35 // pred_check_branch
          %274 = sbr.rel (%p272) target = $region40
        $region39: #{tpu_custom_call.1} parent=35 // pred_region
          %s275 = smul.u32 4, %s29
          %p276 = scmp.lt.s32.totalorder %s275, 7
          %s277 = scalar_select %p276, %s275, 7
          %s278 = smul.addr %s277, 8
          %s279 = smul.addr %s278, 4
          %s280 = scalar_lea.vmem %s1, %s279
          %s281 = smul.u32 4, %s29
        $region40: #{tpu_custom_call.1} parent=35 // pred_fallthru
          _
        // Predicated region
        $region41: #{tpu_custom_call.1} parent=35 // pred_check
          %p282 = pneg %p75
        $region42: #{tpu_custom_call.1} parent=35 // pred_check_branch
          %284 = sbr.rel (%p282) target = $region44
        $region43: #{tpu_custom_call.1} parent=35 // pred_region
          %s285 = smul.u32 4, %s29
          %p286 = scmp.lt.s32.totalorder %s285, 7
          %s287 = scalar_select %p286, %s285, 7
          %s288 = smul.addr %s287, 8
          %s289 = smul.addr %s288, 4
          %s290 = scalar_lea.vmem %s2, %s289
          %s291 = smul.u32 4, %s29
        $region44: #{tpu_custom_call.1} parent=35 // pred_fallthru
          _
        // Predicated region
        $region45: #{tpu_custom_call.1} parent=35 // pred_check
          %p292 = pneg %p101
        $region46: #{tpu_custom_call.1} parent=35 // pred_check_branch
          %294 = sbr.rel (%p292) target = $region48
        $region47: #{tpu_custom_call.1} parent=35 // pred_region
          %s295 = sand.u32 %s91, 1
          %s296 = scalar_lea.sflag [#allocation5], %s295
          %s297 = sand.u32 %s91, 1
          %s298 = smul.addr %s297, 128
          %s299 = scalar_lea.vmem [#allocation4], %s298
          %s300 = smul.u32 4, %s29
          %302 = vsyncadd %s296, 0
          %s303 = smul.addr %s300, 8
          %s304 = smul.addr %s303, 4
          %s305 = scalar_lea.hbm %s3, %s304
          %s306 = sshll.u32 %s305, 4
          %s307 = int_to_ptr.hbm [resolvable:$true] %s306
          %s308 = sshll.u32 %s299, 4
          %s309 = int_to_ptr.vmem [resolvable:$true] %s308
          %314 = dma.hbm_to_vmem [thread:$0]  %s307, 2048, %s309, %s296, 64, 64, 4
        $region48: #{tpu_custom_call.1} parent=35 // pred_fallthru
          _
      $region36: #{tpu_custom_call.1} parent=5 // pred_fallthru
        _
      %p315 = scmp.le.s32.totalorder 1, %s29
      %p316 = scmp.lt.s32.totalorder %s29, 3
      %p317 = pnand %p315, %p316
      %p318 = pneg %p317
      // Predicated region
      $region49: #{tpu_custom_call.1} parent=5 // pred_check
        _
      $region50: #{tpu_custom_call.1} parent=5 // pred_check_branch
        %320 = sbr.rel (%p317) target = $region52
      $region51: #{tpu_custom_call.1} parent=5 // pred_region
        %s321 = ssub.s32 %s29, 1
        %s322 = sand.u32 %s94, 1
        %s323 = scalar_lea.sflag [#allocation5], %s322
        %s324 = sand.u32 %s94, 1
        %s325 = smul.addr %s324, 128
        %s326 = scalar_lea.vmem [#allocation4], %s325
        // Predicated region
        $region53: #{tpu_custom_call.1} parent=51 // pred_check
          %p327 = pneg %p107
        $region54: #{tpu_custom_call.1} parent=51 // pred_check_branch
          %329 = sbr.rel (%p327) target = $region56
        $region55: #{tpu_custom_call.1} parent=51 // pred_region
          %331 = dma.done %s323, 2048
        $region56: #{tpu_custom_call.1} parent=51 // pred_fallthru
          _
        %s332 = smul.u32 4, %s34
        %p333 = scmp.lt.s32.totalorder %s332, 7
        %s334 = scalar_select %p333, %s332, 7
        %s335 = smul.addr %s334, 8
        %s336 = smul.addr %s335, 4
        %s337 = scalar_lea.vmem %s1, %s336
        %p338 = pneg %p55
        %p339 = pneg %p52
        %s340 = smul.u32 4, %s34
        %p341 = scmp.lt.s32.totalorder %s340, 7
        %s342 = scalar_select %p341, %s340, 7
        %s343 = smul.addr %s342, 8
        %s344 = smul.addr %s343, 4
        %s345 = scalar_lea.vmem %s2, %s344
        %p346 = pneg %p81
        %p347 = pneg %p78
        %s348 = sand.u32 %s94, 1
        %s349 = scalar_lea.sflag [#allocation5], %s348
        %s350 = sand.u32 %s94, 1
        %s351 = smul.addr %s350, 128
        %s352 = scalar_lea.vmem [#allocation4], %s351
        %p353 = pneg %p107
        %p354 = pneg %p104
        %p355 = pneg %p128
        %p356 = pneg %p125
        %p357 = pneg %p149
        %p358 = pneg %p146
        %p359 = pneg %p170
        %p360 = pneg %p167
        %p361 = pneg %p191
        %p362 = pneg %p188
        %p363 = pneg %p212
        %p364 = pneg %p209
        %p365 = pneg %p238
        %p366 = pneg %p235
        %s367 = sand.u32 %s225, 1
        %s368 = scalar_lea.sflag [#allocation6], %s367
        %s369 = sand.u32 %s225, 1
        %s370 = smul.addr %s369, 4
        %s371 = scalar_lea.vmem [#allocation7], %s370
        %s372 = smul.u32 4, %s34
        %p373 = scmp.lt.s32.totalorder %s372, 7
        %s374 = scalar_select %p373, %s372, 7
        %s375 = smul.addr %s374, 8
        %s376 = smul.addr %s375, 4
        %s377 = scalar_lea.vmem %s1, %s376
        %s378 = smul.u32 4, %s34
        %s379 = smul.u32 4, %s34
        %p380 = scmp.lt.s32.totalorder %s379, 7
        %s381 = scalar_select %p380, %s379, 7
        %s382 = smul.addr %s381, 8
        %s383 = smul.addr %s382, 4
        %s384 = scalar_lea.vmem %s2, %s383
        %s385 = smul.u32 4, %s34
        %s386 = smul.u32 4, %s34
        %s388 = smul.u32 %s34, 4
        %v389 = vlaneseq
        %v390 = vshrl.u32 %v389, 7
        %v391 = vadd.s32 %v390, 8
        %v392 = vadd.s32 %v390, 16
        %v393 = vadd.s32 %v390, 24
        %v394 = vadd.s32 %v390, 32
        %v395 = vadd.s32 %v390, 40
        %v396 = vadd.s32 %v390, 48
        %v397 = vadd.s32 %v390, 56
        %s398 = sld [smem:[#allocation3 + %s388]]
        %v399 = vstv %s398
        %vm400 = vcmp.lt.s32.totalorder %v390, %v399
        %vm401 = vcmp.lt.s32.totalorder %v391, %v399
        %vm402 = vcmp.lt.s32.totalorder %v392, %v399
        %vm403 = vcmp.lt.s32.totalorder %v393, %v399
        %vm404 = vcmp.lt.s32.totalorder %v394, %v399
        %vm405 = vcmp.lt.s32.totalorder %v395, %v399
        %vm406 = vcmp.lt.s32.totalorder %v396, %v399
        %vm407 = vcmp.lt.s32.totalorder %v397, %v399
        %v408 = vsel %vm400, 1, 0
        %v409 = vsel %vm401, 1, 0
        %v410 = vsel %vm402, 1, 0
        %v411 = vsel %vm403, 1, 0
        %v412 = vsel %vm404, 1, 0
        %v413 = vsel %vm405, 1, 0
        %v414 = vsel %vm406, 1, 0
        %v415 = vsel %vm407, 1, 0
        %v416 = vcvt.s32.f32 %v408
        %v417 = vcvt.s32.f32 %v409
        %v418 = vcvt.s32.f32 %v410
        %v419 = vcvt.s32.f32 %v411
        %v420 = vcvt.s32.f32 %v412
        %v421 = vcvt.s32.f32 %v413
        %v422 = vcvt.s32.f32 %v414
        %v423 = vcvt.s32.f32 %v415
        %s424 = sadd.s32 %s388, 1
        %s425 = sld [smem:[#allocation3 + %s424]]
        %v426 = vstv %s425
        %vm427 = vcmp.lt.s32.totalorder %v390, %v426
        %vm428 = vcmp.lt.s32.totalorder %v391, %v426
        %vm429 = vcmp.lt.s32.totalorder %v392, %v426
        %vm430 = vcmp.lt.s32.totalorder %v393, %v426
        %vm431 = vcmp.lt.s32.totalorder %v394, %v426
        %vm432 = vcmp.lt.s32.totalorder %v395, %v426
        %vm433 = vcmp.lt.s32.totalorder %v396, %v426
        %vm434 = vcmp.lt.s32.totalorder %v397, %v426
        %v435 = vsel %vm427, 1, 0
        %v436 = vsel %vm428, 1, 0
        %v437 = vsel %vm429, 1, 0
        %v438 = vsel %vm430, 1, 0
        %v439 = vsel %vm431, 1, 0
        %v440 = vsel %vm432, 1, 0
        %v441 = vsel %vm433, 1, 0
        %v442 = vsel %vm434, 1, 0
        %v443 = vcvt.s32.f32 %v435
        %v444 = vcvt.s32.f32 %v436
        %v445 = vcvt.s32.f32 %v437
        %v446 = vcvt.s32.f32 %v438
        %v447 = vcvt.s32.f32 %v439
        %v448 = vcvt.s32.f32 %v440
        %v449 = vcvt.s32.f32 %v441
        %v450 = vcvt.s32.f32 %v442
        %s451 = sadd.s32 %s388, 2
        %s452 = sld [smem:[#allocation3 + %s451]]
        %v453 = vstv %s452
        %vm454 = vcmp.lt.s32.totalorder %v390, %v453
        %vm455 = vcmp.lt.s32.totalorder %v391, %v453
        %vm456 = vcmp.lt.s32.totalorder %v392, %v453
        %vm457 = vcmp.lt.s32.totalorder %v393, %v453
        %vm458 = vcmp.lt.s32.totalorder %v394, %v453
        %vm459 = vcmp.lt.s32.totalorder %v395, %v453
        %vm460 = vcmp.lt.s32.totalorder %v396, %v453
        %vm461 = vcmp.lt.s32.totalorder %v397, %v453
        %v462 = vsel %vm454, 1, 0
        %v463 = vsel %vm455, 1, 0
        %v464 = vsel %vm456, 1, 0
        %v465 = vsel %vm457, 1, 0
        %v466 = vsel %vm458, 1, 0
        %v467 = vsel %vm459, 1, 0
        %v468 = vsel %vm460, 1, 0
        %v469 = vsel %vm461, 1, 0
        %v470 = vcvt.s32.f32 %v462
        %v471 = vcvt.s32.f32 %v463
        %v472 = vcvt.s32.f32 %v464
        %v473 = vcvt.s32.f32 %v465
        %v474 = vcvt.s32.f32 %v466
        %v475 = vcvt.s32.f32 %v467
        %v476 = vcvt.s32.f32 %v468
        %v477 = vcvt.s32.f32 %v469
        %s478 = sadd.s32 %s388, 3
        %s479 = sld [smem:[#allocation3 + %s478]]
        %v480 = vstv %s479
        %vm481 = vcmp.lt.s32.totalorder %v390, %v480
        %vm482 = vcmp.lt.s32.totalorder %v391, %v480
        %vm483 = vcmp.lt.s32.totalorder %v392, %v480
        %vm484 = vcmp.lt.s32.totalorder %v393, %v480
        %vm485 = vcmp.lt.s32.totalorder %v394, %v480
        %vm486 = vcmp.lt.s32.totalorder %v395, %v480
        %vm487 = vcmp.lt.s32.totalorder %v396, %v480
        %vm488 = vcmp.lt.s32.totalorder %v397, %v480
        %v489 = vsel %vm481, 1, 0
        %v490 = vsel %vm482, 1, 0
        %v491 = vsel %vm483, 1, 0
        %v492 = vsel %vm484, 1, 0
        %v493 = vsel %vm485, 1, 0
        %v494 = vsel %vm486, 1, 0
        %v495 = vsel %vm487, 1, 0
        %v496 = vsel %vm488, 1, 0
        %v497 = vcvt.s32.f32 %v489
        %v498 = vcvt.s32.f32 %v490
        %v499 = vcvt.s32.f32 %v491
        %v500 = vcvt.s32.f32 %v492
        %v501 = vcvt.s32.f32 %v493
        %v502 = vcvt.s32.f32 %v494
        %v503 = vcvt.s32.f32 %v495
        %v504 = vcvt.s32.f32 %v496
        %v505 = vld [vmem:[%s4] sm:$0xf]
        %v506 = vld [vmem:[%s4 + $0x4] sm:$0xf]
        %v507 = vld [vmem:[%s4 + $0x8] sm:$0xf]
        %v508 = vld [vmem:[%s4 + $0xc] sm:$0xf]
        %v509 = vld [vmem:[%s4 + $0x10] sm:$0xf]
        %v510 = vld [vmem:[%s4 + $0x14] sm:$0xf]
        %v511 = vld [vmem:[%s4 + $0x18] sm:$0xf]
        %v512 = vld [vmem:[%s4 + $0x1c] sm:$0xf]
        %v513 = vld [vmem:[%s4 + $0x20] sm:$0xf]
        %v514 = vld [vmem:[%s4 + $0x24] sm:$0xf]
        %v515 = vld [vmem:[%s4 + $0x28] sm:$0xf]
        %v516 = vld [vmem:[%s4 + $0x2c] sm:$0xf]
        %v517 = vld [vmem:[%s4 + $0x30] sm:$0xf]
        %v518 = vld [vmem:[%s4 + $0x34] sm:$0xf]
        %v519 = vld [vmem:[%s4 + $0x38] sm:$0xf]
        %v520 = vld [vmem:[%s4 + $0x3c] sm:$0xf]
        %v521 = vld [vmem:[%s4 + $0x40] sm:$0xf]
        %v522 = vld [vmem:[%s4 + $0x44] sm:$0xf]
        %v523 = vld [vmem:[%s4 + $0x48] sm:$0xf]
        %v524 = vld [vmem:[%s4 + $0x4c] sm:$0xf]
        %v525 = vld [vmem:[%s4 + $0x50] sm:$0xf]
        %v526 = vld [vmem:[%s4 + $0x54] sm:$0xf]
        %v527 = vld [vmem:[%s5] sm:$0x1]
        %v528 = vld [vmem:[%s5 + $0x1] sm:$0x1]
        %v529 = vld [vmem:[%s5 + $0x2] sm:$0x1]
        %v530 = vld [vmem:[%s5 + $0x3] sm:$0x1]
        %v531 = vld [vmem:[%s6] sm:$0xf]
        %v532 = vld [vmem:[%s6 + $0x4] sm:$0xf]
        %v533 = vld [vmem:[%s6 + $0x8] sm:$0xf]
        %v534 = vld [vmem:[%s6 + $0xc] sm:$0xf]
        %v535 = vld [vmem:[%s6 + $0x10] sm:$0x1]
        %v536 = vunpack.c.l.bf16 %v535
        %v537 = vld [vmem:[%s7] sm:$0xf]
        %v538 = vld [vmem:[%s7 + $0x4] sm:$0xf]
        %v539 = vld [vmem:[%s7 + $0x8] sm:$0xf]
        %v540 = vld [vmem:[%s7 + $0xc] sm:$0xf]
        %v541 = vld [vmem:[%s7 + $0x10] sm:$0x1]
        %v542 = vunpack.c.l.bf16 %v541
        %v543 = vld [vmem:[%s8] sm:$0xf]
        %v544 = vld [vmem:[%s8 + $0x4] sm:$0xf]
        %v545 = vld [vmem:[%s8 + $0x8] sm:$0xf]
        %v546 = vld [vmem:[%s8 + $0xc] sm:$0xf]
        %v547 = vld [vmem:[%s8 + $0x10] sm:$0x1]
        %v548 = vunpack.c.l.bf16 %v547
        %v549 = vld [vmem:[%s377] sm:$0xf]
        %v550 = vld [vmem:[%s377 + $0x4] sm:$0xf]
        %v551 = vld [vmem:[%s377 + $0x8] sm:$0xf]
        %v552 = vld [vmem:[%s377 + $0xc] sm:$0xf]
        %v553 = vld [vmem:[%s377 + $0x10] sm:$0xf]
        %v554 = vld [vmem:[%s377 + $0x14] sm:$0xf]
        %v555 = vld [vmem:[%s377 + $0x18] sm:$0xf]
        %v556 = vld [vmem:[%s377 + $0x1c] sm:$0xf]
        %v557 = vld [vmem:[%s377 + $0x20] sm:$0xf]
        %v558 = vld [vmem:[%s377 + $0x24] sm:$0xf]
        %v559 = vld [vmem:[%s377 + $0x28] sm:$0xf]
        %v560 = vld [vmem:[%s377 + $0x2c] sm:$0xf]
        %v561 = vld [vmem:[%s377 + $0x30] sm:$0xf]
        %v562 = vld [vmem:[%s377 + $0x34] sm:$0xf]
        %v563 = vld [vmem:[%s377 + $0x38] sm:$0xf]
        %v564 = vld [vmem:[%s377 + $0x3c] sm:$0xf]
        %v565 = vld [vmem:[%s377 + $0x40] sm:$0xf]
        %v566 = vld [vmem:[%s377 + $0x44] sm:$0xf]
        %v567 = vld [vmem:[%s377 + $0x48] sm:$0xf]
        %v568 = vld [vmem:[%s377 + $0x4c] sm:$0xf]
        %v569 = vld [vmem:[%s377 + $0x50] sm:$0xf]
        %v570 = vld [vmem:[%s377 + $0x54] sm:$0xf]
        %v571 = vld [vmem:[%s377 + $0x58] sm:$0xf]
        %v572 = vld [vmem:[%s377 + $0x5c] sm:$0xf]
        %v573 = vld [vmem:[%s377 + $0x60] sm:$0xf]
        %v574 = vld [vmem:[%s377 + $0x64] sm:$0xf]
        %v575 = vld [vmem:[%s377 + $0x68] sm:$0xf]
        %v576 = vld [vmem:[%s377 + $0x6c] sm:$0xf]
        %v577 = vld [vmem:[%s377 + $0x70] sm:$0xf]
        %v578 = vld [vmem:[%s377 + $0x74] sm:$0xf]
        %v579 = vld [vmem:[%s377 + $0x78] sm:$0xf]
        %v580 = vld [vmem:[%s377 + $0x7c] sm:$0xf]
        %v613 = vunpack.c.l.b16 %v549
        %v614 = vunpack.c.l.b16 %v550
        %v615 = vunpack.c.l.b16 %v551
        %v616 = vunpack.c.l.b16 %v552
        %v617 = vunpack.c.l.b16 %v553
        %v618 = vunpack.c.l.b16 %v554
        %v619 = vunpack.c.l.b16 %v555
        %v620 = vunpack.c.l.b16 %v556
        %v621 = vunpack.c.l.b16 %v557
        %v622 = vunpack.c.l.b16 %v558
        %v623 = vunpack.c.l.b16 %v559
        %v624 = vunpack.c.l.b16 %v560
        %v625 = vunpack.c.l.b16 %v561
        %v626 = vunpack.c.l.b16 %v562
        %v627 = vunpack.c.l.b16 %v563
        %v628 = vunpack.c.l.b16 %v564
        %v629 = vunpack.c.l.b16 %v565
        %v630 = vunpack.c.l.b16 %v566
        %v631 = vunpack.c.l.b16 %v567
        %v632 = vunpack.c.l.b16 %v568
        %v633 = vunpack.c.l.b16 %v569
        %v634 = vunpack.c.l.b16 %v570
        %v635 = vunpack.c.l.b16 %v571
        %v636 = vunpack.c.l.b16 %v572
        %v637 = vunpack.c.l.b16 %v573
        %v638 = vunpack.c.l.b16 %v574
        %v639 = vunpack.c.l.b16 %v575
        %v640 = vunpack.c.l.b16 %v576
        %v641 = vunpack.c.l.b16 %v577
        %v642 = vunpack.c.l.b16 %v578
        %v643 = vunpack.c.l.b16 %v579
        %v644 = vunpack.c.l.b16 %v580
        %v645 = vpack.c.b16 %v614, %v613
        %v646 = vpack.c.b16 %v616, %v615
        %v647 = vpack.c.b16 %v618, %v617
        %v648 = vpack.c.b16 %v620, %v619
        %v649 = vpack.c.b16 %v622, %v621
        %v650 = vpack.c.b16 %v624, %v623
        %v651 = vpack.c.b16 %v626, %v625
        %v652 = vpack.c.b16 %v628, %v627
        %v653 = vpack.c.b16 %v630, %v629
        %v654 = vpack.c.b16 %v632, %v631
        %v655 = vpack.c.b16 %v634, %v633
        %v656 = vpack.c.b16 %v636, %v635
        %v657 = vpack.c.b16 %v638, %v637
        %v658 = vpack.c.b16 %v640, %v639
        %v659 = vpack.c.b16 %v642, %v641
        %v660 = vpack.c.b16 %v644, %v643
        %v663 = vunpack.c.l.b16 %v505
        %v664 = vunpack.c.l.b16 %v506
        %v665 = vpack.c.b16 %v664, %v663
        %vm667 = vcmask 130048
        %v669 = vsel %vm667, %v645, 0
        %v672 = vsel %vm667, %v646, 0
        %v675 = vsel %vm667, %v647, 0
        %v678 = vsel %vm667, %v648, 0
        %v681 = vsel %vm667, %v649, 0
        %v684 = vsel %vm667, %v650, 0
        %v687 = vsel %vm667, %v651, 0
        %v690 = vsel %vm667, %v652, 0
        %v693 = vsel %vm667, %v653, 0
        %v696 = vsel %vm667, %v654, 0
        %v699 = vsel %vm667, %v655, 0
        %v702 = vsel %vm667, %v656, 0
        %v705 = vsel %vm667, %v657, 0
        %v708 = vsel %vm667, %v658, 0
        %v711 = vsel %vm667, %v659, 0
        %v714 = vsel %vm667, %v660, 0
        %716 = vmatpush.bf16.msra.mxu0 0
        %717 = vmatpush.bf16.msra.mxu0 0
        %718 = vmatpush.bf16.msra.mxu0 0
        %719 = vmatpush.bf16.msra.mxu0 0
        %720 = vmatpush.bf16.msra.mxu0 0
        %721 = vmatpush.bf16.msra.mxu0 0
        %722 = vmatpush.bf16.msra.mxu0 0
        %723 = vmatpush.bf16.msra.mxu0 %v665
        %724 = vmatmul.bf16.gmra.mxu0 %v669
        %v725 = vpop.f32.mrf.mxu0
        %v726 = vadd.f32 0.0, %v725
        %v727 = vpop.f32.mrf.mxu0
        %v728 = vadd.f32 0.0, %v727
        %729 = vmatmul.bf16.gmra.mxu0 %v672
        %v730 = vpop.f32.mrf.mxu0
        %v731 = vadd.f32 0.0, %v730
        %v732 = vpop.f32.mrf.mxu0
        %v733 = vadd.f32 0.0, %v732
        %734 = vmatmul.bf16.gmra.mxu0 %v675
        %v735 = vpop.f32.mrf.mxu0
        %v736 = vadd.f32 0.0, %v735
        %v737 = vpop.f32.mrf.mxu0
        %v738 = vadd.f32 0.0, %v737
        %739 = vmatmul.bf16.gmra.mxu0 %v678
        %v740 = vpop.f32.mrf.mxu0
        %v741 = vadd.f32 0.0, %v740
        %v742 = vpop.f32.mrf.mxu0
        %v743 = vadd.f32 0.0, %v742
        %744 = vmatmul.bf16.gmra.mxu0 %v681
        %v745 = vpop.f32.mrf.mxu0
        %v746 = vadd.f32 0.0, %v745
        %v747 = vpop.f32.mrf.mxu0
        %v748 = vadd.f32 0.0, %v747
        %749 = vmatmul.bf16.gmra.mxu0 %v684
        %v750 = vpop.f32.mrf.mxu0
        %v751 = vadd.f32 0.0, %v750
        %v752 = vpop.f32.mrf.mxu0
        %v753 = vadd.f32 0.0, %v752
        %754 = vmatmul.bf16.gmra.mxu0 %v687
        %v755 = vpop.f32.mrf.mxu0
        %v756 = vadd.f32 0.0, %v755
        %v757 = vpop.f32.mrf.mxu0
        %v758 = vadd.f32 0.0, %v757
        %759 = vmatmul.bf16.gmra.mxu0 %v690
        %v760 = vpop.f32.mrf.mxu0
        %v761 = vadd.f32 0.0, %v760
        %v762 = vpop.f32.mrf.mxu0
        %v763 = vadd.f32 0.0, %v762
        %764 = vmatmul.bf16.gmra.mxu0 %v693
        %v765 = vpop.f32.mrf.mxu0
        %v766 = vadd.f32 0.0, %v765
        %v767 = vpop.f32.mrf.mxu0
        %v768 = vadd.f32 0.0, %v767
        %769 = vmatmul.bf16.gmra.mxu0 %v696
        %v770 = vpop.f32.mrf.mxu0
        %v771 = vadd.f32 0.0, %v770
        %v772 = vpop.f32.mrf.mxu0
        %v773 = vadd.f32 0.0, %v772
        %774 = vmatmul.bf16.gmra.mxu0 %v699
        %v775 = vpop.f32.mrf.mxu0
        %v776 = vadd.f32 0.0, %v775
        %v777 = vpop.f32.mrf.mxu0
        %v778 = vadd.f32 0.0, %v777
        %779 = vmatmul.bf16.gmra.mxu0 %v702
        %v780 = vpop.f32.mrf.mxu0
        %v781 = vadd.f32 0.0, %v780
        %v782 = vpop.f32.mrf.mxu0
        %v783 = vadd.f32 0.0, %v782
        %784 = vmatmul.bf16.gmra.mxu0 %v705
        %v785 = vpop.f32.mrf.mxu0
        %v786 = vadd.f32 0.0, %v785
        %v787 = vpop.f32.mrf.mxu0
        %v788 = vadd.f32 0.0, %v787
        %789 = vmatmul.bf16.gmra.mxu0 %v708
        %v790 = vpop.f32.mrf.mxu0
        %v791 = vadd.f32 0.0, %v790
        %v792 = vpop.f32.mrf.mxu0
        %v793 = vadd.f32 0.0, %v792
        %794 = vmatmul.bf16.gmra.mxu0 %v711
        %v795 = vpop.f32.mrf.mxu0
        %v796 = vadd.f32 0.0, %v795
        %v797 = vpop.f32.mrf.mxu0
        %v798 = vadd.f32 0.0, %v797
        %799 = vmatmul.bf16.gmra.mxu0 %v714
        %v800 = vpop.f32.mrf.mxu0
        %v801 = vadd.f32 0.0, %v800
        %v802 = vpop.f32.mrf.mxu0
        %v803 = vadd.f32 0.0, %v802
        %804 = vdwg.mxu0
        %v805 = vpack.c.bf16 %v726, %v726
        %v806 = vpack.c.bf16 %v728, %v728
        %v807 = vpack.c.bf16 %v731, %v731
        %v808 = vpack.c.bf16 %v733, %v733
        %v809 = vpack.c.bf16 %v736, %v736
        %v810 = vpack.c.bf16 %v738, %v738
        %v811 = vpack.c.bf16 %v741, %v741
        %v812 = vpack.c.bf16 %v743, %v743
        %v813 = vpack.c.bf16 %v746, %v746
        %v814 = vpack.c.bf16 %v748, %v748
        %v815 = vpack.c.bf16 %v751, %v751
        %v816 = vpack.c.bf16 %v753, %v753
        %v817 = vpack.c.bf16 %v756, %v756
        %v818 = vpack.c.bf16 %v758, %v758
        %v819 = vpack.c.bf16 %v761, %v761
        %v820 = vpack.c.bf16 %v763, %v763
        %v821 = vpack.c.bf16 %v766, %v766
        %v822 = vpack.c.bf16 %v768, %v768
        %v823 = vpack.c.bf16 %v771, %v771
        %v824 = vpack.c.bf16 %v773, %v773
        %v825 = vpack.c.bf16 %v776, %v776
        %v826 = vpack.c.bf16 %v778, %v778
        %v827 = vpack.c.bf16 %v781, %v781
        %v828 = vpack.c.bf16 %v783, %v783
        %v829 = vpack.c.bf16 %v786, %v786
        %v830 = vpack.c.bf16 %v788, %v788
        %v831 = vpack.c.bf16 %v791, %v791
        %v832 = vpack.c.bf16 %v793, %v793
        %v833 = vpack.c.bf16 %v796, %v796
        %v834 = vpack.c.bf16 %v798, %v798
        %v835 = vpack.c.bf16 %v801, %v801
        %v836 = vpack.c.bf16 %v803, %v803
        %v837 = vld [vmem:[%s384] sm:$0xf]
        %v838 = vld [vmem:[%s384 + $0x4] sm:$0xf]
        %v839 = vld [vmem:[%s384 + $0x8] sm:$0xf]
        %v840 = vld [vmem:[%s384 + $0xc] sm:$0xf]
        %v841 = vld [vmem:[%s384 + $0x10] sm:$0xf]
        %v842 = vld [vmem:[%s384 + $0x14] sm:$0xf]
        %v843 = vld [vmem:[%s384 + $0x18] sm:$0xf]
        %v844 = vld [vmem:[%s384 + $0x1c] sm:$0xf]
        %v853 = vunpack.c.l.b16 %v837
        %v854 = vunpack.c.l.b16 %v838
        %v855 = vunpack.c.l.b16 %v839
        %v856 = vunpack.c.l.b16 %v840
        %v857 = vunpack.c.l.b16 %v841
        %v858 = vunpack.c.l.b16 %v842
        %v859 = vunpack.c.l.b16 %v843
        %v860 = vunpack.c.l.b16 %v844
        %v861 = vpack.c.b16 %v854, %v853
        %v862 = vpack.c.b16 %v856, %v855
        %v863 = vpack.c.b16 %v858, %v857
        %v864 = vpack.c.b16 %v860, %v859
        %v873 = vunpack.c.l.b16 %v805
        %v874 = vunpack.c.l.b16 %v806
        %v875 = vunpack.c.l.b16 %v807
        %v876 = vunpack.c.l.b16 %v808
        %v877 = vunpack.c.l.b16 %v809
        %v878 = vunpack.c.l.b16 %v810
        %v879 = vunpack.c.l.b16 %v811
        %v880 = vunpack.c.l.b16 %v812
        %v881 = vpack.c.b16 %v874, %v873
        %v882 = vpack.c.b16 %v876, %v875
        %v883 = vpack.c.b16 %v878, %v877
        %v884 = vpack.c.b16 %v880, %v879
        %vm889 = vcmask 523264
        %v891 = vsel %vm889, %v861, 0
        %v894 = vsel %vm889, %v862, 0
        %v897 = vsel %vm889, %v863, 0
        %v900 = vsel %vm889, %v864, 0
        %902 = vmatpush.bf16.msra.mxu0 0
        %903 = vmatpush.bf16.msra.mxu0 0
        %904 = vmatpush.bf16.msra.mxu0 0
        %905 = vmatpush.bf16.msra.mxu0 0
        %906 = vmatpush.bf16.msra.mxu0 %v884
        %907 = vmatpush.bf16.msra.mxu0 %v883
        %908 = vmatpush.bf16.msra.mxu0 %v882
        %909 = vmatpush.bf16.msra.mxu0 %v881
        %910 = vmatmul.bf16.gmra.mxu0 %v891
        %v911 = vpop.f32.mrf.mxu0
        %v912 = vadd.f32 0.0, %v911
        %v913 = vpop.f32.mrf.mxu0
        %v914 = vadd.f32 0.0, %v913
        %915 = vmatmul.bf16.gmra.mxu0 %v894
        %v916 = vpop.f32.mrf.mxu0
        %v917 = vadd.f32 0.0, %v916
        %v918 = vpop.f32.mrf.mxu0
        %v919 = vadd.f32 0.0, %v918
        %920 = vmatmul.bf16.gmra.mxu0 %v897
        %v921 = vpop.f32.mrf.mxu0
        %v922 = vadd.f32 0.0, %v921
        %v923 = vpop.f32.mrf.mxu0
        %v924 = vadd.f32 0.0, %v923
        %925 = vmatmul.bf16.gmra.mxu0 %v900
        %v926 = vpop.f32.mrf.mxu0
        %v927 = vadd.f32 0.0, %v926
        %v928 = vpop.f32.mrf.mxu0
        %v929 = vadd.f32 0.0, %v928
        %930 = vdwg.mxu0
        %s931 = scalar_lea.vmem %s384, 32
        %v932 = vld [vmem:[%s931] sm:$0xf]
        %v933 = vld [vmem:[%s931 + $0x4] sm:$0xf]
        %v934 = vld [vmem:[%s931 + $0x8] sm:$0xf]
        %v935 = vld [vmem:[%s931 + $0xc] sm:$0xf]
        %v936 = vld [vmem:[%s931 + $0x10] sm:$0xf]
        %v937 = vld [vmem:[%s931 + $0x14] sm:$0xf]
        %v938 = vld [vmem:[%s931 + $0x18] sm:$0xf]
        %v939 = vld [vmem:[%s931 + $0x1c] sm:$0xf]
        %v948 = vunpack.c.l.b16 %v932
        %v949 = vunpack.c.l.b16 %v933
        %v950 = vunpack.c.l.b16 %v934
        %v951 = vunpack.c.l.b16 %v935
        %v952 = vunpack.c.l.b16 %v936
        %v953 = vunpack.c.l.b16 %v937
        %v954 = vunpack.c.l.b16 %v938
        %v955 = vunpack.c.l.b16 %v939
        %v956 = vpack.c.b16 %v949, %v948
        %v957 = vpack.c.b16 %v951, %v950
        %v958 = vpack.c.b16 %v953, %v952
        %v959 = vpack.c.b16 %v955, %v954
        %v968 = vunpack.c.l.b16 %v813
        %v969 = vunpack.c.l.b16 %v814
        %v970 = vunpack.c.l.b16 %v815
        %v971 = vunpack.c.l.b16 %v816
        %v972 = vunpack.c.l.b16 %v817
        %v973 = vunpack.c.l.b16 %v818
        %v974 = vunpack.c.l.b16 %v819
        %v975 = vunpack.c.l.b16 %v820
        %v976 = vpack.c.b16 %v969, %v968
        %v977 = vpack.c.b16 %v971, %v970
        %v978 = vpack.c.b16 %v973, %v972
        %v979 = vpack.c.b16 %v975, %v974
        %v985 = vsel %vm889, %v956, 0
        %v988 = vsel %vm889, %v957, 0
        %v991 = vsel %vm889, %v958, 0
        %v994 = vsel %vm889, %v959, 0
        %996 = vmatpush.bf16.msra.mxu0 0
        %997 = vmatpush.bf16.msra.mxu0 0
        %998 = vmatpush.bf16.msra.mxu0 0
        %999 = vmatpush.bf16.msra.mxu0 0
        %1000 = vmatpush.bf16.msra.mxu0 %v979
        %1001 = vmatpush.bf16.msra.mxu0 %v978
        %1002 = vmatpush.bf16.msra.mxu0 %v977
        %1003 = vmatpush.bf16.msra.mxu0 %v976
        %1004 = vmatmul.bf16.gmra.mxu0 %v985
        %v1005 = vpop.f32.mrf.mxu0
        %v1006 = vadd.f32 0.0, %v1005
        %v1007 = vpop.f32.mrf.mxu0
        %v1008 = vadd.f32 0.0, %v1007
        %1009 = vmatmul.bf16.gmra.mxu0 %v988
        %v1010 = vpop.f32.mrf.mxu0
        %v1011 = vadd.f32 0.0, %v1010
        %v1012 = vpop.f32.mrf.mxu0
        %v1013 = vadd.f32 0.0, %v1012
        %1014 = vmatmul.bf16.gmra.mxu0 %v991
        %v1015 = vpop.f32.mrf.mxu0
        %v1016 = vadd.f32 0.0, %v1015
        %v1017 = vpop.f32.mrf.mxu0
        %v1018 = vadd.f32 0.0, %v1017
        %1019 = vmatmul.bf16.gmra.mxu0 %v994
        %v1020 = vpop.f32.mrf.mxu0
        %v1021 = vadd.f32 0.0, %v1020
        %v1022 = vpop.f32.mrf.mxu0
        %v1023 = vadd.f32 0.0, %v1022
        %1024 = vdwg.mxu0
        %s1025 = scalar_lea.vmem %s384, 64
        %v1026 = vld [vmem:[%s1025] sm:$0xf]
        %v1027 = vld [vmem:[%s1025 + $0x4] sm:$0xf]
        %v1028 = vld [vmem:[%s1025 + $0x8] sm:$0xf]
        %v1029 = vld [vmem:[%s1025 + $0xc] sm:$0xf]
        %v1030 = vld [vmem:[%s1025 + $0x10] sm:$0xf]
        %v1031 = vld [vmem:[%s1025 + $0x14] sm:$0xf]
        %v1032 = vld [vmem:[%s1025 + $0x18] sm:$0xf]
        %v1033 = vld [vmem:[%s1025 + $0x1c] sm:$0xf]
        %v1042 = vunpack.c.l.b16 %v1026
        %v1043 = vunpack.c.l.b16 %v1027
        %v1044 = vunpack.c.l.b16 %v1028
        %v1045 = vunpack.c.l.b16 %v1029
        %v1046 = vunpack.c.l.b16 %v1030
        %v1047 = vunpack.c.l.b16 %v1031
        %v1048 = vunpack.c.l.b16 %v1032
        %v1049 = vunpack.c.l.b16 %v1033
        %v1050 = vpack.c.b16 %v1043, %v1042
        %v1051 = vpack.c.b16 %v1045, %v1044
        %v1052 = vpack.c.b16 %v1047, %v1046
        %v1053 = vpack.c.b16 %v1049, %v1048
        %v1062 = vunpack.c.l.b16 %v821
        %v1063 = vunpack.c.l.b16 %v822
        %v1064 = vunpack.c.l.b16 %v823
        %v1065 = vunpack.c.l.b16 %v824
        %v1066 = vunpack.c.l.b16 %v825
        %v1067 = vunpack.c.l.b16 %v826
        %v1068 = vunpack.c.l.b16 %v827
        %v1069 = vunpack.c.l.b16 %v828
        %v1070 = vpack.c.b16 %v1063, %v1062
        %v1071 = vpack.c.b16 %v1065, %v1064
        %v1072 = vpack.c.b16 %v1067, %v1066
        %v1073 = vpack.c.b16 %v1069, %v1068
        %v1079 = vsel %vm889, %v1050, 0
        %v1082 = vsel %vm889, %v1051, 0
        %v1085 = vsel %vm889, %v1052, 0
        %v1088 = vsel %vm889, %v1053, 0
        %1090 = vmatpush.bf16.msra.mxu0 0
        %1091 = vmatpush.bf16.msra.mxu0 0
        %1092 = vmatpush.bf16.msra.mxu0 0
        %1093 = vmatpush.bf16.msra.mxu0 0
        %1094 = vmatpush.bf16.msra.mxu0 %v1073
        %1095 = vmatpush.bf16.msra.mxu0 %v1072
        %1096 = vmatpush.bf16.msra.mxu0 %v1071
        %1097 = vmatpush.bf16.msra.mxu0 %v1070
        %1098 = vmatmul.bf16.gmra.mxu0 %v1079
        %v1099 = vpop.f32.mrf.mxu0
        %v1100 = vadd.f32 0.0, %v1099
        %v1101 = vpop.f32.mrf.mxu0
        %v1102 = vadd.f32 0.0, %v1101
        %1103 = vmatmul.bf16.gmra.mxu0 %v1082
        %v1104 = vpop.f32.mrf.mxu0
        %v1105 = vadd.f32 0.0, %v1104
        %v1106 = vpop.f32.mrf.mxu0
        %v1107 = vadd.f32 0.0, %v1106
        %1108 = vmatmul.bf16.gmra.mxu0 %v1085
        %v1109 = vpop.f32.mrf.mxu0
        %v1110 = vadd.f32 0.0, %v1109
        %v1111 = vpop.f32.mrf.mxu0
        %v1112 = vadd.f32 0.0, %v1111
        %1113 = vmatmul.bf16.gmra.mxu0 %v1088
        %v1114 = vpop.f32.mrf.mxu0
        %v1115 = vadd.f32 0.0, %v1114
        %v1116 = vpop.f32.mrf.mxu0
        %v1117 = vadd.f32 0.0, %v1116
        %1118 = vdwg.mxu0
        %s1119 = scalar_lea.vmem %s384, 96
        %v1120 = vld [vmem:[%s1119] sm:$0xf]
        %v1121 = vld [vmem:[%s1119 + $0x4] sm:$0xf]
        %v1122 = vld [vmem:[%s1119 + $0x8] sm:$0xf]
        %v1123 = vld [vmem:[%s1119 + $0xc] sm:$0xf]
        %v1124 = vld [vmem:[%s1119 + $0x10] sm:$0xf]
        %v1125 = vld [vmem:[%s1119 + $0x14] sm:$0xf]
        %v1126 = vld [vmem:[%s1119 + $0x18] sm:$0xf]
        %v1127 = vld [vmem:[%s1119 + $0x1c] sm:$0xf]
        %v1136 = vunpack.c.l.b16 %v1120
        %v1137 = vunpack.c.l.b16 %v1121
        %v1138 = vunpack.c.l.b16 %v1122
        %v1139 = vunpack.c.l.b16 %v1123
        %v1140 = vunpack.c.l.b16 %v1124
        %v1141 = vunpack.c.l.b16 %v1125
        %v1142 = vunpack.c.l.b16 %v1126
        %v1143 = vunpack.c.l.b16 %v1127
        %v1144 = vpack.c.b16 %v1137, %v1136
        %v1145 = vpack.c.b16 %v1139, %v1138
        %v1146 = vpack.c.b16 %v1141, %v1140
        %v1147 = vpack.c.b16 %v1143, %v1142
        %v1156 = vunpack.c.l.b16 %v829
        %v1157 = vunpack.c.l.b16 %v830
        %v1158 = vunpack.c.l.b16 %v831
        %v1159 = vunpack.c.l.b16 %v832
        %v1160 = vunpack.c.l.b16 %v833
        %v1161 = vunpack.c.l.b16 %v834
        %v1162 = vunpack.c.l.b16 %v835
        %v1163 = vunpack.c.l.b16 %v836
        %v1164 = vpack.c.b16 %v1157, %v1156
        %v1165 = vpack.c.b16 %v1159, %v1158
        %v1166 = vpack.c.b16 %v1161, %v1160
        %v1167 = vpack.c.b16 %v1163, %v1162
        %v1173 = vsel %vm889, %v1144, 0
        %v1176 = vsel %vm889, %v1145, 0
        %v1179 = vsel %vm889, %v1146, 0
        %v1182 = vsel %vm889, %v1147, 0
        %1184 = vmatpush.bf16.msra.mxu0 0
        %1185 = vmatpush.bf16.msra.mxu0 0
        %1186 = vmatpush.bf16.msra.mxu0 0
        %1187 = vmatpush.bf16.msra.mxu0 0
        %1188 = vmatpush.bf16.msra.mxu0 %v1167
        %1189 = vmatpush.bf16.msra.mxu0 %v1166
        %1190 = vmatpush.bf16.msra.mxu0 %v1165
        %1191 = vmatpush.bf16.msra.mxu0 %v1164
        %1192 = vmatmul.bf16.gmra.mxu0 %v1173
        %v1193 = vpop.f32.mrf.mxu0
        %v1194 = vadd.f32 0.0, %v1193
        %v1195 = vpop.f32.mrf.mxu0
        %v1196 = vadd.f32 0.0, %v1195
        %1197 = vmatmul.bf16.gmra.mxu0 %v1176
        %v1198 = vpop.f32.mrf.mxu0
        %v1199 = vadd.f32 0.0, %v1198
        %v1200 = vpop.f32.mrf.mxu0
        %v1201 = vadd.f32 0.0, %v1200
        %1202 = vmatmul.bf16.gmra.mxu0 %v1179
        %v1203 = vpop.f32.mrf.mxu0
        %v1204 = vadd.f32 0.0, %v1203
        %v1205 = vpop.f32.mrf.mxu0
        %v1206 = vadd.f32 0.0, %v1205
        %1207 = vmatmul.bf16.gmra.mxu0 %v1182
        %v1208 = vpop.f32.mrf.mxu0
        %v1209 = vadd.f32 0.0, %v1208
        %v1210 = vpop.f32.mrf.mxu0
        %v1211 = vadd.f32 0.0, %v1210
        %1212 = vdwg.mxu0
        %v1213 = vperm.slane %v527, 0
        %v1214 = vadd.f32 %v912, %v1213
        %v1215 = vadd.f32 %v914, %v1213
        %v1216 = vadd.f32 %v917, %v1213
        %v1217 = vadd.f32 %v919, %v1213
        %v1218 = vadd.f32 %v922, %v1213
        %v1219 = vadd.f32 %v924, %v1213
        %v1220 = vadd.f32 %v927, %v1213
        %v1221 = vadd.f32 %v929, %v1213
        %v1222 = vadd.f32 %v1006, %v1213
        %v1223 = vadd.f32 %v1008, %v1213
        %v1224 = vadd.f32 %v1011, %v1213
        %v1225 = vadd.f32 %v1013, %v1213
        %v1226 = vadd.f32 %v1016, %v1213
        %v1227 = vadd.f32 %v1018, %v1213
        %v1228 = vadd.f32 %v1021, %v1213
        %v1229 = vadd.f32 %v1023, %v1213
        %v1230 = vadd.f32 %v1100, %v1213
        %v1231 = vadd.f32 %v1102, %v1213
        %v1232 = vadd.f32 %v1105, %v1213
        %v1233 = vadd.f32 %v1107, %v1213
        %v1234 = vadd.f32 %v1110, %v1213
        %v1235 = vadd.f32 %v1112, %v1213
        %v1236 = vadd.f32 %v1115, %v1213
        %v1237 = vadd.f32 %v1117, %v1213
        %v1238 = vadd.f32 %v1194, %v1213
        %v1239 = vadd.f32 %v1196, %v1213
        %v1240 = vadd.f32 %v1199, %v1213
        %v1241 = vadd.f32 %v1201, %v1213
        %v1242 = vadd.f32 %v1204, %v1213
        %v1243 = vadd.f32 %v1206, %v1213
        %v1244 = vadd.f32 %v1209, %v1213
        %v1245 = vadd.f32 %v1211, %v1213
        %v1246 = vmax.f32 %v1214, 0.0
        %v1247 = vmax.f32 %v1215, 0.0
        %v1248 = vmax.f32 %v1216, 0.0
        %v1249 = vmax.f32 %v1217, 0.0
        %v1250 = vmax.f32 %v1218, 0.0
        %v1251 = vmax.f32 %v1219, 0.0
        %v1252 = vmax.f32 %v1220, 0.0
        %v1253 = vmax.f32 %v1221, 0.0
        %v1254 = vmax.f32 %v1222, 0.0
        %v1255 = vmax.f32 %v1223, 0.0
        %v1256 = vmax.f32 %v1224, 0.0
        %v1257 = vmax.f32 %v1225, 0.0
        %v1258 = vmax.f32 %v1226, 0.0
        %v1259 = vmax.f32 %v1227, 0.0
        %v1260 = vmax.f32 %v1228, 0.0
        %v1261 = vmax.f32 %v1229, 0.0
        %v1262 = vmax.f32 %v1230, 0.0
        %v1263 = vmax.f32 %v1231, 0.0
        %v1264 = vmax.f32 %v1232, 0.0
        %v1265 = vmax.f32 %v1233, 0.0
        %v1266 = vmax.f32 %v1234, 0.0
        %v1267 = vmax.f32 %v1235, 0.0
        %v1268 = vmax.f32 %v1236, 0.0
        %v1269 = vmax.f32 %v1237, 0.0
        %v1270 = vmax.f32 %v1238, 0.0
        %v1271 = vmax.f32 %v1239, 0.0
        %v1272 = vmax.f32 %v1240, 0.0
        %v1273 = vmax.f32 %v1241, 0.0
        %v1274 = vmax.f32 %v1242, 0.0
        %v1275 = vmax.f32 %v1243, 0.0
        %v1276 = vmax.f32 %v1244, 0.0
        %v1277 = vmax.f32 %v1245, 0.0
        %1279 = vset.pattern.permute.xlu0 0
        %1280 = vperm.xlu0 %1279, %v416
        %v1281 = vpop.permute.xlu0 %1280
        %1284 = vset.pattern.permute.xlu0 0
        %1285 = vperm.xlu0 %1284, %v417
        %v1286 = vpop.permute.xlu0 %1285
        %1289 = vset.pattern.permute.xlu0 0
        %1290 = vperm.xlu0 %1289, %v418
        %v1291 = vpop.permute.xlu0 %1290
        %1294 = vset.pattern.permute.xlu0 0
        %1295 = vperm.xlu0 %1294, %v419
        %v1296 = vpop.permute.xlu0 %1295
        %1299 = vset.pattern.permute.xlu0 0
        %1300 = vperm.xlu0 %1299, %v420
        %v1301 = vpop.permute.xlu0 %1300
        %1304 = vset.pattern.permute.xlu0 0
        %1305 = vperm.xlu0 %1304, %v421
        %v1306 = vpop.permute.xlu0 %1305
        %1309 = vset.pattern.permute.xlu0 0
        %1310 = vperm.xlu0 %1309, %v422
        %v1311 = vpop.permute.xlu0 %1310
        %1314 = vset.pattern.permute.xlu0 0
        %1315 = vperm.xlu0 %1314, %v423
        %v1316 = vpop.permute.xlu0 %1315
        %1319 = vset.pattern.permute.xlu0 0
        %1320 = vperm.xlu0 %1319, %v443
        %v1321 = vpop.permute.xlu0 %1320
        %1324 = vset.pattern.permute.xlu0 0
        %1325 = vperm.xlu0 %1324, %v444
        %v1326 = vpop.permute.xlu0 %1325
        %1329 = vset.pattern.permute.xlu0 0
        %1330 = vperm.xlu0 %1329, %v445
        %v1331 = vpop.permute.xlu0 %1330
        %1334 = vset.pattern.permute.xlu0 0
        %1335 = vperm.xlu0 %1334, %v446
        %v1336 = vpop.permute.xlu0 %1335
        %1339 = vset.pattern.permute.xlu0 0
        %1340 = vperm.xlu0 %1339, %v447
        %v1341 = vpop.permute.xlu0 %1340
        %1344 = vset.pattern.permute.xlu0 0
        %1345 = vperm.xlu0 %1344, %v448
        %v1346 = vpop.permute.xlu0 %1345
        %1349 = vset.pattern.permute.xlu0 0
        %1350 = vperm.xlu0 %1349, %v449
        %v1351 = vpop.permute.xlu0 %1350
        %1354 = vset.pattern.permute.xlu0 0
        %1355 = vperm.xlu0 %1354, %v450
        %v1356 = vpop.permute.xlu0 %1355
        %1359 = vset.pattern.permute.xlu0 0
        %1360 = vperm.xlu0 %1359, %v470
        %v1361 = vpop.permute.xlu0 %1360
        %1364 = vset.pattern.permute.xlu0 0
        %1365 = vperm.xlu0 %1364, %v471
        %v1366 = vpop.permute.xlu0 %1365
        %1369 = vset.pattern.permute.xlu0 0
        %1370 = vperm.xlu0 %1369, %v472
        %v1371 = vpop.permute.xlu0 %1370
        %1374 = vset.pattern.permute.xlu0 0
        %1375 = vperm.xlu0 %1374, %v473
        %v1376 = vpop.permute.xlu0 %1375
        %1379 = vset.pattern.permute.xlu0 0
        %1380 = vperm.xlu0 %1379, %v474
        %v1381 = vpop.permute.xlu0 %1380
        %1384 = vset.pattern.permute.xlu0 0
        %1385 = vperm.xlu0 %1384, %v475
        %v1386 = vpop.permute.xlu0 %1385
        %1389 = vset.pattern.permute.xlu0 0
        %1390 = vperm.xlu0 %1389, %v476
        %v1391 = vpop.permute.xlu0 %1390
        %1394 = vset.pattern.permute.xlu0 0
        %1395 = vperm.xlu0 %1394, %v477
        %v1396 = vpop.permute.xlu0 %1395
        %1399 = vset.pattern.permute.xlu0 0
        %1400 = vperm.xlu0 %1399, %v497
        %v1401 = vpop.permute.xlu0 %1400
        %1404 = vset.pattern.permute.xlu0 0
        %1405 = vperm.xlu0 %1404, %v498
        %v1406 = vpop.permute.xlu0 %1405
        %1409 = vset.pattern.permute.xlu0 0
        %1410 = vperm.xlu0 %1409, %v499
        %v1411 = vpop.permute.xlu0 %1410
        %1414 = vset.pattern.permute.xlu0 0
        %1415 = vperm.xlu0 %1414, %v500
        %v1416 = vpop.permute.xlu0 %1415
        %1419 = vset.pattern.permute.xlu0 0
        %1420 = vperm.xlu0 %1419, %v501
        %v1421 = vpop.permute.xlu0 %1420
        %1424 = vset.pattern.permute.xlu0 0
        %1425 = vperm.xlu0 %1424, %v502
        %v1426 = vpop.permute.xlu0 %1425
        %1429 = vset.pattern.permute.xlu0 0
        %1430 = vperm.xlu0 %1429, %v503
        %v1431 = vpop.permute.xlu0 %1430
        %1434 = vset.pattern.permute.xlu0 0
        %1435 = vperm.xlu0 %1434, %v504
        %v1436 = vpop.permute.xlu0 %1435
        %v1438 = vmul.f32 %v1246, %v1281
        %v1439 = vmul.f32 %v1247, %v1286
        %v1440 = vmul.f32 %v1248, %v1291
        %v1441 = vmul.f32 %v1249, %v1296
        %v1442 = vmul.f32 %v1250, %v1301
        %v1443 = vmul.f32 %v1251, %v1306
        %v1444 = vmul.f32 %v1252, %v1311
        %v1445 = vmul.f32 %v1253, %v1316
        %v1446 = vmul.f32 %v1254, %v1321
        %v1447 = vmul.f32 %v1255, %v1326
        %v1448 = vmul.f32 %v1256, %v1331
        %v1449 = vmul.f32 %v1257, %v1336
        %v1450 = vmul.f32 %v1258, %v1341
        %v1451 = vmul.f32 %v1259, %v1346
        %v1452 = vmul.f32 %v1260, %v1351
        %v1453 = vmul.f32 %v1261, %v1356
        %v1454 = vmul.f32 %v1262, %v1361
        %v1455 = vmul.f32 %v1263, %v1366
        %v1456 = vmul.f32 %v1264, %v1371
        %v1457 = vmul.f32 %v1265, %v1376
        %v1458 = vmul.f32 %v1266, %v1381
        %v1459 = vmul.f32 %v1267, %v1386
        %v1460 = vmul.f32 %v1268, %v1391
        %v1461 = vmul.f32 %v1269, %v1396
        %v1462 = vmul.f32 %v1270, %v1401
        %v1463 = vmul.f32 %v1271, %v1406
        %v1464 = vmul.f32 %v1272, %v1411
        %v1465 = vmul.f32 %v1273, %v1416
        %v1466 = vmul.f32 %v1274, %v1421
        %v1467 = vmul.f32 %v1275, %v1426
        %v1468 = vmul.f32 %v1276, %v1431
        %v1469 = vmul.f32 %v1277, %v1436
        %v1470 = vpack.c.bf16 %v1438, %v1438
        %v1471 = vpack.c.bf16 %v1439, %v1439
        %v1472 = vpack.c.bf16 %v1440, %v1440
        %v1473 = vpack.c.bf16 %v1441, %v1441
        %v1474 = vpack.c.bf16 %v1442, %v1442
        %v1475 = vpack.c.bf16 %v1443, %v1443
        %v1476 = vpack.c.bf16 %v1444, %v1444
        %v1477 = vpack.c.bf16 %v1445, %v1445
        %v1478 = vpack.c.bf16 %v1446, %v1446
        %v1479 = vpack.c.bf16 %v1447, %v1447
        %v1480 = vpack.c.bf16 %v1448, %v1448
        %v1481 = vpack.c.bf16 %v1449, %v1449
        %v1482 = vpack.c.bf16 %v1450, %v1450
        %v1483 = vpack.c.bf16 %v1451, %v1451
        %v1484 = vpack.c.bf16 %v1452, %v1452
        %v1485 = vpack.c.bf16 %v1453, %v1453
        %v1486 = vpack.c.bf16 %v1454, %v1454
        %v1487 = vpack.c.bf16 %v1455, %v1455
        %v1488 = vpack.c.bf16 %v1456, %v1456
        %v1489 = vpack.c.bf16 %v1457, %v1457
        %v1490 = vpack.c.bf16 %v1458, %v1458
        %v1491 = vpack.c.bf16 %v1459, %v1459
        %v1492 = vpack.c.bf16 %v1460, %v1460
        %v1493 = vpack.c.bf16 %v1461, %v1461
        %v1494 = vpack.c.bf16 %v1462, %v1462
        %v1495 = vpack.c.bf16 %v1463, %v1463
        %v1496 = vpack.c.bf16 %v1464, %v1464
        %v1497 = vpack.c.bf16 %v1465, %v1465
        %v1498 = vpack.c.bf16 %v1466, %v1466
        %v1499 = vpack.c.bf16 %v1467, %v1467
        %v1500 = vpack.c.bf16 %v1468, %v1468
        %v1501 = vpack.c.bf16 %v1469, %v1469
        %v1502 = vperm.slane %v536, 0
        %v1535 = vunpack.c.l.b16 %v1470
        %v1536 = vunpack.c.l.b16 %v1471
        %v1537 = vunpack.c.l.b16 %v1472
        %v1538 = vunpack.c.l.b16 %v1473
        %v1539 = vunpack.c.l.b16 %v1474
        %v1540 = vunpack.c.l.b16 %v1475
        %v1541 = vunpack.c.l.b16 %v1476
        %v1542 = vunpack.c.l.b16 %v1477
        %v1543 = vunpack.c.l.b16 %v1478
        %v1544 = vunpack.c.l.b16 %v1479
        %v1545 = vunpack.c.l.b16 %v1480
        %v1546 = vunpack.c.l.b16 %v1481
        %v1547 = vunpack.c.l.b16 %v1482
        %v1548 = vunpack.c.l.b16 %v1483
        %v1549 = vunpack.c.l.b16 %v1484
        %v1550 = vunpack.c.l.b16 %v1485
        %v1551 = vunpack.c.l.b16 %v1486
        %v1552 = vunpack.c.l.b16 %v1487
        %v1553 = vunpack.c.l.b16 %v1488
        %v1554 = vunpack.c.l.b16 %v1489
        %v1555 = vunpack.c.l.b16 %v1490
        %v1556 = vunpack.c.l.b16 %v1491
        %v1557 = vunpack.c.l.b16 %v1492
        %v1558 = vunpack.c.l.b16 %v1493
        %v1559 = vunpack.c.l.b16 %v1494
        %v1560 = vunpack.c.l.b16 %v1495
        %v1561 = vunpack.c.l.b16 %v1496
        %v1562 = vunpack.c.l.b16 %v1497
        %v1563 = vunpack.c.l.b16 %v1498
        %v1564 = vunpack.c.l.b16 %v1499
        %v1565 = vunpack.c.l.b16 %v1500
        %v1566 = vunpack.c.l.b16 %v1501
        %v1567 = vpack.c.b16 %v1536, %v1535
        %v1568 = vpack.c.b16 %v1538, %v1537
        %v1569 = vpack.c.b16 %v1540, %v1539
        %v1570 = vpack.c.b16 %v1542, %v1541
        %v1571 = vpack.c.b16 %v1544, %v1543
        %v1572 = vpack.c.b16 %v1546, %v1545
        %v1573 = vpack.c.b16 %v1548, %v1547
        %v1574 = vpack.c.b16 %v1550, %v1549
        %v1575 = vpack.c.b16 %v1552, %v1551
        %v1576 = vpack.c.b16 %v1554, %v1553
        %v1577 = vpack.c.b16 %v1556, %v1555
        %v1578 = vpack.c.b16 %v1558, %v1557
        %v1579 = vpack.c.b16 %v1560, %v1559
        %v1580 = vpack.c.b16 %v1562, %v1561
        %v1581 = vpack.c.b16 %v1564, %v1563
        %v1582 = vpack.c.b16 %v1566, %v1565
        %v1587 = vunpack.c.l.b16 %v531
        %v1588 = vunpack.c.l.b16 %v532
        %v1589 = vunpack.c.l.b16 %v533
        %v1590 = vunpack.c.l.b16 %v534
        %v1591 = vpack.c.b16 %v1588, %v1587
        %v1592 = vpack.c.b16 %v1590, %v1589
        %vm1595 = vcmask 261120
        %v1597 = vsel %vm1595, %v1567, 0
        %v1600 = vsel %vm1595, %v1568, 0
        %v1603 = vsel %vm1595, %v1569, 0
        %v1606 = vsel %vm1595, %v1570, 0
        %v1609 = vsel %vm1595, %v1571, 0
        %v1612 = vsel %vm1595, %v1572, 0
        %v1615 = vsel %vm1595, %v1573, 0
        %v1618 = vsel %vm1595, %v1574, 0
        %v1621 = vsel %vm1595, %v1575, 0
        %v1624 = vsel %vm1595, %v1576, 0
        %v1627 = vsel %vm1595, %v1577, 0
        %v1630 = vsel %vm1595, %v1578, 0
        %v1633 = vsel %vm1595, %v1579, 0
        %v1636 = vsel %vm1595, %v1580, 0
        %v1639 = vsel %vm1595, %v1581, 0
        %v1642 = vsel %vm1595, %v1582, 0
        %1644 = vmatpush.bf16.msra.mxu0 0
        %1645 = vmatpush.bf16.msra.mxu0 0
        %1646 = vmatpush.bf16.msra.mxu0 0
        %1647 = vmatpush.bf16.msra.mxu0 0
        %1648 = vmatpush.bf16.msra.mxu0 0
        %1649 = vmatpush.bf16.msra.mxu0 0
        %1650 = vmatpush.bf16.msra.mxu0 %v1592
        %1651 = vmatpush.bf16.msra.mxu0 %v1591
        %1652 = vmatmul.bf16.gmra.mxu0 %v1597
        %v1653 = vpop.f32.mrf.mxu0
        %v1654 = vadd.f32 %v1502, %v1653
        %v1655 = vpop.f32.mrf.mxu0
        %v1656 = vadd.f32 %v1502, %v1655
        %1657 = vmatmul.bf16.gmra.mxu0 %v1600
        %v1658 = vpop.f32.mrf.mxu0
        %v1659 = vadd.f32 %v1502, %v1658
        %v1660 = vpop.f32.mrf.mxu0
        %v1661 = vadd.f32 %v1502, %v1660
        %1662 = vmatmul.bf16.gmra.mxu0 %v1603
        %v1663 = vpop.f32.mrf.mxu0
        %v1664 = vadd.f32 %v1502, %v1663
        %v1665 = vpop.f32.mrf.mxu0
        %v1666 = vadd.f32 %v1502, %v1665
        %1667 = vmatmul.bf16.gmra.mxu0 %v1606
        %v1668 = vpop.f32.mrf.mxu0
        %v1669 = vadd.f32 %v1502, %v1668
        %v1670 = vpop.f32.mrf.mxu0
        %v1671 = vadd.f32 %v1502, %v1670
        %1672 = vmatmul.bf16.gmra.mxu0 %v1609
        %v1673 = vpop.f32.mrf.mxu0
        %v1674 = vadd.f32 %v1502, %v1673
        %v1675 = vpop.f32.mrf.mxu0
        %v1676 = vadd.f32 %v1502, %v1675
        %1677 = vmatmul.bf16.gmra.mxu0 %v1612
        %v1678 = vpop.f32.mrf.mxu0
        %v1679 = vadd.f32 %v1502, %v1678
        %v1680 = vpop.f32.mrf.mxu0
        %v1681 = vadd.f32 %v1502, %v1680
        %1682 = vmatmul.bf16.gmra.mxu0 %v1615
        %v1683 = vpop.f32.mrf.mxu0
        %v1684 = vadd.f32 %v1502, %v1683
        %v1685 = vpop.f32.mrf.mxu0
        %v1686 = vadd.f32 %v1502, %v1685
        %1687 = vmatmul.bf16.gmra.mxu0 %v1618
        %v1688 = vpop.f32.mrf.mxu0
        %v1689 = vadd.f32 %v1502, %v1688
        %v1690 = vpop.f32.mrf.mxu0
        %v1691 = vadd.f32 %v1502, %v1690
        %1692 = vmatmul.bf16.gmra.mxu0 %v1621
        %v1693 = vpop.f32.mrf.mxu0
        %v1694 = vadd.f32 %v1502, %v1693
        %v1695 = vpop.f32.mrf.mxu0
        %v1696 = vadd.f32 %v1502, %v1695
        %1697 = vmatmul.bf16.gmra.mxu0 %v1624
        %v1698 = vpop.f32.mrf.mxu0
        %v1699 = vadd.f32 %v1502, %v1698
        %v1700 = vpop.f32.mrf.mxu0
        %v1701 = vadd.f32 %v1502, %v1700
        %1702 = vmatmul.bf16.gmra.mxu0 %v1627
        %v1703 = vpop.f32.mrf.mxu0
        %v1704 = vadd.f32 %v1502, %v1703
        %v1705 = vpop.f32.mrf.mxu0
        %v1706 = vadd.f32 %v1502, %v1705
        %1707 = vmatmul.bf16.gmra.mxu0 %v1630
        %v1708 = vpop.f32.mrf.mxu0
        %v1709 = vadd.f32 %v1502, %v1708
        %v1710 = vpop.f32.mrf.mxu0
        %v1711 = vadd.f32 %v1502, %v1710
        %1712 = vmatmul.bf16.gmra.mxu0 %v1633
        %v1713 = vpop.f32.mrf.mxu0
        %v1714 = vadd.f32 %v1502, %v1713
        %v1715 = vpop.f32.mrf.mxu0
        %v1716 = vadd.f32 %v1502, %v1715
        %1717 = vmatmul.bf16.gmra.mxu0 %v1636
        %v1718 = vpop.f32.mrf.mxu0
        %v1719 = vadd.f32 %v1502, %v1718
        %v1720 = vpop.f32.mrf.mxu0
        %v1721 = vadd.f32 %v1502, %v1720
        %1722 = vmatmul.bf16.gmra.mxu0 %v1639
        %v1723 = vpop.f32.mrf.mxu0
        %v1724 = vadd.f32 %v1502, %v1723
        %v1725 = vpop.f32.mrf.mxu0
        %v1726 = vadd.f32 %v1502, %v1725
        %1727 = vmatmul.bf16.gmra.mxu0 %v1642
        %v1728 = vpop.f32.mrf.mxu0
        %v1729 = vadd.f32 %v1502, %v1728
        %v1730 = vpop.f32.mrf.mxu0
        %v1731 = vadd.f32 %v1502, %v1730
        %1732 = vdwg.mxu0
        %v1733 = vsel %vm1595, %v1654, -inf
        %1734 = vmax.xlane.f32.xlu0 %v1733
        %v1735 = vpop.xlane.xlu0 %1734
        %v1736 = vsel %vm1595, %v1656, -inf
        %1737 = vmax.xlane.f32.xlu0 %v1736
        %v1738 = vpop.xlane.xlu0 %1737
        %v1739 = vsel %vm1595, %v1659, -inf
        %1740 = vmax.xlane.f32.xlu0 %v1739
        %v1741 = vpop.xlane.xlu0 %1740
        %v1742 = vsel %vm1595, %v1661, -inf
        %1743 = vmax.xlane.f32.xlu0 %v1742
        %v1744 = vpop.xlane.xlu0 %1743
        %v1745 = vsel %vm1595, %v1664, -inf
        %1746 = vmax.xlane.f32.xlu0 %v1745
        %v1747 = vpop.xlane.xlu0 %1746
        %v1748 = vsel %vm1595, %v1666, -inf
        %1749 = vmax.xlane.f32.xlu0 %v1748
        %v1750 = vpop.xlane.xlu0 %1749
        %v1751 = vsel %vm1595, %v1669, -inf
        %1752 = vmax.xlane.f32.xlu0 %v1751
        %v1753 = vpop.xlane.xlu0 %1752
        %v1754 = vsel %vm1595, %v1671, -inf
        %1755 = vmax.xlane.f32.xlu0 %v1754
        %v1756 = vpop.xlane.xlu0 %1755
        %v1757 = vsel %vm1595, %v1674, -inf
        %1758 = vmax.xlane.f32.xlu0 %v1757
        %v1759 = vpop.xlane.xlu0 %1758
        %v1760 = vsel %vm1595, %v1676, -inf
        %1761 = vmax.xlane.f32.xlu0 %v1760
        %v1762 = vpop.xlane.xlu0 %1761
        %v1763 = vsel %vm1595, %v1679, -inf
        %1764 = vmax.xlane.f32.xlu0 %v1763
        %v1765 = vpop.xlane.xlu0 %1764
        %v1766 = vsel %vm1595, %v1681, -inf
        %1767 = vmax.xlane.f32.xlu0 %v1766
        %v1768 = vpop.xlane.xlu0 %1767
        %v1769 = vsel %vm1595, %v1684, -inf
        %1770 = vmax.xlane.f32.xlu0 %v1769
        %v1771 = vpop.xlane.xlu0 %1770
        %v1772 = vsel %vm1595, %v1686, -inf
        %1773 = vmax.xlane.f32.xlu0 %v1772
        %v1774 = vpop.xlane.xlu0 %1773
        %v1775 = vsel %vm1595, %v1689, -inf
        %1776 = vmax.xlane.f32.xlu0 %v1775
        %v1777 = vpop.xlane.xlu0 %1776
        %v1778 = vsel %vm1595, %v1691, -inf
        %1779 = vmax.xlane.f32.xlu0 %v1778
        %v1780 = vpop.xlane.xlu0 %1779
        %v1781 = vsel %vm1595, %v1694, -inf
        %1782 = vmax.xlane.f32.xlu0 %v1781
        %v1783 = vpop.xlane.xlu0 %1782
        %v1784 = vsel %vm1595, %v1696, -inf
        %1785 = vmax.xlane.f32.xlu0 %v1784
        %v1786 = vpop.xlane.xlu0 %1785
        %v1787 = vsel %vm1595, %v1699, -inf
        %1788 = vmax.xlane.f32.xlu0 %v1787
        %v1789 = vpop.xlane.xlu0 %1788
        %v1790 = vsel %vm1595, %v1701, -inf
        %1791 = vmax.xlane.f32.xlu0 %v1790
        %v1792 = vpop.xlane.xlu0 %1791
        %v1793 = vsel %vm1595, %v1704, -inf
        %1794 = vmax.xlane.f32.xlu0 %v1793
        %v1795 = vpop.xlane.xlu0 %1794
        %v1796 = vsel %vm1595, %v1706, -inf
        %1797 = vmax.xlane.f32.xlu0 %v1796
        %v1798 = vpop.xlane.xlu0 %1797
        %v1799 = vsel %vm1595, %v1709, -inf
        %1800 = vmax.xlane.f32.xlu0 %v1799
        %v1801 = vpop.xlane.xlu0 %1800
        %v1802 = vsel %vm1595, %v1711, -inf
        %1803 = vmax.xlane.f32.xlu0 %v1802
        %v1804 = vpop.xlane.xlu0 %1803
        %v1805 = vsel %vm1595, %v1714, -inf
        %1806 = vmax.xlane.f32.xlu0 %v1805
        %v1807 = vpop.xlane.xlu0 %1806
        %v1808 = vsel %vm1595, %v1716, -inf
        %1809 = vmax.xlane.f32.xlu0 %v1808
        %v1810 = vpop.xlane.xlu0 %1809
        %v1811 = vsel %vm1595, %v1719, -inf
        %1812 = vmax.xlane.f32.xlu0 %v1811
        %v1813 = vpop.xlane.xlu0 %1812
        %v1814 = vsel %vm1595, %v1721, -inf
        %1815 = vmax.xlane.f32.xlu0 %v1814
        %v1816 = vpop.xlane.xlu0 %1815
        %v1817 = vsel %vm1595, %v1724, -inf
        %1818 = vmax.xlane.f32.xlu0 %v1817
        %v1819 = vpop.xlane.xlu0 %1818
        %v1820 = vsel %vm1595, %v1726, -inf
        %1821 = vmax.xlane.f32.xlu0 %v1820
        %v1822 = vpop.xlane.xlu0 %1821
        %v1823 = vsel %vm1595, %v1729, -inf
        %1824 = vmax.xlane.f32.xlu0 %v1823
        %v1825 = vpop.xlane.xlu0 %1824
        %v1826 = vsel %vm1595, %v1731, -inf
        %1827 = vmax.xlane.f32.xlu0 %v1826
        %v1828 = vpop.xlane.xlu0 %1827
        %v1829 = vsub.f32 %v1654, %v1735
        %v1830 = vsub.f32 %v1656, %v1738
        %v1831 = vsub.f32 %v1659, %v1741
        %v1832 = vsub.f32 %v1661, %v1744
        %v1833 = vsub.f32 %v1664, %v1747
        %v1834 = vsub.f32 %v1666, %v1750
        %v1835 = vsub.f32 %v1669, %v1753
        %v1836 = vsub.f32 %v1671, %v1756
        %v1837 = vsub.f32 %v1674, %v1759
        %v1838 = vsub.f32 %v1676, %v1762
        %v1839 = vsub.f32 %v1679, %v1765
        %v1840 = vsub.f32 %v1681, %v1768
        %v1841 = vsub.f32 %v1684, %v1771
        %v1842 = vsub.f32 %v1686, %v1774
        %v1843 = vsub.f32 %v1689, %v1777
        %v1844 = vsub.f32 %v1691, %v1780
        %v1845 = vsub.f32 %v1694, %v1783
        %v1846 = vsub.f32 %v1696, %v1786
        %v1847 = vsub.f32 %v1699, %v1789
        %v1848 = vsub.f32 %v1701, %v1792
        %v1849 = vsub.f32 %v1704, %v1795
        %v1850 = vsub.f32 %v1706, %v1798
        %v1851 = vsub.f32 %v1709, %v1801
        %v1852 = vsub.f32 %v1711, %v1804
        %v1853 = vsub.f32 %v1714, %v1807
        %v1854 = vsub.f32 %v1716, %v1810
        %v1855 = vsub.f32 %v1719, %v1813
        %v1856 = vsub.f32 %v1721, %v1816
        %v1857 = vsub.f32 %v1724, %v1819
        %v1858 = vsub.f32 %v1726, %v1822
        %v1859 = vsub.f32 %v1729, %v1825
        %v1860 = vsub.f32 %v1731, %v1828
        %v1861 = vmul.f32 %v1829, 1.442695
        %v1862 = vpow.pop %v1861
        %v1863 = vmul.f32 %v1830, 1.442695
        %v1864 = vpow.pop %v1863
        %v1865 = vmul.f32 %v1831, 1.442695
        %v1866 = vpow.pop %v1865
        %v1867 = vmul.f32 %v1832, 1.442695
        %v1868 = vpow.pop %v1867
        %v1869 = vmul.f32 %v1833, 1.442695
        %v1870 = vpow.pop %v1869
        %v1871 = vmul.f32 %v1834, 1.442695
        %v1872 = vpow.pop %v1871
        %v1873 = vmul.f32 %v1835, 1.442695
        %v1874 = vpow.pop %v1873
        %v1875 = vmul.f32 %v1836, 1.442695
        %v1876 = vpow.pop %v1875
        %v1877 = vmul.f32 %v1837, 1.442695
        %v1878 = vpow.pop %v1877
        %v1879 = vmul.f32 %v1838, 1.442695
        %v1880 = vpow.pop %v1879
        %v1881 = vmul.f32 %v1839, 1.442695
        %v1882 = vpow.pop %v1881
        %v1883 = vmul.f32 %v1840, 1.442695
        %v1884 = vpow.pop %v1883
        %v1885 = vmul.f32 %v1841, 1.442695
        %v1886 = vpow.pop %v1885
        %v1887 = vmul.f32 %v1842, 1.442695
        %v1888 = vpow.pop %v1887
        %v1889 = vmul.f32 %v1843, 1.442695
        %v1890 = vpow.pop %v1889
        %v1891 = vmul.f32 %v1844, 1.442695
        %v1892 = vpow.pop %v1891
        %v1893 = vmul.f32 %v1845, 1.442695
        %v1894 = vpow.pop %v1893
        %v1895 = vmul.f32 %v1846, 1.442695
        %v1896 = vpow.pop %v1895
        %v1897 = vmul.f32 %v1847, 1.442695
        %v1898 = vpow.pop %v1897
        %v1899 = vmul.f32 %v1848, 1.442695
        %v1900 = vpow.pop %v1899
        %v1901 = vmul.f32 %v1849, 1.442695
        %v1902 = vpow.pop %v1901
        %v1903 = vmul.f32 %v1850, 1.442695
        %v1904 = vpow.pop %v1903
        %v1905 = vmul.f32 %v1851, 1.442695
        %v1906 = vpow.pop %v1905
        %v1907 = vmul.f32 %v1852, 1.442695
        %v1908 = vpow.pop %v1907
        %v1909 = vmul.f32 %v1853, 1.442695
        %v1910 = vpow.pop %v1909
        %v1911 = vmul.f32 %v1854, 1.442695
        %v1912 = vpow.pop %v1911
        %v1913 = vmul.f32 %v1855, 1.442695
        %v1914 = vpow.pop %v1913
        %v1915 = vmul.f32 %v1856, 1.442695
        %v1916 = vpow.pop %v1915
        %v1917 = vmul.f32 %v1857, 1.442695
        %v1918 = vpow.pop %v1917
        %v1919 = vmul.f32 %v1858, 1.442695
        %v1920 = vpow.pop %v1919
        %v1921 = vmul.f32 %v1859, 1.442695
        %v1922 = vpow.pop %v1921
        %v1923 = vmul.f32 %v1860, 1.442695
        %v1924 = vpow.pop %v1923
        %v1925 = vsel %vm1595, %v1862, 0.0
        %1926 = vadd.xlane.f32.xlu0 %v1925
        %v1927 = vpop.xlane.xlu0 %1926
        %v1928 = vsel %vm1595, %v1864, 0.0
        %1929 = vadd.xlane.f32.xlu0 %v1928
        %v1930 = vpop.xlane.xlu0 %1929
        %v1931 = vsel %vm1595, %v1866, 0.0
        %1932 = vadd.xlane.f32.xlu0 %v1931
        %v1933 = vpop.xlane.xlu0 %1932
        %v1934 = vsel %vm1595, %v1868, 0.0
        %1935 = vadd.xlane.f32.xlu0 %v1934
        %v1936 = vpop.xlane.xlu0 %1935
        %v1937 = vsel %vm1595, %v1870, 0.0
        %1938 = vadd.xlane.f32.xlu0 %v1937
        %v1939 = vpop.xlane.xlu0 %1938
        %v1940 = vsel %vm1595, %v1872, 0.0
        %1941 = vadd.xlane.f32.xlu0 %v1940
        %v1942 = vpop.xlane.xlu0 %1941
        %v1943 = vsel %vm1595, %v1874, 0.0
        %1944 = vadd.xlane.f32.xlu0 %v1943
        %v1945 = vpop.xlane.xlu0 %1944
        %v1946 = vsel %vm1595, %v1876, 0.0
        %1947 = vadd.xlane.f32.xlu0 %v1946
        %v1948 = vpop.xlane.xlu0 %1947
        %v1949 = vsel %vm1595, %v1878, 0.0
        %1950 = vadd.xlane.f32.xlu0 %v1949
        %v1951 = vpop.xlane.xlu0 %1950
        %v1952 = vsel %vm1595, %v1880, 0.0
        %1953 = vadd.xlane.f32.xlu0 %v1952
        %v1954 = vpop.xlane.xlu0 %1953
        %v1955 = vsel %vm1595, %v1882, 0.0
        %1956 = vadd.xlane.f32.xlu0 %v1955
        %v1957 = vpop.xlane.xlu0 %1956
        %v1958 = vsel %vm1595, %v1884, 0.0
        %1959 = vadd.xlane.f32.xlu0 %v1958
        %v1960 = vpop.xlane.xlu0 %1959
        %v1961 = vsel %vm1595, %v1886, 0.0
        %1962 = vadd.xlane.f32.xlu0 %v1961
        %v1963 = vpop.xlane.xlu0 %1962
        %v1964 = vsel %vm1595, %v1888, 0.0
        %1965 = vadd.xlane.f32.xlu0 %v1964
        %v1966 = vpop.xlane.xlu0 %1965
        %v1967 = vsel %vm1595, %v1890, 0.0
        %1968 = vadd.xlane.f32.xlu0 %v1967
        %v1969 = vpop.xlane.xlu0 %1968
        %v1970 = vsel %vm1595, %v1892, 0.0
        %1971 = vadd.xlane.f32.xlu0 %v1970
        %v1972 = vpop.xlane.xlu0 %1971
        %v1973 = vsel %vm1595, %v1894, 0.0
        %1974 = vadd.xlane.f32.xlu0 %v1973
        %v1975 = vpop.xlane.xlu0 %1974
        %v1976 = vsel %vm1595, %v1896, 0.0
        %1977 = vadd.xlane.f32.xlu0 %v1976
        %v1978 = vpop.xlane.xlu0 %1977
        %v1979 = vsel %vm1595, %v1898, 0.0
        %1980 = vadd.xlane.f32.xlu0 %v1979
        %v1981 = vpop.xlane.xlu0 %1980
        %v1982 = vsel %vm1595, %v1900, 0.0
        %1983 = vadd.xlane.f32.xlu0 %v1982
        %v1984 = vpop.xlane.xlu0 %1983
        %v1985 = vsel %vm1595, %v1902, 0.0
        %1986 = vadd.xlane.f32.xlu0 %v1985
        %v1987 = vpop.xlane.xlu0 %1986
        %v1988 = vsel %vm1595, %v1904, 0.0
        %1989 = vadd.xlane.f32.xlu0 %v1988
        %v1990 = vpop.xlane.xlu0 %1989
        %v1991 = vsel %vm1595, %v1906, 0.0
        %1992 = vadd.xlane.f32.xlu0 %v1991
        %v1993 = vpop.xlane.xlu0 %1992
        %v1994 = vsel %vm1595, %v1908, 0.0
        %1995 = vadd.xlane.f32.xlu0 %v1994
        %v1996 = vpop.xlane.xlu0 %1995
        %v1997 = vsel %vm1595, %v1910, 0.0
        %1998 = vadd.xlane.f32.xlu0 %v1997
        %v1999 = vpop.xlane.xlu0 %1998
        %v2000 = vsel %vm1595, %v1912, 0.0
        %2001 = vadd.xlane.f32.xlu0 %v2000
        %v2002 = vpop.xlane.xlu0 %2001
        %v2003 = vsel %vm1595, %v1914, 0.0
        %2004 = vadd.xlane.f32.xlu0 %v2003
        %v2005 = vpop.xlane.xlu0 %2004
        %v2006 = vsel %vm1595, %v1916, 0.0
        %2007 = vadd.xlane.f32.xlu0 %v2006
        %v2008 = vpop.xlane.xlu0 %2007
        %v2009 = vsel %vm1595, %v1918, 0.0
        %2010 = vadd.xlane.f32.xlu0 %v2009
        %v2011 = vpop.xlane.xlu0 %2010
        %v2012 = vsel %vm1595, %v1920, 0.0
        %2013 = vadd.xlane.f32.xlu0 %v2012
        %v2014 = vpop.xlane.xlu0 %2013
        %v2015 = vsel %vm1595, %v1922, 0.0
        %2016 = vadd.xlane.f32.xlu0 %v2015
        %v2017 = vpop.xlane.xlu0 %2016
        %v2018 = vsel %vm1595, %v1924, 0.0
        %2019 = vadd.xlane.f32.xlu0 %v2018
        %v2020 = vpop.xlane.xlu0 %2019
        %v2021 = vrcp.pop %v1927
        %v2022 = vrcp.pop %v1930
        %v2023 = vrcp.pop %v1933
        %v2024 = vrcp.pop %v1936
        %v2025 = vrcp.pop %v1939
        %v2026 = vrcp.pop %v1942
        %v2027 = vrcp.pop %v1945
        %v2028 = vrcp.pop %v1948
        %v2029 = vrcp.pop %v1951
        %v2030 = vrcp.pop %v1954
        %v2031 = vrcp.pop %v1957
        %v2032 = vrcp.pop %v1960
        %v2033 = vrcp.pop %v1963
        %v2034 = vrcp.pop %v1966
        %v2035 = vrcp.pop %v1969
        %v2036 = vrcp.pop %v1972
        %v2037 = vrcp.pop %v1975
        %v2038 = vrcp.pop %v1978
        %v2039 = vrcp.pop %v1981
        %v2040 = vrcp.pop %v1984
        %v2041 = vrcp.pop %v1987
        %v2042 = vrcp.pop %v1990
        %v2043 = vrcp.pop %v1993
        %v2044 = vrcp.pop %v1996
        %v2045 = vrcp.pop %v1999
        %v2046 = vrcp.pop %v2002
        %v2047 = vrcp.pop %v2005
        %v2048 = vrcp.pop %v2008
        %v2049 = vrcp.pop %v2011
        %v2050 = vrcp.pop %v2014
        %v2051 = vrcp.pop %v2017
        %v2052 = vrcp.pop %v2020
        %v2053 = vmul.f32 %v1862, %v2021
        %v2054 = vmul.f32 %v1864, %v2022
        %v2055 = vmul.f32 %v1866, %v2023
        %v2056 = vmul.f32 %v1868, %v2024
        %v2057 = vmul.f32 %v1870, %v2025
        %v2058 = vmul.f32 %v1872, %v2026
        %v2059 = vmul.f32 %v1874, %v2027
        %v2060 = vmul.f32 %v1876, %v2028
        %v2061 = vmul.f32 %v1878, %v2029
        %v2062 = vmul.f32 %v1880, %v2030
        %v2063 = vmul.f32 %v1882, %v2031
        %v2064 = vmul.f32 %v1884, %v2032
        %v2065 = vmul.f32 %v1886, %v2033
        %v2066 = vmul.f32 %v1888, %v2034
        %v2067 = vmul.f32 %v1890, %v2035
        %v2068 = vmul.f32 %v1892, %v2036
        %v2069 = vmul.f32 %v1894, %v2037
        %v2070 = vmul.f32 %v1896, %v2038
        %v2071 = vmul.f32 %v1898, %v2039
        %v2072 = vmul.f32 %v1900, %v2040
        %v2073 = vmul.f32 %v1902, %v2041
        %v2074 = vmul.f32 %v1904, %v2042
        %v2075 = vmul.f32 %v1906, %v2043
        %v2076 = vmul.f32 %v1908, %v2044
        %v2077 = vmul.f32 %v1910, %v2045
        %v2078 = vmul.f32 %v1912, %v2046
        %v2079 = vmul.f32 %v1914, %v2047
        %v2080 = vmul.f32 %v1916, %v2048
        %v2081 = vmul.f32 %v1918, %v2049
        %v2082 = vmul.f32 %v1920, %v2050
        %v2083 = vmul.f32 %v1922, %v2051
        %v2084 = vmul.f32 %v1924, %v2052
        %v2085 = vmul.f32 %v2053, %v1281
        %v2086 = vmul.f32 %v2054, %v1286
        %v2087 = vmul.f32 %v2055, %v1291
        %v2088 = vmul.f32 %v2056, %v1296
        %v2089 = vmul.f32 %v2057, %v1301
        %v2090 = vmul.f32 %v2058, %v1306
        %v2091 = vmul.f32 %v2059, %v1311
        %v2092 = vmul.f32 %v2060, %v1316
        %v2093 = vmul.f32 %v2061, %v1321
        %v2094 = vmul.f32 %v2062, %v1326
        %v2095 = vmul.f32 %v2063, %v1331
        %v2096 = vmul.f32 %v2064, %v1336
        %v2097 = vmul.f32 %v2065, %v1341
        %v2098 = vmul.f32 %v2066, %v1346
        %v2099 = vmul.f32 %v2067, %v1351
        %v2100 = vmul.f32 %v2068, %v1356
        %v2101 = vmul.f32 %v2069, %v1361
        %v2102 = vmul.f32 %v2070, %v1366
        %v2103 = vmul.f32 %v2071, %v1371
        %v2104 = vmul.f32 %v2072, %v1376
        %v2105 = vmul.f32 %v2073, %v1381
        %v2106 = vmul.f32 %v2074, %v1386
        %v2107 = vmul.f32 %v2075, %v1391
        %v2108 = vmul.f32 %v2076, %v1396
        %v2109 = vmul.f32 %v2077, %v1401
        %v2110 = vmul.f32 %v2078, %v1406
        %v2111 = vmul.f32 %v2079, %v1411
        %v2112 = vmul.f32 %v2080, %v1416
        %v2113 = vmul.f32 %v2081, %v1421
        %v2114 = vmul.f32 %v2082, %v1426
        %v2115 = vmul.f32 %v2083, %v1431
        %v2116 = vmul.f32 %v2084, %v1436
        %v2117 = vpack.c.bf16 %v2085, %v2085
        %v2118 = vpack.c.bf16 %v2086, %v2086
        %v2119 = vpack.c.bf16 %v2087, %v2087
        %v2120 = vpack.c.bf16 %v2088, %v2088
        %v2121 = vpack.c.bf16 %v2089, %v2089
        %v2122 = vpack.c.bf16 %v2090, %v2090
        %v2123 = vpack.c.bf16 %v2091, %v2091
        %v2124 = vpack.c.bf16 %v2092, %v2092
        %v2125 = vpack.c.bf16 %v2093, %v2093
        %v2126 = vpack.c.bf16 %v2094, %v2094
        %v2127 = vpack.c.bf16 %v2095, %v2095
        %v2128 = vpack.c.bf16 %v2096, %v2096
        %v2129 = vpack.c.bf16 %v2097, %v2097
        %v2130 = vpack.c.bf16 %v2098, %v2098
        %v2131 = vpack.c.bf16 %v2099, %v2099
        %v2132 = vpack.c.bf16 %v2100, %v2100
        %v2133 = vpack.c.bf16 %v2101, %v2101
        %v2134 = vpack.c.bf16 %v2102, %v2102
        %v2135 = vpack.c.bf16 %v2103, %v2103
        %v2136 = vpack.c.bf16 %v2104, %v2104
        %v2137 = vpack.c.bf16 %v2105, %v2105
        %v2138 = vpack.c.bf16 %v2106, %v2106
        %v2139 = vpack.c.bf16 %v2107, %v2107
        %v2140 = vpack.c.bf16 %v2108, %v2108
        %v2141 = vpack.c.bf16 %v2109, %v2109
        %v2142 = vpack.c.bf16 %v2110, %v2110
        %v2143 = vpack.c.bf16 %v2111, %v2111
        %v2144 = vpack.c.bf16 %v2112, %v2112
        %v2145 = vpack.c.bf16 %v2113, %v2113
        %v2146 = vpack.c.bf16 %v2114, %v2114
        %v2147 = vpack.c.bf16 %v2115, %v2115
        %v2148 = vpack.c.bf16 %v2116, %v2116
        %v2157 = vunpack.c.l.b16 %v2117
        %v2158 = vunpack.c.l.b16 %v2118
        %v2159 = vunpack.c.l.b16 %v2119
        %v2160 = vunpack.c.l.b16 %v2120
        %v2161 = vunpack.c.l.b16 %v2121
        %v2162 = vunpack.c.l.b16 %v2122
        %v2163 = vunpack.c.l.b16 %v2123
        %v2164 = vunpack.c.l.b16 %v2124
        %v2165 = vpack.c.b16 %v2158, %v2157
        %v2166 = vpack.c.b16 %v2160, %v2159
        %v2167 = vpack.c.b16 %v2162, %v2161
        %v2168 = vpack.c.b16 %v2164, %v2163
        %2173 = vxpose.xlu0.c.b16.start [1/8] %v2165, 128
        %2174 = vxpose.xlu0.c.b16.cont [2/8] %v2166, 128
        %2175 = vxpose.xlu0.c.b16.cont [3/8] %v2167, 128
        %2176 = vxpose.xlu0.c.b16.cont [4/8] %v2168, 128
        %2177 = vxpose.xlu0.c.b16.cont [5/8] 0, 128
        %2178 = vxpose.xlu0.c.b16.cont [6/8] 0, 128
        %2179 = vxpose.xlu0.c.b16.cont [7/8] 0, 128
        %2180 = vxpose.xlu0.c.b16.end [8/8] 0, 128
        %v2181 = vpop.trf.xlu0
        %v2182 = vpop.trf.xlu0
        %v2183 = vpop.trf.xlu0
        %v2184 = vpop.trf.xlu0
        %v2185 = vpop.trf.xlu0
        %v2186 = vpop.trf.xlu0
        %v2187 = vpop.trf.xlu0
        %v2188 = vpop.trf.xlu0
        %v2194 = vsel %vm889, %v2181, 0
        %v2197 = vsel %vm889, %v2182, 0
        %2199 = vmatpush.bf16.msra.mxu0 0
        %2200 = vmatpush.bf16.msra.mxu0 0
        %2201 = vmatpush.bf16.msra.mxu0 0
        %2202 = vmatpush.bf16.msra.mxu0 0
        %2203 = vmatpush.bf16.msra.mxu0 %v1570
        %2204 = vmatpush.bf16.msra.mxu0 %v1569
        %2205 = vmatpush.bf16.msra.mxu0 %v1568
        %2206 = vmatpush.bf16.msra.mxu0 %v1567
        %2207 = vmatmul.bf16.gmra.mxu0 %v2194
        %v2208 = vpop.f32.mrf.mxu0
        %v2209 = vadd.f32 0.0, %v2208
        %v2210 = vpop.f32.mrf.mxu0
        %v2211 = vadd.f32 0.0, %v2210
        %2212 = vmatmul.bf16.gmra.mxu0 %v2197
        %v2213 = vpop.f32.mrf.mxu0
        %v2214 = vadd.f32 0.0, %v2213
        %v2215 = vpop.f32.mrf.mxu0
        %v2216 = vadd.f32 0.0, %v2215
        %2217 = vdwg.mxu0
        %v2218 = vld [vmem:[%s326] sm:$0xf]
        %v2219 = vld [vmem:[%s326 + $0x4] sm:$0xf]
        %v2220 = vld [vmem:[%s326 + $0x8] sm:$0xf]
        %v2221 = vld [vmem:[%s326 + $0xc] sm:$0xf]
        %v2222 = vld [vmem:[%s326 + $0x10] sm:$0xf]
        %v2223 = vld [vmem:[%s326 + $0x14] sm:$0xf]
        %v2224 = vld [vmem:[%s326 + $0x18] sm:$0xf]
        %v2225 = vld [vmem:[%s326 + $0x1c] sm:$0xf]
        %v2234 = vunpack.c.l.b16 %v2218
        %v2235 = vunpack.c.l.b16 %v2219
        %v2236 = vunpack.c.l.b16 %v2220
        %v2237 = vunpack.c.l.b16 %v2221
        %v2238 = vunpack.c.l.b16 %v2222
        %v2239 = vunpack.c.l.b16 %v2223
        %v2240 = vunpack.c.l.b16 %v2224
        %v2241 = vunpack.c.l.b16 %v2225
        %v2242 = vpack.c.b16 %v2235, %v2234
        %v2243 = vpack.c.b16 %v2237, %v2236
        %v2244 = vpack.c.b16 %v2239, %v2238
        %v2245 = vpack.c.b16 %v2241, %v2240
        %2250 = vmatpush.bf16.msra.mxu0 0
        %2251 = vmatpush.bf16.msra.mxu0 0
        %2252 = vmatpush.bf16.msra.mxu0 0
        %2253 = vmatpush.bf16.msra.mxu0 0
        %2254 = vmatpush.bf16.msra.mxu0 %v2245
        %2255 = vmatpush.bf16.msra.mxu0 %v2244
        %2256 = vmatpush.bf16.msra.mxu0 %v2243
        %2257 = vmatpush.bf16.msra.mxu0 %v2242
        %2258 = vmatmul.bf16.gmra.mxu0 %v2194
        %v2259 = vpop.f32.mrf.mxu0
        %v2260 = vadd.f32 0.0, %v2259
        %v2261 = vpop.f32.mrf.mxu0
        %v2262 = vadd.f32 0.0, %v2261
        %2263 = vmatmul.bf16.gmra.mxu0 %v2197
        %v2264 = vpop.f32.mrf.mxu0
        %v2265 = vadd.f32 0.0, %v2264
        %v2266 = vpop.f32.mrf.mxu0
        %v2267 = vadd.f32 0.0, %v2266
        %2268 = vdwg.mxu0
        %v2269 = vpack.c.bf16 %v2262, %v2260
        %v2270 = vpack.c.bf16 %v2267, %v2265
        %v2272 = vsel %vm889, %v2269, 0
        %v2275 = vsel %vm889, %v2270, 0
        %2277 = vmatpush.bf16.msra.mxu0 0
        %2278 = vmatpush.bf16.msra.mxu0 0
        %2279 = vmatpush.bf16.msra.mxu0 0
        %2280 = vmatpush.bf16.msra.mxu0 0
        %2281 = vmatpush.bf16.msra.mxu0 %v2168
        %2282 = vmatpush.bf16.msra.mxu0 %v2167
        %2283 = vmatpush.bf16.msra.mxu0 %v2166
        %2284 = vmatpush.bf16.msra.mxu0 %v2165
        %2285 = vmatmul.bf16.gmra.mxu0 %v2272
        %v2286 = vpop.f32.mrf.mxu0
        %v2287 = vadd.f32 0.0, %v2286
        %v2288 = vpop.f32.mrf.mxu0
        %v2289 = vadd.f32 0.0, %v2288
        %2290 = vmatmul.bf16.gmra.mxu0 %v2275
        %v2291 = vpop.f32.mrf.mxu0
        %v2292 = vadd.f32 0.0, %v2291
        %v2293 = vpop.f32.mrf.mxu0
        %v2294 = vadd.f32 0.0, %v2293
        %2295 = vdwg.mxu0
        %v2296 = vlaneseq
        %v2297 = vand.u32 %v2296, 127
        %vm2298 = vcmp.eq.s32.totalorder %v390, %v2297
        %vm2299 = vcmp.eq.s32.totalorder %v391, %v2297
        %vm2300 = vcmp.eq.s32.totalorder %v392, %v2297
        %vm2301 = vcmp.eq.s32.totalorder %v393, %v2297
        %v2302 = vsel %vm2298, 0.0, %v2287
        %v2303 = vsel %vm2299, 0.0, %v2289
        %v2304 = vsel %vm2300, 0.0, %v2292
        %v2305 = vsel %vm2301, 0.0, %v2294
        %v2306 = vsel %vm1595, %v2302, 0.0
        %2307 = vadd.xlane.f32.xlu0 %v2306
        %v2308 = vpop.xlane.xlu0 %2307
        %v2309 = vsel %vm1595, %v2303, 0.0
        %2310 = vadd.xlane.f32.xlu0 %v2309
        %v2311 = vpop.xlane.xlu0 %2310
        %v2312 = vsel %vm1595, %v2304, 0.0
        %2313 = vadd.xlane.f32.xlu0 %v2312
        %v2314 = vpop.xlane.xlu0 %2313
        %v2315 = vsel %vm1595, %v2305, 0.0
        %2316 = vadd.xlane.f32.xlu0 %v2315
        %v2317 = vpop.xlane.xlu0 %2316
        %v2318 = vrsqrt.pop %v2308
        %v2319 = vmul.f32 %v2318, %v2308
        %v2320 = vmul.f32 %v2319, %v2318
        %v2321 = vmul.f32 0.5, %v2320
        %v2322 = vsub.f32 1.5, %v2321
        %v2323 = vmul.f32 %v2318, %v2322
        %v2324 = vmul.f32 %v2308, %v2323
        %vm2325 = vcmp.eq.f32.partialorder %v2308, inf
        %v2326 = vsel %vm2325, %v2308, %v2324
        %vm2327 = vcmp.eq.f32.partialorder %v2308, 0.0
        %v2328 = vand.u32 %v2308, 2147483648
        %v2329 = vsel %vm2327, %v2328, %v2326
        %v2330 = vrsqrt.pop %v2311
        %v2331 = vmul.f32 %v2330, %v2311
        %v2332 = vmul.f32 %v2331, %v2330
        %v2333 = vmul.f32 0.5, %v2332
        %v2334 = vsub.f32 1.5, %v2333
        %v2335 = vmul.f32 %v2330, %v2334
        %v2336 = vmul.f32 %v2311, %v2335
        %vm2337 = vcmp.eq.f32.partialorder %v2311, inf
        %v2338 = vsel %vm2337, %v2311, %v2336
        %vm2339 = vcmp.eq.f32.partialorder %v2311, 0.0
        %v2340 = vand.u32 %v2311, 2147483648
        %v2341 = vsel %vm2339, %v2340, %v2338
        %v2342 = vrsqrt.pop %v2314
        %v2343 = vmul.f32 %v2342, %v2314
        %v2344 = vmul.f32 %v2343, %v2342
        %v2345 = vmul.f32 0.5, %v2344
        %v2346 = vsub.f32 1.5, %v2345
        %v2347 = vmul.f32 %v2342, %v2346
        %v2348 = vmul.f32 %v2314, %v2347
        %vm2349 = vcmp.eq.f32.partialorder %v2314, inf
        %v2350 = vsel %vm2349, %v2314, %v2348
        %vm2351 = vcmp.eq.f32.partialorder %v2314, 0.0
        %v2352 = vand.u32 %v2314, 2147483648
        %v2353 = vsel %vm2351, %v2352, %v2350
        %v2354 = vrsqrt.pop %v2317
        %v2355 = vmul.f32 %v2354, %v2317
        %v2356 = vmul.f32 %v2355, %v2354
        %v2357 = vmul.f32 0.5, %v2356
        %v2358 = vsub.f32 1.5, %v2357
        %v2359 = vmul.f32 %v2354, %v2358
        %v2360 = vmul.f32 %v2317, %v2359
        %vm2361 = vcmp.eq.f32.partialorder %v2317, inf
        %v2362 = vsel %vm2361, %v2317, %v2360
        %vm2363 = vcmp.eq.f32.partialorder %v2317, 0.0
        %v2364 = vand.u32 %v2317, 2147483648
        %v2365 = vsel %vm2363, %v2364, %v2362
        %v2366 = vadd.f32 %v2329, 1e-15
        %v2367 = vadd.f32 %v2341, 1e-15
        %v2368 = vadd.f32 %v2353, 1e-15
        %v2369 = vadd.f32 %v2365, 1e-15
        %v2370 = vrcp.pop %v2366
        %v2371 = vrcp.pop %v2367
        %v2372 = vrcp.pop %v2368
        %v2373 = vrcp.pop %v2369
        %v2374 = vadd.f32 %v2306, %v2309
        %v2375 = vadd.f32 %v2374, %v2312
        %v2376 = vadd.f32 %v2375, %v2315
        %v2377 = vrot.slane %v2376, 4
        %v2378 = vadd.f32 %v2376, %v2377
        %v2379 = vrot.slane %v2378, 2
        %v2380 = vadd.f32 %v2378, %v2379
        %v2381 = vrot.slane %v2380, 1
        %v2382 = vadd.f32 %v2380, %v2381
        %v2383 = vrsqrt.pop %v2382
        %v2384 = vmul.f32 %v2383, %v2382
        %v2385 = vmul.f32 %v2384, %v2383
        %v2386 = vmul.f32 0.5, %v2385
        %v2387 = vsub.f32 1.5, %v2386
        %v2388 = vmul.f32 %v2383, %v2387
        %v2389 = vmul.f32 %v2382, %v2388
        %vm2390 = vcmp.eq.f32.partialorder %v2382, inf
        %v2391 = vsel %vm2390, %v2382, %v2389
        %vm2392 = vcmp.eq.f32.partialorder %v2382, 0.0
        %v2393 = vand.u32 %v2382, 2147483648
        %v2394 = vsel %vm2392, %v2393, %v2391
        %v2395 = vadd.f32 %v2394, 1e-15
        %v2396 = vrcp.pop %v2395
        %v2397 = vmul.f32 %v2302, %v2370
        %v2398 = vmul.f32 %v2303, %v2371
        %v2399 = vmul.f32 %v2304, %v2372
        %v2400 = vmul.f32 %v2305, %v2373
        %v2401 = vmul.f32 %v2397, %v2396
        %v2402 = vmul.f32 %v2398, %v2396
        %v2403 = vmul.f32 %v2399, %v2396
        %v2404 = vmul.f32 %v2400, %v2396
        %v2413 = vunpack.c.l.b16 %v2125
        %v2414 = vunpack.c.l.b16 %v2126
        %v2415 = vunpack.c.l.b16 %v2127
        %v2416 = vunpack.c.l.b16 %v2128
        %v2417 = vunpack.c.l.b16 %v2129
        %v2418 = vunpack.c.l.b16 %v2130
        %v2419 = vunpack.c.l.b16 %v2131
        %v2420 = vunpack.c.l.b16 %v2132
        %v2421 = vpack.c.b16 %v2414, %v2413
        %v2422 = vpack.c.b16 %v2416, %v2415
        %v2423 = vpack.c.b16 %v2418, %v2417
        %v2424 = vpack.c.b16 %v2420, %v2419
        %2429 = vxpose.xlu0.c.b16.start [1/8] %v2421, 128
        %2430 = vxpose.xlu0.c.b16.cont [2/8] %v2422, 128
        %2431 = vxpose.xlu0.c.b16.cont [3/8] %v2423, 128
        %2432 = vxpose.xlu0.c.b16.cont [4/8] %v2424, 128
        %2433 = vxpose.xlu0.c.b16.cont [5/8] 0, 128
        %2434 = vxpose.xlu0.c.b16.cont [6/8] 0, 128
        %2435 = vxpose.xlu0.c.b16.cont [7/8] 0, 128
        %2436 = vxpose.xlu0.c.b16.end [8/8] 0, 128
        %v2437 = vpop.trf.xlu0
        %v2438 = vpop.trf.xlu0
        %v2439 = vpop.trf.xlu0
        %v2440 = vpop.trf.xlu0
        %v2441 = vpop.trf.xlu0
        %v2442 = vpop.trf.xlu0
        %v2443 = vpop.trf.xlu0
        %v2444 = vpop.trf.xlu0
        %v2450 = vsel %vm889, %v2437, 0
        %v2453 = vsel %vm889, %v2438, 0
        %2455 = vmatpush.bf16.msra.mxu0 0
        %2456 = vmatpush.bf16.msra.mxu0 0
        %2457 = vmatpush.bf16.msra.mxu0 0
        %2458 = vmatpush.bf16.msra.mxu0 0
        %2459 = vmatpush.bf16.msra.mxu0 %v1574
        %2460 = vmatpush.bf16.msra.mxu0 %v1573
        %2461 = vmatpush.bf16.msra.mxu0 %v1572
        %2462 = vmatpush.bf16.msra.mxu0 %v1571
        %2463 = vmatmul.bf16.gmra.mxu0 %v2450
        %v2464 = vpop.f32.mrf.mxu0
        %v2465 = vadd.f32 0.0, %v2464
        %v2466 = vpop.f32.mrf.mxu0
        %v2467 = vadd.f32 0.0, %v2466
        %2468 = vmatmul.bf16.gmra.mxu0 %v2453
        %v2469 = vpop.f32.mrf.mxu0
        %v2470 = vadd.f32 0.0, %v2469
        %v2471 = vpop.f32.mrf.mxu0
        %v2472 = vadd.f32 0.0, %v2471
        %2473 = vdwg.mxu0
        %s2474 = scalar_lea.vmem %s326, 32 [#allocation4]
        %v2475 = vld [vmem:[%s2474] sm:$0xf]
        %v2476 = vld [vmem:[%s2474 + $0x4] sm:$0xf]
        %v2477 = vld [vmem:[%s2474 + $0x8] sm:$0xf]
        %v2478 = vld [vmem:[%s2474 + $0xc] sm:$0xf]
        %v2479 = vld [vmem:[%s2474 + $0x10] sm:$0xf]
        %v2480 = vld [vmem:[%s2474 + $0x14] sm:$0xf]
        %v2481 = vld [vmem:[%s2474 + $0x18] sm:$0xf]
        %v2482 = vld [vmem:[%s2474 + $0x1c] sm:$0xf]
        %v2491 = vunpack.c.l.b16 %v2475
        %v2492 = vunpack.c.l.b16 %v2476
        %v2493 = vunpack.c.l.b16 %v2477
        %v2494 = vunpack.c.l.b16 %v2478
        %v2495 = vunpack.c.l.b16 %v2479
        %v2496 = vunpack.c.l.b16 %v2480
        %v2497 = vunpack.c.l.b16 %v2481
        %v2498 = vunpack.c.l.b16 %v2482
        %v2499 = vpack.c.b16 %v2492, %v2491
        %v2500 = vpack.c.b16 %v2494, %v2493
        %v2501 = vpack.c.b16 %v2496, %v2495
        %v2502 = vpack.c.b16 %v2498, %v2497
        %2507 = vmatpush.bf16.msra.mxu0 0
        %2508 = vmatpush.bf16.msra.mxu0 0
        %2509 = vmatpush.bf16.msra.mxu0 0
        %2510 = vmatpush.bf16.msra.mxu0 0
        %2511 = vmatpush.bf16.msra.mxu0 %v2502
        %2512 = vmatpush.bf16.msra.mxu0 %v2501
        %2513 = vmatpush.bf16.msra.mxu0 %v2500
        %2514 = vmatpush.bf16.msra.mxu0 %v2499
        %2515 = vmatmul.bf16.gmra.mxu0 %v2450
        %v2516 = vpop.f32.mrf.mxu0
        %v2517 = vadd.f32 0.0, %v2516
        %v2518 = vpop.f32.mrf.mxu0
        %v2519 = vadd.f32 0.0, %v2518
        %2520 = vmatmul.bf16.gmra.mxu0 %v2453
        %v2521 = vpop.f32.mrf.mxu0
        %v2522 = vadd.f32 0.0, %v2521
        %v2523 = vpop.f32.mrf.mxu0
        %v2524 = vadd.f32 0.0, %v2523
        %2525 = vdwg.mxu0
        %v2526 = vpack.c.bf16 %v2519, %v2517
        %v2527 = vpack.c.bf16 %v2524, %v2522
        %v2529 = vsel %vm889, %v2526, 0
        %v2532 = vsel %vm889, %v2527, 0
        %2534 = vmatpush.bf16.msra.mxu0 0
        %2535 = vmatpush.bf16.msra.mxu0 0
        %2536 = vmatpush.bf16.msra.mxu0 0
        %2537 = vmatpush.bf16.msra.mxu0 0
        %2538 = vmatpush.bf16.msra.mxu0 %v2424
        %2539 = vmatpush.bf16.msra.mxu0 %v2423
        %2540 = vmatpush.bf16.msra.mxu0 %v2422
        %2541 = vmatpush.bf16.msra.mxu0 %v2421
        %2542 = vmatmul.bf16.gmra.mxu0 %v2529
        %v2543 = vpop.f32.mrf.mxu0
        %v2544 = vadd.f32 0.0, %v2543
        %v2545 = vpop.f32.mrf.mxu0
        %v2546 = vadd.f32 0.0, %v2545
        %2547 = vmatmul.bf16.gmra.mxu0 %v2532
        %v2548 = vpop.f32.mrf.mxu0
        %v2549 = vadd.f32 0.0, %v2548
        %v2550 = vpop.f32.mrf.mxu0
        %v2551 = vadd.f32 0.0, %v2550
        %2552 = vdwg.mxu0
        %v2553 = vsel %vm2298, 0.0, %v2544
        %v2554 = vsel %vm2299, 0.0, %v2546
        %v2555 = vsel %vm2300, 0.0, %v2549
        %v2556 = vsel %vm2301, 0.0, %v2551
        %v2557 = vsel %vm1595, %v2553, 0.0
        %2558 = vadd.xlane.f32.xlu0 %v2557
        %v2559 = vpop.xlane.xlu0 %2558
        %v2560 = vsel %vm1595, %v2554, 0.0
        %2561 = vadd.xlane.f32.xlu0 %v2560
        %v2562 = vpop.xlane.xlu0 %2561
        %v2563 = vsel %vm1595, %v2555, 0.0
        %2564 = vadd.xlane.f32.xlu0 %v2563
        %v2565 = vpop.xlane.xlu0 %2564
        %v2566 = vsel %vm1595, %v2556, 0.0
        %2567 = vadd.xlane.f32.xlu0 %v2566
        %v2568 = vpop.xlane.xlu0 %2567
        %v2569 = vrsqrt.pop %v2559
        %v2570 = vmul.f32 %v2569, %v2559
        %v2571 = vmul.f32 %v2570, %v2569
        %v2572 = vmul.f32 0.5, %v2571
        %v2573 = vsub.f32 1.5, %v2572
        %v2574 = vmul.f32 %v2569, %v2573
        %v2575 = vmul.f32 %v2559, %v2574
        %vm2576 = vcmp.eq.f32.partialorder %v2559, inf
        %v2577 = vsel %vm2576, %v2559, %v2575
        %vm2578 = vcmp.eq.f32.partialorder %v2559, 0.0
        %v2579 = vand.u32 %v2559, 2147483648
        %v2580 = vsel %vm2578, %v2579, %v2577
        %v2581 = vrsqrt.pop %v2562
        %v2582 = vmul.f32 %v2581, %v2562
        %v2583 = vmul.f32 %v2582, %v2581
        %v2584 = vmul.f32 0.5, %v2583
        %v2585 = vsub.f32 1.5, %v2584
        %v2586 = vmul.f32 %v2581, %v2585
        %v2587 = vmul.f32 %v2562, %v2586
        %vm2588 = vcmp.eq.f32.partialorder %v2562, inf
        %v2589 = vsel %vm2588, %v2562, %v2587
        %vm2590 = vcmp.eq.f32.partialorder %v2562, 0.0
        %v2591 = vand.u32 %v2562, 2147483648
        %v2592 = vsel %vm2590, %v2591, %v2589
        %v2593 = vrsqrt.pop %v2565
        %v2594 = vmul.f32 %v2593, %v2565
        %v2595 = vmul.f32 %v2594, %v2593
        %v2596 = vmul.f32 0.5, %v2595
        %v2597 = vsub.f32 1.5, %v2596
        %v2598 = vmul.f32 %v2593, %v2597
        %v2599 = vmul.f32 %v2565, %v2598
        %vm2600 = vcmp.eq.f32.partialorder %v2565, inf
        %v2601 = vsel %vm2600, %v2565, %v2599
        %vm2602 = vcmp.eq.f32.partialorder %v2565, 0.0
        %v2603 = vand.u32 %v2565, 2147483648
        %v2604 = vsel %vm2602, %v2603, %v2601
        %v2605 = vrsqrt.pop %v2568
        %v2606 = vmul.f32 %v2605, %v2568
        %v2607 = vmul.f32 %v2606, %v2605
        %v2608 = vmul.f32 0.5, %v2607
        %v2609 = vsub.f32 1.5, %v2608
        %v2610 = vmul.f32 %v2605, %v2609
        %v2611 = vmul.f32 %v2568, %v2610
        %vm2612 = vcmp.eq.f32.partialorder %v2568, inf
        %v2613 = vsel %vm2612, %v2568, %v2611
        %vm2614 = vcmp.eq.f32.partialorder %v2568, 0.0
        %v2615 = vand.u32 %v2568, 2147483648
        %v2616 = vsel %vm2614, %v2615, %v2613
        %v2617 = vadd.f32 %v2580, 1e-15
        %v2618 = vadd.f32 %v2592, 1e-15
        %v2619 = vadd.f32 %v2604, 1e-15
        %v2620 = vadd.f32 %v2616, 1e-15
        %v2621 = vrcp.pop %v2617
        %v2622 = vrcp.pop %v2618
        %v2623 = vrcp.pop %v2619
        %v2624 = vrcp.pop %v2620
        %v2625 = vadd.f32 %v2557, %v2560
        %v2626 = vadd.f32 %v2625, %v2563
        %v2627 = vadd.f32 %v2626, %v2566
        %v2628 = vrot.slane %v2627, 4
        %v2629 = vadd.f32 %v2627, %v2628
        %v2630 = vrot.slane %v2629, 2
        %v2631 = vadd.f32 %v2629, %v2630
        %v2632 = vrot.slane %v2631, 1
        %v2633 = vadd.f32 %v2631, %v2632
        %v2634 = vrsqrt.pop %v2633
        %v2635 = vmul.f32 %v2634, %v2633
        %v2636 = vmul.f32 %v2635, %v2634
        %v2637 = vmul.f32 0.5, %v2636
        %v2638 = vsub.f32 1.5, %v2637
        %v2639 = vmul.f32 %v2634, %v2638
        %v2640 = vmul.f32 %v2633, %v2639
        %vm2641 = vcmp.eq.f32.partialorder %v2633, inf
        %v2642 = vsel %vm2641, %v2633, %v2640
        %vm2643 = vcmp.eq.f32.partialorder %v2633, 0.0
        %v2644 = vand.u32 %v2633, 2147483648
        %v2645 = vsel %vm2643, %v2644, %v2642
        %v2646 = vadd.f32 %v2645, 1e-15
        %v2647 = vrcp.pop %v2646
        %v2648 = vmul.f32 %v2553, %v2621
        %v2649 = vmul.f32 %v2554, %v2622
        %v2650 = vmul.f32 %v2555, %v2623
        %v2651 = vmul.f32 %v2556, %v2624
        %v2652 = vmul.f32 %v2648, %v2647
        %v2653 = vmul.f32 %v2649, %v2647
        %v2654 = vmul.f32 %v2650, %v2647
        %v2655 = vmul.f32 %v2651, %v2647
        %v2664 = vunpack.c.l.b16 %v2133
        %v2665 = vunpack.c.l.b16 %v2134
        %v2666 = vunpack.c.l.b16 %v2135
        %v2667 = vunpack.c.l.b16 %v2136
        %v2668 = vunpack.c.l.b16 %v2137
        %v2669 = vunpack.c.l.b16 %v2138
        %v2670 = vunpack.c.l.b16 %v2139
        %v2671 = vunpack.c.l.b16 %v2140
        %v2672 = vpack.c.b16 %v2665, %v2664
        %v2673 = vpack.c.b16 %v2667, %v2666
        %v2674 = vpack.c.b16 %v2669, %v2668
        %v2675 = vpack.c.b16 %v2671, %v2670
        %2680 = vxpose.xlu0.c.b16.start [1/8] %v2672, 128
        %2681 = vxpose.xlu0.c.b16.cont [2/8] %v2673, 128
        %2682 = vxpose.xlu0.c.b16.cont [3/8] %v2674, 128
        %2683 = vxpose.xlu0.c.b16.cont [4/8] %v2675, 128
        %2684 = vxpose.xlu0.c.b16.cont [5/8] 0, 128
        %2685 = vxpose.xlu0.c.b16.cont [6/8] 0, 128
        %2686 = vxpose.xlu0.c.b16.cont [7/8] 0, 128
        %2687 = vxpose.xlu0.c.b16.end [8/8] 0, 128
        %v2688 = vpop.trf.xlu0
        %v2689 = vpop.trf.xlu0
        %v2690 = vpop.trf.xlu0
        %v2691 = vpop.trf.xlu0
        %v2692 = vpop.trf.xlu0
        %v2693 = vpop.trf.xlu0
        %v2694 = vpop.trf.xlu0
        %v2695 = vpop.trf.xlu0
        %v2701 = vsel %vm889, %v2688, 0
        %v2704 = vsel %vm889, %v2689, 0
        %2706 = vmatpush.bf16.msra.mxu0 0
        %2707 = vmatpush.bf16.msra.mxu0 0
        %2708 = vmatpush.bf16.msra.mxu0 0
        %2709 = vmatpush.bf16.msra.mxu0 0
        %2710 = vmatpush.bf16.msra.mxu0 %v1578
        %2711 = vmatpush.bf16.msra.mxu0 %v1577
        %2712 = vmatpush.bf16.msra.mxu0 %v1576
        %2713 = vmatpush.bf16.msra.mxu0 %v1575
        %2714 = vmatmul.bf16.gmra.mxu0 %v2701
        %v2715 = vpop.f32.mrf.mxu0
        %v2716 = vadd.f32 0.0, %v2715
        %v2717 = vpop.f32.mrf.mxu0
        %v2718 = vadd.f32 0.0, %v2717
        %2719 = vmatmul.bf16.gmra.mxu0 %v2704
        %v2720 = vpop.f32.mrf.mxu0
        %v2721 = vadd.f32 0.0, %v2720
        %v2722 = vpop.f32.mrf.mxu0
        %v2723 = vadd.f32 0.0, %v2722
        %2724 = vdwg.mxu0
        %s2725 = scalar_lea.vmem %s326, 64 [#allocation4]
        %v2726 = vld [vmem:[%s2725] sm:$0xf]
        %v2727 = vld [vmem:[%s2725 + $0x4] sm:$0xf]
        %v2728 = vld [vmem:[%s2725 + $0x8] sm:$0xf]
        %v2729 = vld [vmem:[%s2725 + $0xc] sm:$0xf]
        %v2730 = vld [vmem:[%s2725 + $0x10] sm:$0xf]
        %v2731 = vld [vmem:[%s2725 + $0x14] sm:$0xf]
        %v2732 = vld [vmem:[%s2725 + $0x18] sm:$0xf]
        %v2733 = vld [vmem:[%s2725 + $0x1c] sm:$0xf]
        %v2742 = vunpack.c.l.b16 %v2726
        %v2743 = vunpack.c.l.b16 %v2727
        %v2744 = vunpack.c.l.b16 %v2728
        %v2745 = vunpack.c.l.b16 %v2729
        %v2746 = vunpack.c.l.b16 %v2730
        %v2747 = vunpack.c.l.b16 %v2731
        %v2748 = vunpack.c.l.b16 %v2732
        %v2749 = vunpack.c.l.b16 %v2733
        %v2750 = vpack.c.b16 %v2743, %v2742
        %v2751 = vpack.c.b16 %v2745, %v2744
        %v2752 = vpack.c.b16 %v2747, %v2746
        %v2753 = vpack.c.b16 %v2749, %v2748
        %2758 = vmatpush.bf16.msra.mxu0 0
        %2759 = vmatpush.bf16.msra.mxu0 0
        %2760 = vmatpush.bf16.msra.mxu0 0
        %2761 = vmatpush.bf16.msra.mxu0 0
        %2762 = vmatpush.bf16.msra.mxu0 %v2753
        %2763 = vmatpush.bf16.msra.mxu0 %v2752
        %2764 = vmatpush.bf16.msra.mxu0 %v2751
        %2765 = vmatpush.bf16.msra.mxu0 %v2750
        %2766 = vmatmul.bf16.gmra.mxu0 %v2701
        %v2767 = vpop.f32.mrf.mxu0
        %v2768 = vadd.f32 0.0, %v2767
        %v2769 = vpop.f32.mrf.mxu0
        %v2770 = vadd.f32 0.0, %v2769
        %2771 = vmatmul.bf16.gmra.mxu0 %v2704
        %v2772 = vpop.f32.mrf.mxu0
        %v2773 = vadd.f32 0.0, %v2772
        %v2774 = vpop.f32.mrf.mxu0
        %v2775 = vadd.f32 0.0, %v2774
        %2776 = vdwg.mxu0
        %v2777 = vpack.c.bf16 %v2770, %v2768
        %v2778 = vpack.c.bf16 %v2775, %v2773
        %v2780 = vsel %vm889, %v2777, 0
        %v2783 = vsel %vm889, %v2778, 0
        %2785 = vmatpush.bf16.msra.mxu0 0
        %2786 = vmatpush.bf16.msra.mxu0 0
        %2787 = vmatpush.bf16.msra.mxu0 0
        %2788 = vmatpush.bf16.msra.mxu0 0
        %2789 = vmatpush.bf16.msra.mxu0 %v2675
        %2790 = vmatpush.bf16.msra.mxu0 %v2674
        %2791 = vmatpush.bf16.msra.mxu0 %v2673
        %2792 = vmatpush.bf16.msra.mxu0 %v2672
        %2793 = vmatmul.bf16.gmra.mxu0 %v2780
        %v2794 = vpop.f32.mrf.mxu0
        %v2795 = vadd.f32 0.0, %v2794
        %v2796 = vpop.f32.mrf.mxu0
        %v2797 = vadd.f32 0.0, %v2796
        %2798 = vmatmul.bf16.gmra.mxu0 %v2783
        %v2799 = vpop.f32.mrf.mxu0
        %v2800 = vadd.f32 0.0, %v2799
        %v2801 = vpop.f32.mrf.mxu0
        %v2802 = vadd.f32 0.0, %v2801
        %2803 = vdwg.mxu0
        %v2804 = vsel %vm2298, 0.0, %v2795
        %v2805 = vsel %vm2299, 0.0, %v2797
        %v2806 = vsel %vm2300, 0.0, %v2800
        %v2807 = vsel %vm2301, 0.0, %v2802
        %v2808 = vsel %vm1595, %v2804, 0.0
        %2809 = vadd.xlane.f32.xlu0 %v2808
        %v2810 = vpop.xlane.xlu0 %2809
        %v2811 = vsel %vm1595, %v2805, 0.0
        %2812 = vadd.xlane.f32.xlu0 %v2811
        %v2813 = vpop.xlane.xlu0 %2812
        %v2814 = vsel %vm1595, %v2806, 0.0
        %2815 = vadd.xlane.f32.xlu0 %v2814
        %v2816 = vpop.xlane.xlu0 %2815
        %v2817 = vsel %vm1595, %v2807, 0.0
        %2818 = vadd.xlane.f32.xlu0 %v2817
        %v2819 = vpop.xlane.xlu0 %2818
        %v2820 = vrsqrt.pop %v2810
        %v2821 = vmul.f32 %v2820, %v2810
        %v2822 = vmul.f32 %v2821, %v2820
        %v2823 = vmul.f32 0.5, %v2822
        %v2824 = vsub.f32 1.5, %v2823
        %v2825 = vmul.f32 %v2820, %v2824
        %v2826 = vmul.f32 %v2810, %v2825
        %vm2827 = vcmp.eq.f32.partialorder %v2810, inf
        %v2828 = vsel %vm2827, %v2810, %v2826
        %vm2829 = vcmp.eq.f32.partialorder %v2810, 0.0
        %v2830 = vand.u32 %v2810, 2147483648
        %v2831 = vsel %vm2829, %v2830, %v2828
        %v2832 = vrsqrt.pop %v2813
        %v2833 = vmul.f32 %v2832, %v2813
        %v2834 = vmul.f32 %v2833, %v2832
        %v2835 = vmul.f32 0.5, %v2834
        %v2836 = vsub.f32 1.5, %v2835
        %v2837 = vmul.f32 %v2832, %v2836
        %v2838 = vmul.f32 %v2813, %v2837
        %vm2839 = vcmp.eq.f32.partialorder %v2813, inf
        %v2840 = vsel %vm2839, %v2813, %v2838
        %vm2841 = vcmp.eq.f32.partialorder %v2813, 0.0
        %v2842 = vand.u32 %v2813, 2147483648
        %v2843 = vsel %vm2841, %v2842, %v2840
        %v2844 = vrsqrt.pop %v2816
        %v2845 = vmul.f32 %v2844, %v2816
        %v2846 = vmul.f32 %v2845, %v2844
        %v2847 = vmul.f32 0.5, %v2846
        %v2848 = vsub.f32 1.5, %v2847
        %v2849 = vmul.f32 %v2844, %v2848
        %v2850 = vmul.f32 %v2816, %v2849
        %vm2851 = vcmp.eq.f32.partialorder %v2816, inf
        %v2852 = vsel %vm2851, %v2816, %v2850
        %vm2853 = vcmp.eq.f32.partialorder %v2816, 0.0
        %v2854 = vand.u32 %v2816, 2147483648
        %v2855 = vsel %vm2853, %v2854, %v2852
        %v2856 = vrsqrt.pop %v2819
        %v2857 = vmul.f32 %v2856, %v2819
        %v2858 = vmul.f32 %v2857, %v2856
        %v2859 = vmul.f32 0.5, %v2858
        %v2860 = vsub.f32 1.5, %v2859
        %v2861 = vmul.f32 %v2856, %v2860
        %v2862 = vmul.f32 %v2819, %v2861
        %vm2863 = vcmp.eq.f32.partialorder %v2819, inf
        %v2864 = vsel %vm2863, %v2819, %v2862
        %vm2865 = vcmp.eq.f32.partialorder %v2819, 0.0
        %v2866 = vand.u32 %v2819, 2147483648
        %v2867 = vsel %vm2865, %v2866, %v2864
        %v2868 = vadd.f32 %v2831, 1e-15
        %v2869 = vadd.f32 %v2843, 1e-15
        %v2870 = vadd.f32 %v2855, 1e-15
        %v2871 = vadd.f32 %v2867, 1e-15
        %v2872 = vrcp.pop %v2868
        %v2873 = vrcp.pop %v2869
        %v2874 = vrcp.pop %v2870
        %v2875 = vrcp.pop %v2871
        %v2876 = vadd.f32 %v2808, %v2811
        %v2877 = vadd.f32 %v2876, %v2814
        %v2878 = vadd.f32 %v2877, %v2817
        %v2879 = vrot.slane %v2878, 4
        %v2880 = vadd.f32 %v2878, %v2879
        %v2881 = vrot.slane %v2880, 2
        %v2882 = vadd.f32 %v2880, %v2881
        %v2883 = vrot.slane %v2882, 1
        %v2884 = vadd.f32 %v2882, %v2883
        %v2885 = vrsqrt.pop %v2884
        %v2886 = vmul.f32 %v2885, %v2884
        %v2887 = vmul.f32 %v2886, %v2885
        %v2888 = vmul.f32 0.5, %v2887
        %v2889 = vsub.f32 1.5, %v2888
        %v2890 = vmul.f32 %v2885, %v2889
        %v2891 = vmul.f32 %v2884, %v2890
        %vm2892 = vcmp.eq.f32.partialorder %v2884, inf
        %v2893 = vsel %vm2892, %v2884, %v2891
        %vm2894 = vcmp.eq.f32.partialorder %v2884, 0.0
        %v2895 = vand.u32 %v2884, 2147483648
        %v2896 = vsel %vm2894, %v2895, %v2893
        %v2897 = vadd.f32 %v2896, 1e-15
        %v2898 = vrcp.pop %v2897
        %v2899 = vmul.f32 %v2804, %v2872
        %v2900 = vmul.f32 %v2805, %v2873
        %v2901 = vmul.f32 %v2806, %v2874
        %v2902 = vmul.f32 %v2807, %v2875
        %v2903 = vmul.f32 %v2899, %v2898
        %v2904 = vmul.f32 %v2900, %v2898
        %v2905 = vmul.f32 %v2901, %v2898
        %v2906 = vmul.f32 %v2902, %v2898
        %v2915 = vunpack.c.l.b16 %v2141
        %v2916 = vunpack.c.l.b16 %v2142
        %v2917 = vunpack.c.l.b16 %v2143
        %v2918 = vunpack.c.l.b16 %v2144
        %v2919 = vunpack.c.l.b16 %v2145
        %v2920 = vunpack.c.l.b16 %v2146
        %v2921 = vunpack.c.l.b16 %v2147
        %v2922 = vunpack.c.l.b16 %v2148
        %v2923 = vpack.c.b16 %v2916, %v2915
        %v2924 = vpack.c.b16 %v2918, %v2917
        %v2925 = vpack.c.b16 %v2920, %v2919
        %v2926 = vpack.c.b16 %v2922, %v2921
        %2931 = vxpose.xlu0.c.b16.start [1/8] %v2923, 128
        %2932 = vxpose.xlu0.c.b16.cont [2/8] %v2924, 128
        %2933 = vxpose.xlu0.c.b16.cont [3/8] %v2925, 128
        %2934 = vxpose.xlu0.c.b16.cont [4/8] %v2926, 128
        %2935 = vxpose.xlu0.c.b16.cont [5/8] 0, 128
        %2936 = vxpose.xlu0.c.b16.cont [6/8] 0, 128
        %2937 = vxpose.xlu0.c.b16.cont [7/8] 0, 128
        %2938 = vxpose.xlu0.c.b16.end [8/8] 0, 128
        %v2939 = vpop.trf.xlu0
        %v2940 = vpop.trf.xlu0
        %v2941 = vpop.trf.xlu0
        %v2942 = vpop.trf.xlu0
        %v2943 = vpop.trf.xlu0
        %v2944 = vpop.trf.xlu0
        %v2945 = vpop.trf.xlu0
        %v2946 = vpop.trf.xlu0
        %v2952 = vsel %vm889, %v2939, 0
        %v2955 = vsel %vm889, %v2940, 0
        %2957 = vmatpush.bf16.msra.mxu0 0
        %2958 = vmatpush.bf16.msra.mxu0 0
        %2959 = vmatpush.bf16.msra.mxu0 0
        %2960 = vmatpush.bf16.msra.mxu0 0
        %2961 = vmatpush.bf16.msra.mxu0 %v1582
        %2962 = vmatpush.bf16.msra.mxu0 %v1581
        %2963 = vmatpush.bf16.msra.mxu0 %v1580
        %2964 = vmatpush.bf16.msra.mxu0 %v1579
        %2965 = vmatmul.bf16.gmra.mxu0 %v2952
        %v2966 = vpop.f32.mrf.mxu0
        %v2967 = vadd.f32 0.0, %v2966
        %v2968 = vpop.f32.mrf.mxu0
        %v2969 = vadd.f32 0.0, %v2968
        %2970 = vmatmul.bf16.gmra.mxu0 %v2955
        %v2971 = vpop.f32.mrf.mxu0
        %v2972 = vadd.f32 0.0, %v2971
        %v2973 = vpop.f32.mrf.mxu0
        %v2974 = vadd.f32 0.0, %v2973
        %2975 = vdwg.mxu0
        %s2976 = scalar_lea.vmem %s326, 96 [#allocation4]
        %v2977 = vld [vmem:[%s2976] sm:$0xf]
        %v2978 = vld [vmem:[%s2976 + $0x4] sm:$0xf]
        %v2979 = vld [vmem:[%s2976 + $0x8] sm:$0xf]
        %v2980 = vld [vmem:[%s2976 + $0xc] sm:$0xf]
        %v2981 = vld [vmem:[%s2976 + $0x10] sm:$0xf]
        %v2982 = vld [vmem:[%s2976 + $0x14] sm:$0xf]
        %v2983 = vld [vmem:[%s2976 + $0x18] sm:$0xf]
        %v2984 = vld [vmem:[%s2976 + $0x1c] sm:$0xf]
        %v2993 = vunpack.c.l.b16 %v2977
        %v2994 = vunpack.c.l.b16 %v2978
        %v2995 = vunpack.c.l.b16 %v2979
        %v2996 = vunpack.c.l.b16 %v2980
        %v2997 = vunpack.c.l.b16 %v2981
        %v2998 = vunpack.c.l.b16 %v2982
        %v2999 = vunpack.c.l.b16 %v2983
        %v3000 = vunpack.c.l.b16 %v2984
        %v3001 = vpack.c.b16 %v2994, %v2993
        %v3002 = vpack.c.b16 %v2996, %v2995
        %v3003 = vpack.c.b16 %v2998, %v2997
        %v3004 = vpack.c.b16 %v3000, %v2999
        %3009 = vmatpush.bf16.msra.mxu0 0
        %3010 = vmatpush.bf16.msra.mxu0 0
        %3011 = vmatpush.bf16.msra.mxu0 0
        %3012 = vmatpush.bf16.msra.mxu0 0
        %3013 = vmatpush.bf16.msra.mxu0 %v3004
        %3014 = vmatpush.bf16.msra.mxu0 %v3003
        %3015 = vmatpush.bf16.msra.mxu0 %v3002
        %3016 = vmatpush.bf16.msra.mxu0 %v3001
        %3017 = vmatmul.bf16.gmra.mxu0 %v2952
        %v3018 = vpop.f32.mrf.mxu0
        %v3019 = vadd.f32 0.0, %v3018
        %v3020 = vpop.f32.mrf.mxu0
        %v3021 = vadd.f32 0.0, %v3020
        %3022 = vmatmul.bf16.gmra.mxu0 %v2955
        %v3023 = vpop.f32.mrf.mxu0
        %v3024 = vadd.f32 0.0, %v3023
        %v3025 = vpop.f32.mrf.mxu0
        %v3026 = vadd.f32 0.0, %v3025
        %3027 = vdwg.mxu0
        %v3028 = vpack.c.bf16 %v3021, %v3019
        %v3029 = vpack.c.bf16 %v3026, %v3024
        %v3031 = vsel %vm889, %v3028, 0
        %v3034 = vsel %vm889, %v3029, 0
        %3036 = vmatpush.bf16.msra.mxu0 0
        %3037 = vmatpush.bf16.msra.mxu0 0
        %3038 = vmatpush.bf16.msra.mxu0 0
        %3039 = vmatpush.bf16.msra.mxu0 0
        %3040 = vmatpush.bf16.msra.mxu0 %v2926
        %3041 = vmatpush.bf16.msra.mxu0 %v2925
        %3042 = vmatpush.bf16.msra.mxu0 %v2924
        %3043 = vmatpush.bf16.msra.mxu0 %v2923
        %3044 = vmatmul.bf16.gmra.mxu0 %v3031
        %v3045 = vpop.f32.mrf.mxu0
        %v3046 = vadd.f32 0.0, %v3045
        %v3047 = vpop.f32.mrf.mxu0
        %v3048 = vadd.f32 0.0, %v3047
        %3049 = vmatmul.bf16.gmra.mxu0 %v3034
        %v3050 = vpop.f32.mrf.mxu0
        %v3051 = vadd.f32 0.0, %v3050
        %v3052 = vpop.f32.mrf.mxu0
        %v3053 = vadd.f32 0.0, %v3052
        %3054 = vdwg.mxu0
        %v3055 = vsel %vm2298, 0.0, %v3046
        %v3056 = vsel %vm2299, 0.0, %v3048
        %v3057 = vsel %vm2300, 0.0, %v3051
        %v3058 = vsel %vm2301, 0.0, %v3053
        %v3059 = vsel %vm1595, %v3055, 0.0
        %3060 = vadd.xlane.f32.xlu0 %v3059
        %v3061 = vpop.xlane.xlu0 %3060
        %v3062 = vsel %vm1595, %v3056, 0.0
        %3063 = vadd.xlane.f32.xlu0 %v3062
        %v3064 = vpop.xlane.xlu0 %3063
        %v3065 = vsel %vm1595, %v3057, 0.0
        %3066 = vadd.xlane.f32.xlu0 %v3065
        %v3067 = vpop.xlane.xlu0 %3066
        %v3068 = vsel %vm1595, %v3058, 0.0
        %3069 = vadd.xlane.f32.xlu0 %v3068
        %v3070 = vpop.xlane.xlu0 %3069
        %v3071 = vrsqrt.pop %v3061
        %v3072 = vmul.f32 %v3071, %v3061
        %v3073 = vmul.f32 %v3072, %v3071
        %v3074 = vmul.f32 0.5, %v3073
        %v3075 = vsub.f32 1.5, %v3074
        %v3076 = vmul.f32 %v3071, %v3075
        %v3077 = vmul.f32 %v3061, %v3076
        %vm3078 = vcmp.eq.f32.partialorder %v3061, inf
        %v3079 = vsel %vm3078, %v3061, %v3077
        %vm3080 = vcmp.eq.f32.partialorder %v3061, 0.0
        %v3081 = vand.u32 %v3061, 2147483648
        %v3082 = vsel %vm3080, %v3081, %v3079
        %v3083 = vrsqrt.pop %v3064
        %v3084 = vmul.f32 %v3083, %v3064
        %v3085 = vmul.f32 %v3084, %v3083
        %v3086 = vmul.f32 0.5, %v3085
        %v3087 = vsub.f32 1.5, %v3086
        %v3088 = vmul.f32 %v3083, %v3087
        %v3089 = vmul.f32 %v3064, %v3088
        %vm3090 = vcmp.eq.f32.partialorder %v3064, inf
        %v3091 = vsel %vm3090, %v3064, %v3089
        %vm3092 = vcmp.eq.f32.partialorder %v3064, 0.0
        %v3093 = vand.u32 %v3064, 2147483648
        %v3094 = vsel %vm3092, %v3093, %v3091
        %v3095 = vrsqrt.pop %v3067
        %v3096 = vmul.f32 %v3095, %v3067
        %v3097 = vmul.f32 %v3096, %v3095
        %v3098 = vmul.f32 0.5, %v3097
        %v3099 = vsub.f32 1.5, %v3098
        %v3100 = vmul.f32 %v3095, %v3099
        %v3101 = vmul.f32 %v3067, %v3100
        %vm3102 = vcmp.eq.f32.partialorder %v3067, inf
        %v3103 = vsel %vm3102, %v3067, %v3101
        %vm3104 = vcmp.eq.f32.partialorder %v3067, 0.0
        %v3105 = vand.u32 %v3067, 2147483648
        %v3106 = vsel %vm3104, %v3105, %v3103
        %v3107 = vrsqrt.pop %v3070
        %v3108 = vmul.f32 %v3107, %v3070
        %v3109 = vmul.f32 %v3108, %v3107
        %v3110 = vmul.f32 0.5, %v3109
        %v3111 = vsub.f32 1.5, %v3110
        %v3112 = vmul.f32 %v3107, %v3111
        %v3113 = vmul.f32 %v3070, %v3112
        %vm3114 = vcmp.eq.f32.partialorder %v3070, inf
        %v3115 = vsel %vm3114, %v3070, %v3113
        %vm3116 = vcmp.eq.f32.partialorder %v3070, 0.0
        %v3117 = vand.u32 %v3070, 2147483648
        %v3118 = vsel %vm3116, %v3117, %v3115
        %v3119 = vadd.f32 %v3082, 1e-15
        %v3120 = vadd.f32 %v3094, 1e-15
        %v3121 = vadd.f32 %v3106, 1e-15
        %v3122 = vadd.f32 %v3118, 1e-15
        %v3123 = vrcp.pop %v3119
        %v3124 = vrcp.pop %v3120
        %v3125 = vrcp.pop %v3121
        %v3126 = vrcp.pop %v3122
        %v3127 = vadd.f32 %v3059, %v3062
        %v3128 = vadd.f32 %v3127, %v3065
        %v3129 = vadd.f32 %v3128, %v3068
        %v3130 = vrot.slane %v3129, 4
        %v3131 = vadd.f32 %v3129, %v3130
        %v3132 = vrot.slane %v3131, 2
        %v3133 = vadd.f32 %v3131, %v3132
        %v3134 = vrot.slane %v3133, 1
        %v3135 = vadd.f32 %v3133, %v3134
        %v3136 = vrsqrt.pop %v3135
        %v3137 = vmul.f32 %v3136, %v3135
        %v3138 = vmul.f32 %v3137, %v3136
        %v3139 = vmul.f32 0.5, %v3138
        %v3140 = vsub.f32 1.5, %v3139
        %v3141 = vmul.f32 %v3136, %v3140
        %v3142 = vmul.f32 %v3135, %v3141
        %vm3143 = vcmp.eq.f32.partialorder %v3135, inf
        %v3144 = vsel %vm3143, %v3135, %v3142
        %vm3145 = vcmp.eq.f32.partialorder %v3135, 0.0
        %v3146 = vand.u32 %v3135, 2147483648
        %v3147 = vsel %vm3145, %v3146, %v3144
        %v3148 = vadd.f32 %v3147, 1e-15
        %v3149 = vrcp.pop %v3148
        %v3150 = vmul.f32 %v3055, %v3123
        %v3151 = vmul.f32 %v3056, %v3124
        %v3152 = vmul.f32 %v3057, %v3125
        %v3153 = vmul.f32 %v3058, %v3126
        %v3154 = vmul.f32 %v3150, %v3149
        %v3155 = vmul.f32 %v3151, %v3149
        %v3156 = vmul.f32 %v3152, %v3149
        %v3157 = vmul.f32 %v3153, %v3149
        %v3158 = vpack.c.bf16 %v2211, %v2209
        %v3159 = vpack.c.bf16 %v2216, %v2214
        %v3160 = vpack.c.bf16 %v2467, %v2465
        %v3161 = vpack.c.bf16 %v2472, %v2470
        %v3162 = vpack.c.bf16 %v2718, %v2716
        %v3163 = vpack.c.bf16 %v2723, %v2721
        %v3164 = vpack.c.bf16 %v2969, %v2967
        %v3165 = vpack.c.bf16 %v2974, %v2972
        %v3166 = vpack.c.bf16 %v2402, %v2401
        %v3167 = vpack.c.bf16 %v2404, %v2403
        %v3168 = vpack.c.bf16 %v2653, %v2652
        %v3169 = vpack.c.bf16 %v2655, %v2654
        %v3170 = vpack.c.bf16 %v2904, %v2903
        %v3171 = vpack.c.bf16 %v2906, %v2905
        %v3172 = vpack.c.bf16 %v3155, %v3154
        %v3173 = vpack.c.bf16 %v3157, %v3156
        %v3175 = vsel %vm1595, %v3166, 0
        %v3178 = vsel %vm1595, %v3167, 0
        %3180 = vmatpush.bf16.msra.mxu0 0
        %3181 = vmatpush.bf16.msra.mxu0 0
        %3182 = vmatpush.bf16.msra.mxu0 0
        %3183 = vmatpush.bf16.msra.mxu0 0
        %3184 = vmatpush.bf16.msra.mxu0 0
        %3185 = vmatpush.bf16.msra.mxu0 0
        %3186 = vmatpush.bf16.msra.mxu0 %v3159
        %3187 = vmatpush.bf16.msra.mxu0 %v3158
        %3188 = vmatmul.bf16.gmra.mxu0 %v3175
        %v3189 = vpop.f32.mrf.mxu0
        %v3190 = vadd.f32 0.0, %v3189
        %v3191 = vpop.f32.mrf.mxu0
        %v3192 = vadd.f32 0.0, %v3191
        %3193 = vmatmul.bf16.gmra.mxu0 %v3178
        %v3194 = vpop.f32.mrf.mxu0
        %v3195 = vadd.f32 0.0, %v3194
        %v3196 = vpop.f32.mrf.mxu0
        %v3197 = vadd.f32 0.0, %v3196
        %3198 = vdwg.mxu0
        %v3200 = vsel %vm1595, %v3168, 0
        %v3203 = vsel %vm1595, %v3169, 0
        %3205 = vmatpush.bf16.msra.mxu0 0
        %3206 = vmatpush.bf16.msra.mxu0 0
        %3207 = vmatpush.bf16.msra.mxu0 0
        %3208 = vmatpush.bf16.msra.mxu0 0
        %3209 = vmatpush.bf16.msra.mxu0 0
        %3210 = vmatpush.bf16.msra.mxu0 0
        %3211 = vmatpush.bf16.msra.mxu0 %v3161
        %3212 = vmatpush.bf16.msra.mxu0 %v3160
        %3213 = vmatmul.bf16.gmra.mxu0 %v3200
        %v3214 = vpop.f32.mrf.mxu0
        %v3215 = vadd.f32 0.0, %v3214
        %v3216 = vpop.f32.mrf.mxu0
        %v3217 = vadd.f32 0.0, %v3216
        %3218 = vmatmul.bf16.gmra.mxu0 %v3203
        %v3219 = vpop.f32.mrf.mxu0
        %v3220 = vadd.f32 0.0, %v3219
        %v3221 = vpop.f32.mrf.mxu0
        %v3222 = vadd.f32 0.0, %v3221
        %3223 = vdwg.mxu0
        %v3225 = vsel %vm1595, %v3170, 0
        %v3228 = vsel %vm1595, %v3171, 0
        %3230 = vmatpush.bf16.msra.mxu0 0
        %3231 = vmatpush.bf16.msra.mxu0 0
        %3232 = vmatpush.bf16.msra.mxu0 0
        %3233 = vmatpush.bf16.msra.mxu0 0
        %3234 = vmatpush.bf16.msra.mxu0 0
        %3235 = vmatpush.bf16.msra.mxu0 0
        %3236 = vmatpush.bf16.msra.mxu0 %v3163
        %3237 = vmatpush.bf16.msra.mxu0 %v3162
        %3238 = vmatmul.bf16.gmra.mxu0 %v3225
        %v3239 = vpop.f32.mrf.mxu0
        %v3240 = vadd.f32 0.0, %v3239
        %v3241 = vpop.f32.mrf.mxu0
        %v3242 = vadd.f32 0.0, %v3241
        %3243 = vmatmul.bf16.gmra.mxu0 %v3228
        %v3244 = vpop.f32.mrf.mxu0
        %v3245 = vadd.f32 0.0, %v3244
        %v3246 = vpop.f32.mrf.mxu0
        %v3247 = vadd.f32 0.0, %v3246
        %3248 = vdwg.mxu0
        %v3250 = vsel %vm1595, %v3172, 0
        %v3253 = vsel %vm1595, %v3173, 0
        %3255 = vmatpush.bf16.msra.mxu0 0
        %3256 = vmatpush.bf16.msra.mxu0 0
        %3257 = vmatpush.bf16.msra.mxu0 0
        %3258 = vmatpush.bf16.msra.mxu0 0
        %3259 = vmatpush.bf16.msra.mxu0 0
        %3260 = vmatpush.bf16.msra.mxu0 0
        %3261 = vmatpush.bf16.msra.mxu0 %v3165
        %3262 = vmatpush.bf16.msra.mxu0 %v3164
        %3263 = vmatmul.bf16.gmra.mxu0 %v3250
        %v3264 = vpop.f32.mrf.mxu0
        %v3265 = vadd.f32 0.0, %v3264
        %v3266 = vpop.f32.mrf.mxu0
        %v3267 = vadd.f32 0.0, %v3266
        %3268 = vmatmul.bf16.gmra.mxu0 %v3253
        %v3269 = vpop.f32.mrf.mxu0
        %v3270 = vadd.f32 0.0, %v3269
        %v3271 = vpop.f32.mrf.mxu0
        %v3272 = vadd.f32 0.0, %v3271
        %3273 = vdwg.mxu0
        %3290 = vrot.lane.b32.xlu0 %v2209, 32
        %v3291 = vpop.permute.xlu0 %3290
        %3292 = vrot.lane.b32.xlu0 %v2211, 32
        %v3293 = vpop.permute.xlu0 %3292
        %3294 = vrot.lane.b32.xlu0 %v2214, 32
        %v3295 = vpop.permute.xlu0 %3294
        %3296 = vrot.lane.b32.xlu0 %v2216, 32
        %v3297 = vpop.permute.xlu0 %3296
        %3298 = vrot.lane.b32.xlu0 %v2465, 32
        %v3299 = vpop.permute.xlu0 %3298
        %3300 = vrot.lane.b32.xlu0 %v2467, 32
        %v3301 = vpop.permute.xlu0 %3300
        %3302 = vrot.lane.b32.xlu0 %v2470, 32
        %v3303 = vpop.permute.xlu0 %3302
        %3304 = vrot.lane.b32.xlu0 %v2472, 32
        %v3305 = vpop.permute.xlu0 %3304
        %3306 = vrot.lane.b32.xlu0 %v2716, 32
        %v3307 = vpop.permute.xlu0 %3306
        %3308 = vrot.lane.b32.xlu0 %v2718, 32
        %v3309 = vpop.permute.xlu0 %3308
        %3310 = vrot.lane.b32.xlu0 %v2721, 32
        %v3311 = vpop.permute.xlu0 %3310
        %3312 = vrot.lane.b32.xlu0 %v2723, 32
        %v3313 = vpop.permute.xlu0 %3312
        %3314 = vrot.lane.b32.xlu0 %v2967, 32
        %v3315 = vpop.permute.xlu0 %3314
        %3316 = vrot.lane.b32.xlu0 %v2969, 32
        %v3317 = vpop.permute.xlu0 %3316
        %3318 = vrot.lane.b32.xlu0 %v2972, 32
        %v3319 = vpop.permute.xlu0 %3318
        %3320 = vrot.lane.b32.xlu0 %v2974, 32
        %v3321 = vpop.permute.xlu0 %3320
        %v3338 = vsel %vm1595, %v3190, %v3291
        %v3339 = vsel %vm1595, %v3192, %v3293
        %v3340 = vsel %vm1595, %v3195, %v3295
        %v3341 = vsel %vm1595, %v3197, %v3297
        %v3342 = vsel %vm1595, %v3215, %v3299
        %v3343 = vsel %vm1595, %v3217, %v3301
        %v3344 = vsel %vm1595, %v3220, %v3303
        %v3345 = vsel %vm1595, %v3222, %v3305
        %v3346 = vsel %vm1595, %v3240, %v3307
        %v3347 = vsel %vm1595, %v3242, %v3309
        %v3348 = vsel %vm1595, %v3245, %v3311
        %v3349 = vsel %vm1595, %v3247, %v3313
        %v3350 = vsel %vm1595, %v3265, %v3315
        %v3351 = vsel %vm1595, %v3267, %v3317
        %v3352 = vsel %vm1595, %v3270, %v3319
        %v3353 = vsel %vm1595, %v3272, %v3321
        %v3354 = vpack.c.bf16 %v3339, %v3338
        %v3355 = vpack.c.bf16 %v3341, %v3340
        %v3356 = vpack.c.bf16 %v3343, %v3342
        %v3357 = vpack.c.bf16 %v3345, %v3344
        %v3358 = vpack.c.bf16 %v3347, %v3346
        %v3359 = vpack.c.bf16 %v3349, %v3348
        %v3360 = vpack.c.bf16 %v3351, %v3350
        %v3361 = vpack.c.bf16 %v3353, %v3352
        %v3362 = vperm.slane %v528, 0
        %v3371 = vunpack.c.l.b16 %v507
        %v3372 = vunpack.c.l.b16 %v508
        %v3373 = vunpack.c.l.b16 %v509
        %v3374 = vunpack.c.l.b16 %v510
        %v3375 = vunpack.c.l.b16 %v511
        %v3376 = vunpack.c.l.b16 %v512
        %v3377 = vunpack.c.l.b16 %v513
        %v3378 = vunpack.c.l.b16 %v514
        %v3379 = vpack.c.b16 %v3372, %v3371
        %v3380 = vpack.c.b16 %v3374, %v3373
        %v3381 = vpack.c.b16 %v3376, %v3375
        %v3382 = vpack.c.b16 %v3378, %v3377
        %v3388 = vsel %vm889, %v3354, 0
        %v3391 = vsel %vm889, %v3355, 0
        %v3394 = vsel %vm889, %v3356, 0
        %v3397 = vsel %vm889, %v3357, 0
        %v3400 = vsel %vm889, %v3358, 0
        %v3403 = vsel %vm889, %v3359, 0
        %v3406 = vsel %vm889, %v3360, 0
        %v3409 = vsel %vm889, %v3361, 0
        %3411 = vmatpush.bf16.msra.mxu0 0
        %3412 = vmatpush.bf16.msra.mxu0 0
        %3413 = vmatpush.bf16.msra.mxu0 0
        %3414 = vmatpush.bf16.msra.mxu0 0
        %3415 = vmatpush.bf16.msra.mxu0 %v3382
        %3416 = vmatpush.bf16.msra.mxu0 %v3381
        %3417 = vmatpush.bf16.msra.mxu0 %v3380
        %3418 = vmatpush.bf16.msra.mxu0 %v3379
        %3419 = vmatmul.bf16.gmra.mxu0 %v3388
        %v3420 = vpop.f32.mrf.mxu0
        %v3421 = vadd.f32 %v3362, %v3420
        %v3422 = vpop.f32.mrf.mxu0
        %v3423 = vadd.f32 %v3362, %v3422
        %3424 = vmatmul.bf16.gmra.mxu0 %v3391
        %v3425 = vpop.f32.mrf.mxu0
        %v3426 = vadd.f32 %v3362, %v3425
        %v3427 = vpop.f32.mrf.mxu0
        %v3428 = vadd.f32 %v3362, %v3427
        %3429 = vmatmul.bf16.gmra.mxu0 %v3394
        %v3430 = vpop.f32.mrf.mxu0
        %v3431 = vadd.f32 %v3362, %v3430
        %v3432 = vpop.f32.mrf.mxu0
        %v3433 = vadd.f32 %v3362, %v3432
        %3434 = vmatmul.bf16.gmra.mxu0 %v3397
        %v3435 = vpop.f32.mrf.mxu0
        %v3436 = vadd.f32 %v3362, %v3435
        %v3437 = vpop.f32.mrf.mxu0
        %v3438 = vadd.f32 %v3362, %v3437
        %3439 = vmatmul.bf16.gmra.mxu0 %v3400
        %v3440 = vpop.f32.mrf.mxu0
        %v3441 = vadd.f32 %v3362, %v3440
        %v3442 = vpop.f32.mrf.mxu0
        %v3443 = vadd.f32 %v3362, %v3442
        %3444 = vmatmul.bf16.gmra.mxu0 %v3403
        %v3445 = vpop.f32.mrf.mxu0
        %v3446 = vadd.f32 %v3362, %v3445
        %v3447 = vpop.f32.mrf.mxu0
        %v3448 = vadd.f32 %v3362, %v3447
        %3449 = vmatmul.bf16.gmra.mxu0 %v3406
        %v3450 = vpop.f32.mrf.mxu0
        %v3451 = vadd.f32 %v3362, %v3450
        %v3452 = vpop.f32.mrf.mxu0
        %v3453 = vadd.f32 %v3362, %v3452
        %3454 = vmatmul.bf16.gmra.mxu0 %v3409
        %v3455 = vpop.f32.mrf.mxu0
        %v3456 = vadd.f32 %v3362, %v3455
        %v3457 = vpop.f32.mrf.mxu0
        %v3458 = vadd.f32 %v3362, %v3457
        %3459 = vdwg.mxu0
        %v3460 = vmax.f32 %v3421, 0.0
        %v3461 = vmax.f32 %v3423, 0.0
        %v3462 = vmax.f32 %v3426, 0.0
        %v3463 = vmax.f32 %v3428, 0.0
        %v3464 = vmax.f32 %v3431, 0.0
        %v3465 = vmax.f32 %v3433, 0.0
        %v3466 = vmax.f32 %v3436, 0.0
        %v3467 = vmax.f32 %v3438, 0.0
        %v3468 = vmax.f32 %v3441, 0.0
        %v3469 = vmax.f32 %v3443, 0.0
        %v3470 = vmax.f32 %v3446, 0.0
        %v3471 = vmax.f32 %v3448, 0.0
        %v3472 = vmax.f32 %v3451, 0.0
        %v3473 = vmax.f32 %v3453, 0.0
        %v3474 = vmax.f32 %v3456, 0.0
        %v3475 = vmax.f32 %v3458, 0.0
        %v3476 = vpack.c.bf16 %v3460, %v3460
        %v3477 = vpack.c.bf16 %v3461, %v3461
        %v3478 = vpack.c.bf16 %v3462, %v3462
        %v3479 = vpack.c.bf16 %v3463, %v3463
        %v3480 = vpack.c.bf16 %v3464, %v3464
        %v3481 = vpack.c.bf16 %v3465, %v3465
        %v3482 = vpack.c.bf16 %v3466, %v3466
        %v3483 = vpack.c.bf16 %v3467, %v3467
        %v3484 = vpack.c.bf16 %v3468, %v3468
        %v3485 = vpack.c.bf16 %v3469, %v3469
        %v3486 = vpack.c.bf16 %v3470, %v3470
        %v3487 = vpack.c.bf16 %v3471, %v3471
        %v3488 = vpack.c.bf16 %v3472, %v3472
        %v3489 = vpack.c.bf16 %v3473, %v3473
        %v3490 = vpack.c.bf16 %v3474, %v3474
        %v3491 = vpack.c.bf16 %v3475, %v3475
        %v3492 = vperm.slane %v542, 0
        %v3509 = vunpack.c.l.b16 %v3476
        %v3510 = vunpack.c.l.b16 %v3477
        %v3511 = vunpack.c.l.b16 %v3478
        %v3512 = vunpack.c.l.b16 %v3479
        %v3513 = vunpack.c.l.b16 %v3480
        %v3514 = vunpack.c.l.b16 %v3481
        %v3515 = vunpack.c.l.b16 %v3482
        %v3516 = vunpack.c.l.b16 %v3483
        %v3517 = vunpack.c.l.b16 %v3484
        %v3518 = vunpack.c.l.b16 %v3485
        %v3519 = vunpack.c.l.b16 %v3486
        %v3520 = vunpack.c.l.b16 %v3487
        %v3521 = vunpack.c.l.b16 %v3488
        %v3522 = vunpack.c.l.b16 %v3489
        %v3523 = vunpack.c.l.b16 %v3490
        %v3524 = vunpack.c.l.b16 %v3491
        %v3525 = vpack.c.b16 %v3510, %v3509
        %v3526 = vpack.c.b16 %v3512, %v3511
        %v3527 = vpack.c.b16 %v3514, %v3513
        %v3528 = vpack.c.b16 %v3516, %v3515
        %v3529 = vpack.c.b16 %v3518, %v3517
        %v3530 = vpack.c.b16 %v3520, %v3519
        %v3531 = vpack.c.b16 %v3522, %v3521
        %v3532 = vpack.c.b16 %v3524, %v3523
        %v3537 = vunpack.c.l.b16 %v537
        %v3538 = vunpack.c.l.b16 %v538
        %v3539 = vunpack.c.l.b16 %v539
        %v3540 = vunpack.c.l.b16 %v540
        %v3541 = vpack.c.b16 %v3538, %v3537
        %v3542 = vpack.c.b16 %v3540, %v3539
        %v3546 = vsel %vm1595, %v3525, 0
        %v3549 = vsel %vm1595, %v3526, 0
        %v3552 = vsel %vm1595, %v3527, 0
        %v3555 = vsel %vm1595, %v3528, 0
        %v3558 = vsel %vm1595, %v3529, 0
        %v3561 = vsel %vm1595, %v3530, 0
        %v3564 = vsel %vm1595, %v3531, 0
        %v3567 = vsel %vm1595, %v3532, 0
        %3569 = vmatpush.bf16.msra.mxu0 0
        %3570 = vmatpush.bf16.msra.mxu0 0
        %3571 = vmatpush.bf16.msra.mxu0 0
        %3572 = vmatpush.bf16.msra.mxu0 0
        %3573 = vmatpush.bf16.msra.mxu0 0
        %3574 = vmatpush.bf16.msra.mxu0 0
        %3575 = vmatpush.bf16.msra.mxu0 %v3542
        %3576 = vmatpush.bf16.msra.mxu0 %v3541
        %3577 = vmatmul.bf16.gmra.mxu0 %v3546
        %v3578 = vpop.f32.mrf.mxu0
        %v3579 = vadd.f32 %v3492, %v3578
        %v3580 = vpop.f32.mrf.mxu0
        %v3581 = vadd.f32 %v3492, %v3580
        %3582 = vmatmul.bf16.gmra.mxu0 %v3549
        %v3583 = vpop.f32.mrf.mxu0
        %v3584 = vadd.f32 %v3492, %v3583
        %v3585 = vpop.f32.mrf.mxu0
        %v3586 = vadd.f32 %v3492, %v3585
        %3587 = vmatmul.bf16.gmra.mxu0 %v3552
        %v3588 = vpop.f32.mrf.mxu0
        %v3589 = vadd.f32 %v3492, %v3588
        %v3590 = vpop.f32.mrf.mxu0
        %v3591 = vadd.f32 %v3492, %v3590
        %3592 = vmatmul.bf16.gmra.mxu0 %v3555
        %v3593 = vpop.f32.mrf.mxu0
        %v3594 = vadd.f32 %v3492, %v3593
        %v3595 = vpop.f32.mrf.mxu0
        %v3596 = vadd.f32 %v3492, %v3595
        %3597 = vmatmul.bf16.gmra.mxu0 %v3558
        %v3598 = vpop.f32.mrf.mxu0
        %v3599 = vadd.f32 %v3492, %v3598
        %v3600 = vpop.f32.mrf.mxu0
        %v3601 = vadd.f32 %v3492, %v3600
        %3602 = vmatmul.bf16.gmra.mxu0 %v3561
        %v3603 = vpop.f32.mrf.mxu0
        %v3604 = vadd.f32 %v3492, %v3603
        %v3605 = vpop.f32.mrf.mxu0
        %v3606 = vadd.f32 %v3492, %v3605
        %3607 = vmatmul.bf16.gmra.mxu0 %v3564
        %v3608 = vpop.f32.mrf.mxu0
        %v3609 = vadd.f32 %v3492, %v3608
        %v3610 = vpop.f32.mrf.mxu0
        %v3611 = vadd.f32 %v3492, %v3610
        %3612 = vmatmul.bf16.gmra.mxu0 %v3567
        %v3613 = vpop.f32.mrf.mxu0
        %v3614 = vadd.f32 %v3492, %v3613
        %v3615 = vpop.f32.mrf.mxu0
        %v3616 = vadd.f32 %v3492, %v3615
        %3617 = vdwg.mxu0
        %v3618 = vsel %vm667, %v3579, -inf
        %3619 = vmax.xlane.f32.xlu0 %v3618
        %v3620 = vpop.xlane.xlu0 %3619
        %v3621 = vsel %vm667, %v3581, -inf
        %3622 = vmax.xlane.f32.xlu0 %v3621
        %v3623 = vpop.xlane.xlu0 %3622
        %v3624 = vsel %vm667, %v3584, -inf
        %3625 = vmax.xlane.f32.xlu0 %v3624
        %v3626 = vpop.xlane.xlu0 %3625
        %v3627 = vsel %vm667, %v3586, -inf
        %3628 = vmax.xlane.f32.xlu0 %v3627
        %v3629 = vpop.xlane.xlu0 %3628
        %v3630 = vsel %vm667, %v3589, -inf
        %3631 = vmax.xlane.f32.xlu0 %v3630
        %v3632 = vpop.xlane.xlu0 %3631
        %v3633 = vsel %vm667, %v3591, -inf
        %3634 = vmax.xlane.f32.xlu0 %v3633
        %v3635 = vpop.xlane.xlu0 %3634
        %v3636 = vsel %vm667, %v3594, -inf
        %3637 = vmax.xlane.f32.xlu0 %v3636
        %v3638 = vpop.xlane.xlu0 %3637
        %v3639 = vsel %vm667, %v3596, -inf
        %3640 = vmax.xlane.f32.xlu0 %v3639
        %v3641 = vpop.xlane.xlu0 %3640
        %v3642 = vsel %vm667, %v3599, -inf
        %3643 = vmax.xlane.f32.xlu0 %v3642
        %v3644 = vpop.xlane.xlu0 %3643
        %v3645 = vsel %vm667, %v3601, -inf
        %3646 = vmax.xlane.f32.xlu0 %v3645
        %v3647 = vpop.xlane.xlu0 %3646
        %v3648 = vsel %vm667, %v3604, -inf
        %3649 = vmax.xlane.f32.xlu0 %v3648
        %v3650 = vpop.xlane.xlu0 %3649
        %v3651 = vsel %vm667, %v3606, -inf
        %3652 = vmax.xlane.f32.xlu0 %v3651
        %v3653 = vpop.xlane.xlu0 %3652
        %v3654 = vsel %vm667, %v3609, -inf
        %3655 = vmax.xlane.f32.xlu0 %v3654
        %v3656 = vpop.xlane.xlu0 %3655
        %v3657 = vsel %vm667, %v3611, -inf
        %3658 = vmax.xlane.f32.xlu0 %v3657
        %v3659 = vpop.xlane.xlu0 %3658
        %v3660 = vsel %vm667, %v3614, -inf
        %3661 = vmax.xlane.f32.xlu0 %v3660
        %v3662 = vpop.xlane.xlu0 %3661
        %v3663 = vsel %vm667, %v3616, -inf
        %3664 = vmax.xlane.f32.xlu0 %v3663
        %v3665 = vpop.xlane.xlu0 %3664
        %v3666 = vsub.f32 %v3579, %v3620
        %v3667 = vsub.f32 %v3581, %v3623
        %v3668 = vsub.f32 %v3584, %v3626
        %v3669 = vsub.f32 %v3586, %v3629
        %v3670 = vsub.f32 %v3589, %v3632
        %v3671 = vsub.f32 %v3591, %v3635
        %v3672 = vsub.f32 %v3594, %v3638
        %v3673 = vsub.f32 %v3596, %v3641
        %v3674 = vsub.f32 %v3599, %v3644
        %v3675 = vsub.f32 %v3601, %v3647
        %v3676 = vsub.f32 %v3604, %v3650
        %v3677 = vsub.f32 %v3606, %v3653
        %v3678 = vsub.f32 %v3609, %v3656
        %v3679 = vsub.f32 %v3611, %v3659
        %v3680 = vsub.f32 %v3614, %v3662
        %v3681 = vsub.f32 %v3616, %v3665
        %v3682 = vmul.f32 %v3666, 1.442695
        %v3683 = vpow.pop %v3682
        %v3684 = vmul.f32 %v3667, 1.442695
        %v3685 = vpow.pop %v3684
        %v3686 = vmul.f32 %v3668, 1.442695
        %v3687 = vpow.pop %v3686
        %v3688 = vmul.f32 %v3669, 1.442695
        %v3689 = vpow.pop %v3688
        %v3690 = vmul.f32 %v3670, 1.442695
        %v3691 = vpow.pop %v3690
        %v3692 = vmul.f32 %v3671, 1.442695
        %v3693 = vpow.pop %v3692
        %v3694 = vmul.f32 %v3672, 1.442695
        %v3695 = vpow.pop %v3694
        %v3696 = vmul.f32 %v3673, 1.442695
        %v3697 = vpow.pop %v3696
        %v3698 = vmul.f32 %v3674, 1.442695
        %v3699 = vpow.pop %v3698
        %v3700 = vmul.f32 %v3675, 1.442695
        %v3701 = vpow.pop %v3700
        %v3702 = vmul.f32 %v3676, 1.442695
        %v3703 = vpow.pop %v3702
        %v3704 = vmul.f32 %v3677, 1.442695
        %v3705 = vpow.pop %v3704
        %v3706 = vmul.f32 %v3678, 1.442695
        %v3707 = vpow.pop %v3706
        %v3708 = vmul.f32 %v3679, 1.442695
        %v3709 = vpow.pop %v3708
        %v3710 = vmul.f32 %v3680, 1.442695
        %v3711 = vpow.pop %v3710
        %v3712 = vmul.f32 %v3681, 1.442695
        %v3713 = vpow.pop %v3712
        %v3714 = vsel %vm667, %v3683, 0.0
        %3715 = vadd.xlane.f32.xlu0 %v3714
        %v3716 = vpop.xlane.xlu0 %3715
        %v3717 = vsel %vm667, %v3685, 0.0
        %3718 = vadd.xlane.f32.xlu0 %v3717
        %v3719 = vpop.xlane.xlu0 %3718
        %v3720 = vsel %vm667, %v3687, 0.0
        %3721 = vadd.xlane.f32.xlu0 %v3720
        %v3722 = vpop.xlane.xlu0 %3721
        %v3723 = vsel %vm667, %v3689, 0.0
        %3724 = vadd.xlane.f32.xlu0 %v3723
        %v3725 = vpop.xlane.xlu0 %3724
        %v3726 = vsel %vm667, %v3691, 0.0
        %3727 = vadd.xlane.f32.xlu0 %v3726
        %v3728 = vpop.xlane.xlu0 %3727
        %v3729 = vsel %vm667, %v3693, 0.0
        %3730 = vadd.xlane.f32.xlu0 %v3729
        %v3731 = vpop.xlane.xlu0 %3730
        %v3732 = vsel %vm667, %v3695, 0.0
        %3733 = vadd.xlane.f32.xlu0 %v3732
        %v3734 = vpop.xlane.xlu0 %3733
        %v3735 = vsel %vm667, %v3697, 0.0
        %3736 = vadd.xlane.f32.xlu0 %v3735
        %v3737 = vpop.xlane.xlu0 %3736
        %v3738 = vsel %vm667, %v3699, 0.0
        %3739 = vadd.xlane.f32.xlu0 %v3738
        %v3740 = vpop.xlane.xlu0 %3739
        %v3741 = vsel %vm667, %v3701, 0.0
        %3742 = vadd.xlane.f32.xlu0 %v3741
        %v3743 = vpop.xlane.xlu0 %3742
        %v3744 = vsel %vm667, %v3703, 0.0
        %3745 = vadd.xlane.f32.xlu0 %v3744
        %v3746 = vpop.xlane.xlu0 %3745
        %v3747 = vsel %vm667, %v3705, 0.0
        %3748 = vadd.xlane.f32.xlu0 %v3747
        %v3749 = vpop.xlane.xlu0 %3748
        %v3750 = vsel %vm667, %v3707, 0.0
        %3751 = vadd.xlane.f32.xlu0 %v3750
        %v3752 = vpop.xlane.xlu0 %3751
        %v3753 = vsel %vm667, %v3709, 0.0
        %3754 = vadd.xlane.f32.xlu0 %v3753
        %v3755 = vpop.xlane.xlu0 %3754
        %v3756 = vsel %vm667, %v3711, 0.0
        %3757 = vadd.xlane.f32.xlu0 %v3756
        %v3758 = vpop.xlane.xlu0 %3757
        %v3759 = vsel %vm667, %v3713, 0.0
        %3760 = vadd.xlane.f32.xlu0 %v3759
        %v3761 = vpop.xlane.xlu0 %3760
        %v3762 = vrcp.pop %v3716
        %v3763 = vrcp.pop %v3719
        %v3764 = vrcp.pop %v3722
        %v3765 = vrcp.pop %v3725
        %v3766 = vrcp.pop %v3728
        %v3767 = vrcp.pop %v3731
        %v3768 = vrcp.pop %v3734
        %v3769 = vrcp.pop %v3737
        %v3770 = vrcp.pop %v3740
        %v3771 = vrcp.pop %v3743
        %v3772 = vrcp.pop %v3746
        %v3773 = vrcp.pop %v3749
        %v3774 = vrcp.pop %v3752
        %v3775 = vrcp.pop %v3755
        %v3776 = vrcp.pop %v3758
        %v3777 = vrcp.pop %v3761
        %v3778 = vmul.f32 %v3683, %v3762
        %v3779 = vmul.f32 %v3685, %v3763
        %v3780 = vmul.f32 %v3687, %v3764
        %v3781 = vmul.f32 %v3689, %v3765
        %v3782 = vmul.f32 %v3691, %v3766
        %v3783 = vmul.f32 %v3693, %v3767
        %v3784 = vmul.f32 %v3695, %v3768
        %v3785 = vmul.f32 %v3697, %v3769
        %v3786 = vmul.f32 %v3699, %v3770
        %v3787 = vmul.f32 %v3701, %v3771
        %v3788 = vmul.f32 %v3703, %v3772
        %v3789 = vmul.f32 %v3705, %v3773
        %v3790 = vmul.f32 %v3707, %v3774
        %v3791 = vmul.f32 %v3709, %v3775
        %v3792 = vmul.f32 %v3711, %v3776
        %v3793 = vmul.f32 %v3713, %v3777
        %v3794 = vpack.c.bf16 %v3778, %v3778
        %v3795 = vpack.c.bf16 %v3779, %v3779
        %v3796 = vpack.c.bf16 %v3780, %v3780
        %v3797 = vpack.c.bf16 %v3781, %v3781
        %v3798 = vpack.c.bf16 %v3782, %v3782
        %v3799 = vpack.c.bf16 %v3783, %v3783
        %v3800 = vpack.c.bf16 %v3784, %v3784
        %v3801 = vpack.c.bf16 %v3785, %v3785
        %v3802 = vpack.c.bf16 %v3786, %v3786
        %v3803 = vpack.c.bf16 %v3787, %v3787
        %v3804 = vpack.c.bf16 %v3788, %v3788
        %v3805 = vpack.c.bf16 %v3789, %v3789
        %v3806 = vpack.c.bf16 %v3790, %v3790
        %v3807 = vpack.c.bf16 %v3791, %v3791
        %v3808 = vpack.c.bf16 %v3792, %v3792
        %v3809 = vpack.c.bf16 %v3793, %v3793
        %v3814 = vunpack.c.l.b16 %v3794
        %v3815 = vunpack.c.l.b16 %v3795
        %v3816 = vunpack.c.l.b16 %v3796
        %v3817 = vunpack.c.l.b16 %v3797
        %v3818 = vpack.c.b16 %v3815, %v3814
        %v3819 = vpack.c.b16 %v3817, %v3816
        %3822 = vxpose.xlu0.c.b16.start [1/8] %v3818, 128
        %3823 = vxpose.xlu0.c.b16.cont [2/8] %v3819, 128
        %3824 = vxpose.xlu0.c.b16.cont [3/8] 0, 128
        %3825 = vxpose.xlu0.c.b16.cont [4/8] 0, 128
        %3826 = vxpose.xlu0.c.b16.cont [5/8] 0, 128
        %3827 = vxpose.xlu0.c.b16.cont [6/8] 0, 128
        %3828 = vxpose.xlu0.c.b16.cont [7/8] 0, 128
        %3829 = vxpose.xlu0.c.b16.end [8/8] 0, 128
        %v3830 = vpop.trf.xlu0
        %v3831 = vpop.trf.xlu0
        %v3832 = vpop.trf.xlu0
        %v3833 = vpop.trf.xlu0
        %v3834 = vpop.trf.xlu0
        %v3835 = vpop.trf.xlu0
        %v3836 = vpop.trf.xlu0
        %v3837 = vpop.trf.xlu0
        %v3841 = vsel %vm1595, %v3830, 0
        %3843 = vmatpush.bf16.msra.mxu0 0
        %3844 = vmatpush.bf16.msra.mxu0 0
        %3845 = vmatpush.bf16.msra.mxu0 0
        %3846 = vmatpush.bf16.msra.mxu0 0
        %3847 = vmatpush.bf16.msra.mxu0 0
        %3848 = vmatpush.bf16.msra.mxu0 0
        %3849 = vmatpush.bf16.msra.mxu0 %v3526
        %3850 = vmatpush.bf16.msra.mxu0 %v3525
        %3851 = vmatmul.bf16.gmra.mxu0 %v3841
        %v3852 = vpop.f32.mrf.mxu0
        %v3853 = vadd.f32 0.0, %v3852
        %v3854 = vpop.f32.mrf.mxu0
        %v3855 = vadd.f32 0.0, %v3854
        %3856 = vdwg.mxu0
        %3857 = vmatpush.bf16.msra.mxu0 0
        %3858 = vmatpush.bf16.msra.mxu0 0
        %3859 = vmatpush.bf16.msra.mxu0 0
        %3860 = vmatpush.bf16.msra.mxu0 0
        %3861 = vmatpush.bf16.msra.mxu0 0
        %3862 = vmatpush.bf16.msra.mxu0 0
        %3863 = vmatpush.bf16.msra.mxu0 %v3167
        %3864 = vmatpush.bf16.msra.mxu0 %v3166
        %3865 = vmatmul.bf16.gmra.mxu0 %v3841
        %v3866 = vpop.f32.mrf.mxu0
        %v3867 = vadd.f32 0.0, %v3866
        %v3868 = vpop.f32.mrf.mxu0
        %v3869 = vadd.f32 0.0, %v3868
        %3870 = vdwg.mxu0
        %v3871 = vpack.c.bf16 %v3869, %v3867
        %v3873 = vsel %vm1595, %v3871, 0
        %3875 = vmatpush.bf16.msra.mxu0 0
        %3876 = vmatpush.bf16.msra.mxu0 0
        %3877 = vmatpush.bf16.msra.mxu0 0
        %3878 = vmatpush.bf16.msra.mxu0 0
        %3879 = vmatpush.bf16.msra.mxu0 0
        %3880 = vmatpush.bf16.msra.mxu0 0
        %3881 = vmatpush.bf16.msra.mxu0 %v3819
        %3882 = vmatpush.bf16.msra.mxu0 %v3818
        %3883 = vmatmul.bf16.gmra.mxu0 %v3873
        %v3884 = vpop.f32.mrf.mxu0
        %v3885 = vadd.f32 0.0, %v3884
        %v3886 = vpop.f32.mrf.mxu0
        %v3887 = vadd.f32 0.0, %v3886
        %3888 = vdwg.mxu0
        %v3889 = vsel %vm2298, 0.0, %v3885
        %v3890 = vsel %vm2299, 0.0, %v3887
        %v3891 = vsel %vm667, %v3889, 0.0
        %3892 = vadd.xlane.f32.xlu0 %v3891
        %v3893 = vpop.xlane.xlu0 %3892
        %v3894 = vsel %vm667, %v3890, 0.0
        %3895 = vadd.xlane.f32.xlu0 %v3894
        %v3896 = vpop.xlane.xlu0 %3895
        %v3897 = vrsqrt.pop %v3893
        %v3898 = vmul.f32 %v3897, %v3893
        %v3899 = vmul.f32 %v3898, %v3897
        %v3900 = vmul.f32 0.5, %v3899
        %v3901 = vsub.f32 1.5, %v3900
        %v3902 = vmul.f32 %v3897, %v3901
        %v3903 = vmul.f32 %v3893, %v3902
        %vm3904 = vcmp.eq.f32.partialorder %v3893, inf
        %v3905 = vsel %vm3904, %v3893, %v3903
        %vm3906 = vcmp.eq.f32.partialorder %v3893, 0.0
        %v3907 = vand.u32 %v3893, 2147483648
        %v3908 = vsel %vm3906, %v3907, %v3905
        %v3909 = vrsqrt.pop %v3896
        %v3910 = vmul.f32 %v3909, %v3896
        %v3911 = vmul.f32 %v3910, %v3909
        %v3912 = vmul.f32 0.5, %v3911
        %v3913 = vsub.f32 1.5, %v3912
        %v3914 = vmul.f32 %v3909, %v3913
        %v3915 = vmul.f32 %v3896, %v3914
        %vm3916 = vcmp.eq.f32.partialorder %v3896, inf
        %v3917 = vsel %vm3916, %v3896, %v3915
        %vm3918 = vcmp.eq.f32.partialorder %v3896, 0.0
        %v3919 = vand.u32 %v3896, 2147483648
        %v3920 = vsel %vm3918, %v3919, %v3917
        %v3921 = vadd.f32 %v3908, 1e-15
        %v3922 = vadd.f32 %v3920, 1e-15
        %v3923 = vrcp.pop %v3921
        %v3924 = vrcp.pop %v3922
        %v3925 = vadd.f32 %v3891, %v3894
        %v3926 = vrot.slane %v3925, 4
        %v3927 = vadd.f32 %v3925, %v3926
        %v3928 = vrot.slane %v3927, 2
        %v3929 = vadd.f32 %v3927, %v3928
        %v3930 = vrot.slane %v3929, 1
        %v3931 = vadd.f32 %v3929, %v3930
        %v3932 = vrsqrt.pop %v3931
        %v3933 = vmul.f32 %v3932, %v3931
        %v3934 = vmul.f32 %v3933, %v3932
        %v3935 = vmul.f32 0.5, %v3934
        %v3936 = vsub.f32 1.5, %v3935
        %v3937 = vmul.f32 %v3932, %v3936
        %v3938 = vmul.f32 %v3931, %v3937
        %vm3939 = vcmp.eq.f32.partialorder %v3931, inf
        %v3940 = vsel %vm3939, %v3931, %v3938
        %vm3941 = vcmp.eq.f32.partialorder %v3931, 0.0
        %v3942 = vand.u32 %v3931, 2147483648
        %v3943 = vsel %vm3941, %v3942, %v3940
        %v3944 = vadd.f32 %v3943, 1e-15
        %v3945 = vrcp.pop %v3944
        %v3946 = vmul.f32 %v3889, %v3923
        %v3947 = vmul.f32 %v3890, %v3924
        %v3948 = vmul.f32 %v3946, %v3945
        %v3949 = vmul.f32 %v3947, %v3945
        %v3954 = vunpack.c.l.b16 %v3798
        %v3955 = vunpack.c.l.b16 %v3799
        %v3956 = vunpack.c.l.b16 %v3800
        %v3957 = vunpack.c.l.b16 %v3801
        %v3958 = vpack.c.b16 %v3955, %v3954
        %v3959 = vpack.c.b16 %v3957, %v3956
        %3962 = vxpose.xlu0.c.b16.start [1/8] %v3958, 128
        %3963 = vxpose.xlu0.c.b16.cont [2/8] %v3959, 128
        %3964 = vxpose.xlu0.c.b16.cont [3/8] 0, 128
        %3965 = vxpose.xlu0.c.b16.cont [4/8] 0, 128
        %3966 = vxpose.xlu0.c.b16.cont [5/8] 0, 128
        %3967 = vxpose.xlu0.c.b16.cont [6/8] 0, 128
        %3968 = vxpose.xlu0.c.b16.cont [7/8] 0, 128
        %3969 = vxpose.xlu0.c.b16.end [8/8] 0, 128
        %v3970 = vpop.trf.xlu0
        %v3971 = vpop.trf.xlu0
        %v3972 = vpop.trf.xlu0
        %v3973 = vpop.trf.xlu0
        %v3974 = vpop.trf.xlu0
        %v3975 = vpop.trf.xlu0
        %v3976 = vpop.trf.xlu0
        %v3977 = vpop.trf.xlu0
        %v3981 = vsel %vm1595, %v3970, 0
        %3983 = vmatpush.bf16.msra.mxu0 0
        %3984 = vmatpush.bf16.msra.mxu0 0
        %3985 = vmatpush.bf16.msra.mxu0 0
        %3986 = vmatpush.bf16.msra.mxu0 0
        %3987 = vmatpush.bf16.msra.mxu0 0
        %3988 = vmatpush.bf16.msra.mxu0 0
        %3989 = vmatpush.bf16.msra.mxu0 %v3528
        %3990 = vmatpush.bf16.msra.mxu0 %v3527
        %3991 = vmatmul.bf16.gmra.mxu0 %v3981
        %v3992 = vpop.f32.mrf.mxu0
        %v3993 = vadd.f32 0.0, %v3992
        %v3994 = vpop.f32.mrf.mxu0
        %v3995 = vadd.f32 0.0, %v3994
        %3996 = vdwg.mxu0
        %3997 = vmatpush.bf16.msra.mxu0 0
        %3998 = vmatpush.bf16.msra.mxu0 0
        %3999 = vmatpush.bf16.msra.mxu0 0
        %4000 = vmatpush.bf16.msra.mxu0 0
        %4001 = vmatpush.bf16.msra.mxu0 0
        %4002 = vmatpush.bf16.msra.mxu0 0
        %4003 = vmatpush.bf16.msra.mxu0 %v3169
        %4004 = vmatpush.bf16.msra.mxu0 %v3168
        %4005 = vmatmul.bf16.gmra.mxu0 %v3981
        %v4006 = vpop.f32.mrf.mxu0
        %v4007 = vadd.f32 0.0, %v4006
        %v4008 = vpop.f32.mrf.mxu0
        %v4009 = vadd.f32 0.0, %v4008
        %4010 = vdwg.mxu0
        %v4011 = vpack.c.bf16 %v4009, %v4007
        %v4013 = vsel %vm1595, %v4011, 0
        %4015 = vmatpush.bf16.msra.mxu0 0
        %4016 = vmatpush.bf16.msra.mxu0 0
        %4017 = vmatpush.bf16.msra.mxu0 0
        %4018 = vmatpush.bf16.msra.mxu0 0
        %4019 = vmatpush.bf16.msra.mxu0 0
        %4020 = vmatpush.bf16.msra.mxu0 0
        %4021 = vmatpush.bf16.msra.mxu0 %v3959
        %4022 = vmatpush.bf16.msra.mxu0 %v3958
        %4023 = vmatmul.bf16.gmra.mxu0 %v4013
        %v4024 = vpop.f32.mrf.mxu0
        %v4025 = vadd.f32 0.0, %v4024
        %v4026 = vpop.f32.mrf.mxu0
        %v4027 = vadd.f32 0.0, %v4026
        %4028 = vdwg.mxu0
        %v4029 = vsel %vm2298, 0.0, %v4025
        %v4030 = vsel %vm2299, 0.0, %v4027
        %v4031 = vsel %vm667, %v4029, 0.0
        %4032 = vadd.xlane.f32.xlu0 %v4031
        %v4033 = vpop.xlane.xlu0 %4032
        %v4034 = vsel %vm667, %v4030, 0.0
        %4035 = vadd.xlane.f32.xlu0 %v4034
        %v4036 = vpop.xlane.xlu0 %4035
        %v4037 = vrsqrt.pop %v4033
        %v4038 = vmul.f32 %v4037, %v4033
        %v4039 = vmul.f32 %v4038, %v4037
        %v4040 = vmul.f32 0.5, %v4039
        %v4041 = vsub.f32 1.5, %v4040
        %v4042 = vmul.f32 %v4037, %v4041
        %v4043 = vmul.f32 %v4033, %v4042
        %vm4044 = vcmp.eq.f32.partialorder %v4033, inf
        %v4045 = vsel %vm4044, %v4033, %v4043
        %vm4046 = vcmp.eq.f32.partialorder %v4033, 0.0
        %v4047 = vand.u32 %v4033, 2147483648
        %v4048 = vsel %vm4046, %v4047, %v4045
        %v4049 = vrsqrt.pop %v4036
        %v4050 = vmul.f32 %v4049, %v4036
        %v4051 = vmul.f32 %v4050, %v4049
        %v4052 = vmul.f32 0.5, %v4051
        %v4053 = vsub.f32 1.5, %v4052
        %v4054 = vmul.f32 %v4049, %v4053
        %v4055 = vmul.f32 %v4036, %v4054
        %vm4056 = vcmp.eq.f32.partialorder %v4036, inf
        %v4057 = vsel %vm4056, %v4036, %v4055
        %vm4058 = vcmp.eq.f32.partialorder %v4036, 0.0
        %v4059 = vand.u32 %v4036, 2147483648
        %v4060 = vsel %vm4058, %v4059, %v4057
        %v4061 = vadd.f32 %v4048, 1e-15
        %v4062 = vadd.f32 %v4060, 1e-15
        %v4063 = vrcp.pop %v4061
        %v4064 = vrcp.pop %v4062
        %v4065 = vadd.f32 %v4031, %v4034
        %v4066 = vrot.slane %v4065, 4
        %v4067 = vadd.f32 %v4065, %v4066
        %v4068 = vrot.slane %v4067, 2
        %v4069 = vadd.f32 %v4067, %v4068
        %v4070 = vrot.slane %v4069, 1
        %v4071 = vadd.f32 %v4069, %v4070
        %v4072 = vrsqrt.pop %v4071
        %v4073 = vmul.f32 %v4072, %v4071
        %v4074 = vmul.f32 %v4073, %v4072
        %v4075 = vmul.f32 0.5, %v4074
        %v4076 = vsub.f32 1.5, %v4075
        %v4077 = vmul.f32 %v4072, %v4076
        %v4078 = vmul.f32 %v4071, %v4077
        %vm4079 = vcmp.eq.f32.partialorder %v4071, inf
        %v4080 = vsel %vm4079, %v4071, %v4078
        %vm4081 = vcmp.eq.f32.partialorder %v4071, 0.0
        %v4082 = vand.u32 %v4071, 2147483648
        %v4083 = vsel %vm4081, %v4082, %v4080
        %v4084 = vadd.f32 %v4083, 1e-15
        %v4085 = vrcp.pop %v4084
        %v4086 = vmul.f32 %v4029, %v4063
        %v4087 = vmul.f32 %v4030, %v4064
        %v4088 = vmul.f32 %v4086, %v4085
        %v4089 = vmul.f32 %v4087, %v4085
        %v4094 = vunpack.c.l.b16 %v3802
        %v4095 = vunpack.c.l.b16 %v3803
        %v4096 = vunpack.c.l.b16 %v3804
        %v4097 = vunpack.c.l.b16 %v3805
        %v4098 = vpack.c.b16 %v4095, %v4094
        %v4099 = vpack.c.b16 %v4097, %v4096
        %4102 = vxpose.xlu0.c.b16.start [1/8] %v4098, 128
        %4103 = vxpose.xlu0.c.b16.cont [2/8] %v4099, 128
        %4104 = vxpose.xlu0.c.b16.cont [3/8] 0, 128
        %4105 = vxpose.xlu0.c.b16.cont [4/8] 0, 128
        %4106 = vxpose.xlu0.c.b16.cont [5/8] 0, 128
        %4107 = vxpose.xlu0.c.b16.cont [6/8] 0, 128
        %4108 = vxpose.xlu0.c.b16.cont [7/8] 0, 128
        %4109 = vxpose.xlu0.c.b16.end [8/8] 0, 128
        %v4110 = vpop.trf.xlu0
        %v4111 = vpop.trf.xlu0
        %v4112 = vpop.trf.xlu0
        %v4113 = vpop.trf.xlu0
        %v4114 = vpop.trf.xlu0
        %v4115 = vpop.trf.xlu0
        %v4116 = vpop.trf.xlu0
        %v4117 = vpop.trf.xlu0
        %v4121 = vsel %vm1595, %v4110, 0
        %4123 = vmatpush.bf16.msra.mxu0 0
        %4124 = vmatpush.bf16.msra.mxu0 0
        %4125 = vmatpush.bf16.msra.mxu0 0
        %4126 = vmatpush.bf16.msra.mxu0 0
        %4127 = vmatpush.bf16.msra.mxu0 0
        %4128 = vmatpush.bf16.msra.mxu0 0
        %4129 = vmatpush.bf16.msra.mxu0 %v3530
        %4130 = vmatpush.bf16.msra.mxu0 %v3529
        %4131 = vmatmul.bf16.gmra.mxu0 %v4121
        %v4132 = vpop.f32.mrf.mxu0
        %v4133 = vadd.f32 0.0, %v4132
        %v4134 = vpop.f32.mrf.mxu0
        %v4135 = vadd.f32 0.0, %v4134
        %4136 = vdwg.mxu0
        %4137 = vmatpush.bf16.msra.mxu0 0
        %4138 = vmatpush.bf16.msra.mxu0 0
        %4139 = vmatpush.bf16.msra.mxu0 0
        %4140 = vmatpush.bf16.msra.mxu0 0
        %4141 = vmatpush.bf16.msra.mxu0 0
        %4142 = vmatpush.bf16.msra.mxu0 0
        %4143 = vmatpush.bf16.msra.mxu0 %v3171
        %4144 = vmatpush.bf16.msra.mxu0 %v3170
        %4145 = vmatmul.bf16.gmra.mxu0 %v4121
        %v4146 = vpop.f32.mrf.mxu0
        %v4147 = vadd.f32 0.0, %v4146
        %v4148 = vpop.f32.mrf.mxu0
        %v4149 = vadd.f32 0.0, %v4148
        %4150 = vdwg.mxu0
        %v4151 = vpack.c.bf16 %v4149, %v4147
        %v4153 = vsel %vm1595, %v4151, 0
        %4155 = vmatpush.bf16.msra.mxu0 0
        %4156 = vmatpush.bf16.msra.mxu0 0
        %4157 = vmatpush.bf16.msra.mxu0 0
        %4158 = vmatpush.bf16.msra.mxu0 0
        %4159 = vmatpush.bf16.msra.mxu0 0
        %4160 = vmatpush.bf16.msra.mxu0 0
        %4161 = vmatpush.bf16.msra.mxu0 %v4099
        %4162 = vmatpush.bf16.msra.mxu0 %v4098
        %4163 = vmatmul.bf16.gmra.mxu0 %v4153
        %v4164 = vpop.f32.mrf.mxu0
        %v4165 = vadd.f32 0.0, %v4164
        %v4166 = vpop.f32.mrf.mxu0
        %v4167 = vadd.f32 0.0, %v4166
        %4168 = vdwg.mxu0
        %v4169 = vsel %vm2298, 0.0, %v4165
        %v4170 = vsel %vm2299, 0.0, %v4167
        %v4171 = vsel %vm667, %v4169, 0.0
        %4172 = vadd.xlane.f32.xlu0 %v4171
        %v4173 = vpop.xlane.xlu0 %4172
        %v4174 = vsel %vm667, %v4170, 0.0
        %4175 = vadd.xlane.f32.xlu0 %v4174
        %v4176 = vpop.xlane.xlu0 %4175
        %v4177 = vrsqrt.pop %v4173
        %v4178 = vmul.f32 %v4177, %v4173
        %v4179 = vmul.f32 %v4178, %v4177
        %v4180 = vmul.f32 0.5, %v4179
        %v4181 = vsub.f32 1.5, %v4180
        %v4182 = vmul.f32 %v4177, %v4181
        %v4183 = vmul.f32 %v4173, %v4182
        %vm4184 = vcmp.eq.f32.partialorder %v4173, inf
        %v4185 = vsel %vm4184, %v4173, %v4183
        %vm4186 = vcmp.eq.f32.partialorder %v4173, 0.0
        %v4187 = vand.u32 %v4173, 2147483648
        %v4188 = vsel %vm4186, %v4187, %v4185
        %v4189 = vrsqrt.pop %v4176
        %v4190 = vmul.f32 %v4189, %v4176
        %v4191 = vmul.f32 %v4190, %v4189
        %v4192 = vmul.f32 0.5, %v4191
        %v4193 = vsub.f32 1.5, %v4192
        %v4194 = vmul.f32 %v4189, %v4193
        %v4195 = vmul.f32 %v4176, %v4194
        %vm4196 = vcmp.eq.f32.partialorder %v4176, inf
        %v4197 = vsel %vm4196, %v4176, %v4195
        %vm4198 = vcmp.eq.f32.partialorder %v4176, 0.0
        %v4199 = vand.u32 %v4176, 2147483648
        %v4200 = vsel %vm4198, %v4199, %v4197
        %v4201 = vadd.f32 %v4188, 1e-15
        %v4202 = vadd.f32 %v4200, 1e-15
        %v4203 = vrcp.pop %v4201
        %v4204 = vrcp.pop %v4202
        %v4205 = vadd.f32 %v4171, %v4174
        %v4206 = vrot.slane %v4205, 4
        %v4207 = vadd.f32 %v4205, %v4206
        %v4208 = vrot.slane %v4207, 2
        %v4209 = vadd.f32 %v4207, %v4208
        %v4210 = vrot.slane %v4209, 1
        %v4211 = vadd.f32 %v4209, %v4210
        %v4212 = vrsqrt.pop %v4211
        %v4213 = vmul.f32 %v4212, %v4211
        %v4214 = vmul.f32 %v4213, %v4212
        %v4215 = vmul.f32 0.5, %v4214
        %v4216 = vsub.f32 1.5, %v4215
        %v4217 = vmul.f32 %v4212, %v4216
        %v4218 = vmul.f32 %v4211, %v4217
        %vm4219 = vcmp.eq.f32.partialorder %v4211, inf
        %v4220 = vsel %vm4219, %v4211, %v4218
        %vm4221 = vcmp.eq.f32.partialorder %v4211, 0.0
        %v4222 = vand.u32 %v4211, 2147483648
        %v4223 = vsel %vm4221, %v4222, %v4220
        %v4224 = vadd.f32 %v4223, 1e-15
        %v4225 = vrcp.pop %v4224
        %v4226 = vmul.f32 %v4169, %v4203
        %v4227 = vmul.f32 %v4170, %v4204
        %v4228 = vmul.f32 %v4226, %v4225
        %v4229 = vmul.f32 %v4227, %v4225
        %v4234 = vunpack.c.l.b16 %v3806
        %v4235 = vunpack.c.l.b16 %v3807
        %v4236 = vunpack.c.l.b16 %v3808
        %v4237 = vunpack.c.l.b16 %v3809
        %v4238 = vpack.c.b16 %v4235, %v4234
        %v4239 = vpack.c.b16 %v4237, %v4236
        %4242 = vxpose.xlu0.c.b16.start [1/8] %v4238, 128
        %4243 = vxpose.xlu0.c.b16.cont [2/8] %v4239, 128
        %4244 = vxpose.xlu0.c.b16.cont [3/8] 0, 128
        %4245 = vxpose.xlu0.c.b16.cont [4/8] 0, 128
        %4246 = vxpose.xlu0.c.b16.cont [5/8] 0, 128
        %4247 = vxpose.xlu0.c.b16.cont [6/8] 0, 128
        %4248 = vxpose.xlu0.c.b16.cont [7/8] 0, 128
        %4249 = vxpose.xlu0.c.b16.end [8/8] 0, 128
        %v4250 = vpop.trf.xlu0
        %v4251 = vpop.trf.xlu0
        %v4252 = vpop.trf.xlu0
        %v4253 = vpop.trf.xlu0
        %v4254 = vpop.trf.xlu0
        %v4255 = vpop.trf.xlu0
        %v4256 = vpop.trf.xlu0
        %v4257 = vpop.trf.xlu0
        %v4261 = vsel %vm1595, %v4250, 0
        %4263 = vmatpush.bf16.msra.mxu0 0
        %4264 = vmatpush.bf16.msra.mxu0 0
        %4265 = vmatpush.bf16.msra.mxu0 0
        %4266 = vmatpush.bf16.msra.mxu0 0
        %4267 = vmatpush.bf16.msra.mxu0 0
        %4268 = vmatpush.bf16.msra.mxu0 0
        %4269 = vmatpush.bf16.msra.mxu0 %v3532
        %4270 = vmatpush.bf16.msra.mxu0 %v3531
        %4271 = vmatmul.bf16.gmra.mxu0 %v4261
        %v4272 = vpop.f32.mrf.mxu0
        %v4273 = vadd.f32 0.0, %v4272
        %v4274 = vpop.f32.mrf.mxu0
        %v4275 = vadd.f32 0.0, %v4274
        %4276 = vdwg.mxu0
        %4277 = vmatpush.bf16.msra.mxu0 0
        %4278 = vmatpush.bf16.msra.mxu0 0
        %4279 = vmatpush.bf16.msra.mxu0 0
        %4280 = vmatpush.bf16.msra.mxu0 0
        %4281 = vmatpush.bf16.msra.mxu0 0
        %4282 = vmatpush.bf16.msra.mxu0 0
        %4283 = vmatpush.bf16.msra.mxu0 %v3173
        %4284 = vmatpush.bf16.msra.mxu0 %v3172
        %4285 = vmatmul.bf16.gmra.mxu0 %v4261
        %v4286 = vpop.f32.mrf.mxu0
        %v4287 = vadd.f32 0.0, %v4286
        %v4288 = vpop.f32.mrf.mxu0
        %v4289 = vadd.f32 0.0, %v4288
        %4290 = vdwg.mxu0
        %v4291 = vpack.c.bf16 %v4289, %v4287
        %v4293 = vsel %vm1595, %v4291, 0
        %4295 = vmatpush.bf16.msra.mxu0 0
        %4296 = vmatpush.bf16.msra.mxu0 0
        %4297 = vmatpush.bf16.msra.mxu0 0
        %4298 = vmatpush.bf16.msra.mxu0 0
        %4299 = vmatpush.bf16.msra.mxu0 0
        %4300 = vmatpush.bf16.msra.mxu0 0
        %4301 = vmatpush.bf16.msra.mxu0 %v4239
        %4302 = vmatpush.bf16.msra.mxu0 %v4238
        %4303 = vmatmul.bf16.gmra.mxu0 %v4293
        %v4304 = vpop.f32.mrf.mxu0
        %v4305 = vadd.f32 0.0, %v4304
        %v4306 = vpop.f32.mrf.mxu0
        %v4307 = vadd.f32 0.0, %v4306
        %4308 = vdwg.mxu0
        %v4309 = vsel %vm2298, 0.0, %v4305
        %v4310 = vsel %vm2299, 0.0, %v4307
        %v4311 = vsel %vm667, %v4309, 0.0
        %4312 = vadd.xlane.f32.xlu0 %v4311
        %v4313 = vpop.xlane.xlu0 %4312
        %v4314 = vsel %vm667, %v4310, 0.0
        %4315 = vadd.xlane.f32.xlu0 %v4314
        %v4316 = vpop.xlane.xlu0 %4315
        %v4317 = vrsqrt.pop %v4313
        %v4318 = vmul.f32 %v4317, %v4313
        %v4319 = vmul.f32 %v4318, %v4317
        %v4320 = vmul.f32 0.5, %v4319
        %v4321 = vsub.f32 1.5, %v4320
        %v4322 = vmul.f32 %v4317, %v4321
        %v4323 = vmul.f32 %v4313, %v4322
        %vm4324 = vcmp.eq.f32.partialorder %v4313, inf
        %v4325 = vsel %vm4324, %v4313, %v4323
        %vm4326 = vcmp.eq.f32.partialorder %v4313, 0.0
        %v4327 = vand.u32 %v4313, 2147483648
        %v4328 = vsel %vm4326, %v4327, %v4325
        %v4329 = vrsqrt.pop %v4316
        %v4330 = vmul.f32 %v4329, %v4316
        %v4331 = vmul.f32 %v4330, %v4329
        %v4332 = vmul.f32 0.5, %v4331
        %v4333 = vsub.f32 1.5, %v4332
        %v4334 = vmul.f32 %v4329, %v4333
        %v4335 = vmul.f32 %v4316, %v4334
        %vm4336 = vcmp.eq.f32.partialorder %v4316, inf
        %v4337 = vsel %vm4336, %v4316, %v4335
        %vm4338 = vcmp.eq.f32.partialorder %v4316, 0.0
        %v4339 = vand.u32 %v4316, 2147483648
        %v4340 = vsel %vm4338, %v4339, %v4337
        %v4341 = vadd.f32 %v4328, 1e-15
        %v4342 = vadd.f32 %v4340, 1e-15
        %v4343 = vrcp.pop %v4341
        %v4344 = vrcp.pop %v4342
        %v4345 = vadd.f32 %v4311, %v4314
        %v4346 = vrot.slane %v4345, 4
        %v4347 = vadd.f32 %v4345, %v4346
        %v4348 = vrot.slane %v4347, 2
        %v4349 = vadd.f32 %v4347, %v4348
        %v4350 = vrot.slane %v4349, 1
        %v4351 = vadd.f32 %v4349, %v4350
        %v4352 = vrsqrt.pop %v4351
        %v4353 = vmul.f32 %v4352, %v4351
        %v4354 = vmul.f32 %v4353, %v4352
        %v4355 = vmul.f32 0.5, %v4354
        %v4356 = vsub.f32 1.5, %v4355
        %v4357 = vmul.f32 %v4352, %v4356
        %v4358 = vmul.f32 %v4351, %v4357
        %vm4359 = vcmp.eq.f32.partialorder %v4351, inf
        %v4360 = vsel %vm4359, %v4351, %v4358
        %vm4361 = vcmp.eq.f32.partialorder %v4351, 0.0
        %v4362 = vand.u32 %v4351, 2147483648
        %v4363 = vsel %vm4361, %v4362, %v4360
        %v4364 = vadd.f32 %v4363, 1e-15
        %v4365 = vrcp.pop %v4364
        %v4366 = vmul.f32 %v4309, %v4343
        %v4367 = vmul.f32 %v4310, %v4344
        %v4368 = vmul.f32 %v4366, %v4365
        %v4369 = vmul.f32 %v4367, %v4365
        %v4370 = vpack.c.bf16 %v3949, %v3948
        %v4371 = vpack.c.bf16 %v3855, %v3853
        %v4373 = vsel %vm667, %v4370, 0
        %4375 = vmatpush.bf16.msra.mxu0 0
        %4376 = vmatpush.bf16.msra.mxu0 0
        %4377 = vmatpush.bf16.msra.mxu0 0
        %4378 = vmatpush.bf16.msra.mxu0 0
        %4379 = vmatpush.bf16.msra.mxu0 0
        %4380 = vmatpush.bf16.msra.mxu0 0
        %4381 = vmatpush.bf16.msra.mxu0 0
        %4382 = vmatpush.bf16.msra.mxu0 %v4371
        %4383 = vmatmul.bf16.gmra.mxu0 %v4373
        %v4384 = vpop.f32.mrf.mxu0
        %v4385 = vadd.f32 0.0, %v4384
        %v4386 = vpop.f32.mrf.mxu0
        %v4387 = vadd.f32 0.0, %v4386
        %4388 = vdwg.mxu0
        %v4389 = vpack.c.bf16 %v4089, %v4088
        %v4390 = vpack.c.bf16 %v3995, %v3993
        %v4392 = vsel %vm667, %v4389, 0
        %4394 = vmatpush.bf16.msra.mxu0 0
        %4395 = vmatpush.bf16.msra.mxu0 0
        %4396 = vmatpush.bf16.msra.mxu0 0
        %4397 = vmatpush.bf16.msra.mxu0 0
        %4398 = vmatpush.bf16.msra.mxu0 0
        %4399 = vmatpush.bf16.msra.mxu0 0
        %4400 = vmatpush.bf16.msra.mxu0 0
        %4401 = vmatpush.bf16.msra.mxu0 %v4390
        %4402 = vmatmul.bf16.gmra.mxu0 %v4392
        %v4403 = vpop.f32.mrf.mxu0
        %v4404 = vadd.f32 0.0, %v4403
        %v4405 = vpop.f32.mrf.mxu0
        %v4406 = vadd.f32 0.0, %v4405
        %4407 = vdwg.mxu0
        %v4408 = vpack.c.bf16 %v4229, %v4228
        %v4409 = vpack.c.bf16 %v4135, %v4133
        %v4411 = vsel %vm667, %v4408, 0
        %4413 = vmatpush.bf16.msra.mxu0 0
        %4414 = vmatpush.bf16.msra.mxu0 0
        %4415 = vmatpush.bf16.msra.mxu0 0
        %4416 = vmatpush.bf16.msra.mxu0 0
        %4417 = vmatpush.bf16.msra.mxu0 0
        %4418 = vmatpush.bf16.msra.mxu0 0
        %4419 = vmatpush.bf16.msra.mxu0 0
        %4420 = vmatpush.bf16.msra.mxu0 %v4409
        %4421 = vmatmul.bf16.gmra.mxu0 %v4411
        %v4422 = vpop.f32.mrf.mxu0
        %v4423 = vadd.f32 0.0, %v4422
        %v4424 = vpop.f32.mrf.mxu0
        %v4425 = vadd.f32 0.0, %v4424
        %4426 = vdwg.mxu0
        %v4427 = vpack.c.bf16 %v4369, %v4368
        %v4428 = vpack.c.bf16 %v4275, %v4273
        %v4430 = vsel %vm667, %v4427, 0
        %4432 = vmatpush.bf16.msra.mxu0 0
        %4433 = vmatpush.bf16.msra.mxu0 0
        %4434 = vmatpush.bf16.msra.mxu0 0
        %4435 = vmatpush.bf16.msra.mxu0 0
        %4436 = vmatpush.bf16.msra.mxu0 0
        %4437 = vmatpush.bf16.msra.mxu0 0
        %4438 = vmatpush.bf16.msra.mxu0 0
        %4439 = vmatpush.bf16.msra.mxu0 %v4428
        %4440 = vmatmul.bf16.gmra.mxu0 %v4430
        %v4441 = vpop.f32.mrf.mxu0
        %v4442 = vadd.f32 0.0, %v4441
        %v4443 = vpop.f32.mrf.mxu0
        %v4444 = vadd.f32 0.0, %v4443
        %4445 = vdwg.mxu0
        %4454 = vrot.lane.b32.xlu0 %v3853, 32
        %v4455 = vpop.permute.xlu0 %4454
        %4456 = vrot.lane.b32.xlu0 %v3855, 32
        %v4457 = vpop.permute.xlu0 %4456
        %4458 = vrot.lane.b32.xlu0 %v3993, 32
        %v4459 = vpop.permute.xlu0 %4458
        %4460 = vrot.lane.b32.xlu0 %v3995, 32
        %v4461 = vpop.permute.xlu0 %4460
        %4462 = vrot.lane.b32.xlu0 %v4133, 32
        %v4463 = vpop.permute.xlu0 %4462
        %4464 = vrot.lane.b32.xlu0 %v4135, 32
        %v4465 = vpop.permute.xlu0 %4464
        %4466 = vrot.lane.b32.xlu0 %v4273, 32
        %v4467 = vpop.permute.xlu0 %4466
        %4468 = vrot.lane.b32.xlu0 %v4275, 32
        %v4469 = vpop.permute.xlu0 %4468
        %v4478 = vsel %vm1595, %v4385, %v4455
        %v4479 = vsel %vm1595, %v4387, %v4457
        %v4480 = vsel %vm1595, %v4404, %v4459
        %v4481 = vsel %vm1595, %v4406, %v4461
        %v4482 = vsel %vm1595, %v4423, %v4463
        %v4483 = vsel %vm1595, %v4425, %v4465
        %v4484 = vsel %vm1595, %v4442, %v4467
        %v4485 = vsel %vm1595, %v4444, %v4469
        %v4486 = vpack.c.bf16 %v4479, %v4478
        %v4487 = vpack.c.bf16 %v4481, %v4480
        %v4488 = vpack.c.bf16 %v4483, %v4482
        %v4489 = vpack.c.bf16 %v4485, %v4484
        %v4490 = vperm.slane %v529, 0
        %v4499 = vunpack.c.l.b16 %v515
        %v4500 = vunpack.c.l.b16 %v516
        %v4501 = vunpack.c.l.b16 %v517
        %v4502 = vunpack.c.l.b16 %v518
        %v4503 = vunpack.c.l.b16 %v519
        %v4504 = vunpack.c.l.b16 %v520
        %v4505 = vunpack.c.l.b16 %v521
        %v4506 = vunpack.c.l.b16 %v522
        %v4507 = vpack.c.b16 %v4500, %v4499
        %v4508 = vpack.c.b16 %v4502, %v4501
        %v4509 = vpack.c.b16 %v4504, %v4503
        %v4510 = vpack.c.b16 %v4506, %v4505
        %v4516 = vsel %vm889, %v4486, 0
        %v4519 = vsel %vm889, %v4487, 0
        %v4522 = vsel %vm889, %v4488, 0
        %v4525 = vsel %vm889, %v4489, 0
        %4527 = vmatpush.bf16.msra.mxu0 0
        %4528 = vmatpush.bf16.msra.mxu0 0
        %4529 = vmatpush.bf16.msra.mxu0 0
        %4530 = vmatpush.bf16.msra.mxu0 0
        %4531 = vmatpush.bf16.msra.mxu0 %v4510
        %4532 = vmatpush.bf16.msra.mxu0 %v4509
        %4533 = vmatpush.bf16.msra.mxu0 %v4508
        %4534 = vmatpush.bf16.msra.mxu0 %v4507
        %4535 = vmatmul.bf16.gmra.mxu0 %v4516
        %v4536 = vpop.f32.mrf.mxu0
        %v4537 = vadd.f32 %v4490, %v4536
        %v4538 = vpop.f32.mrf.mxu0
        %v4539 = vadd.f32 %v4490, %v4538
        %4540 = vmatmul.bf16.gmra.mxu0 %v4519
        %v4541 = vpop.f32.mrf.mxu0
        %v4542 = vadd.f32 %v4490, %v4541
        %v4543 = vpop.f32.mrf.mxu0
        %v4544 = vadd.f32 %v4490, %v4543
        %4545 = vmatmul.bf16.gmra.mxu0 %v4522
        %v4546 = vpop.f32.mrf.mxu0
        %v4547 = vadd.f32 %v4490, %v4546
        %v4548 = vpop.f32.mrf.mxu0
        %v4549 = vadd.f32 %v4490, %v4548
        %4550 = vmatmul.bf16.gmra.mxu0 %v4525
        %v4551 = vpop.f32.mrf.mxu0
        %v4552 = vadd.f32 %v4490, %v4551
        %v4553 = vpop.f32.mrf.mxu0
        %v4554 = vadd.f32 %v4490, %v4553
        %4555 = vdwg.mxu0
        %v4556 = vsel %vm1595, %v4537, 0.0
        %v4557 = vsel %vm1595, %v4539, 0.0
        %v4558 = vadd.f32 %v4556, %v4557
        %v4559 = vrot.slane %v4558, 4
        %v4560 = vadd.f32 %v4558, %v4559
        %v4561 = vrot.slane %v4560, 2
        %v4562 = vadd.f32 %v4560, %v4561
        %v4563 = vrot.slane %v4562, 1
        %v4564 = vadd.f32 %v4562, %v4563
        %v4565 = vsel %vm1595, %v4542, 0.0
        %v4566 = vsel %vm1595, %v4544, 0.0
        %v4567 = vadd.f32 %v4565, %v4566
        %v4568 = vrot.slane %v4567, 4
        %v4569 = vadd.f32 %v4567, %v4568
        %v4570 = vrot.slane %v4569, 2
        %v4571 = vadd.f32 %v4569, %v4570
        %v4572 = vrot.slane %v4571, 1
        %v4573 = vadd.f32 %v4571, %v4572
        %v4574 = vsel %vm1595, %v4547, 0.0
        %v4575 = vsel %vm1595, %v4549, 0.0
        %v4576 = vadd.f32 %v4574, %v4575
        %v4577 = vrot.slane %v4576, 4
        %v4578 = vadd.f32 %v4576, %v4577
        %v4579 = vrot.slane %v4578, 2
        %v4580 = vadd.f32 %v4578, %v4579
        %v4581 = vrot.slane %v4580, 1
        %v4582 = vadd.f32 %v4580, %v4581
        %v4583 = vsel %vm1595, %v4552, 0.0
        %v4584 = vsel %vm1595, %v4554, 0.0
        %v4585 = vadd.f32 %v4583, %v4584
        %v4586 = vrot.slane %v4585, 4
        %v4587 = vadd.f32 %v4585, %v4586
        %v4588 = vrot.slane %v4587, 2
        %v4589 = vadd.f32 %v4587, %v4588
        %v4590 = vrot.slane %v4589, 1
        %v4591 = vadd.f32 %v4589, %v4590
        %v4592 = vrcp.pop 16.0
        %v4593 = vmul.f32 16.0, %v4592
        %v4594 = vsub.f32 1.0, %v4593
        %v4595 = vmul.f32 %v4592, %v4594
        %v4596 = vadd.f32 %v4592, %v4595
        %vm4597 = vweird.f32 %v4592
        %v4598 = vsel %vm4597, %v4592, %v4596
        %v4599 = vmul.f32 %v4564, %v4598
        %v4600 = vmul.f32 %v4573, %v4598
        %v4601 = vmul.f32 %v4582, %v4598
        %v4602 = vmul.f32 %v4591, %v4598
        %v4603 = vpack.c.bf16 %v4599, %v4599
        %v4604 = vpack.c.bf16 %v4600, %v4600
        %v4605 = vpack.c.bf16 %v4601, %v4601
        %v4606 = vpack.c.bf16 %v4602, %v4602
        %v4607 = vperm.slane %v530, 0
        %v4612 = vunpack.c.l.b16 %v4603
        %v4613 = vunpack.c.l.b16 %v4604
        %v4614 = vunpack.c.l.b16 %v4605
        %v4615 = vunpack.c.l.b16 %v4606
        %vm4616 = vcmask 1041409
        %v4617 = vsel %vm4616, %v4613, %v4612
        %vm4618 = vcmask 1042434
        %v4619 = vsel %vm4618, %v4614, %v4617
        %vm4620 = vcmask 1043459
        %v4621 = vsel %vm4620, %v4615, %v4619
        %v4622 = vpack.c.b16 %v4621, %v4621
        %v4627 = vunpack.c.l.b16 %v523
        %v4628 = vunpack.c.l.b16 %v524
        %v4629 = vunpack.c.l.b16 %v525
        %v4630 = vunpack.c.l.b16 %v526
        %v4631 = vpack.c.b16 %v4628, %v4627
        %v4632 = vpack.c.b16 %v4630, %v4629
        %v4636 = vsel %vm1595, %v4622, 0
        %4638 = vmatpush.bf16.msra.mxu0 0
        %4639 = vmatpush.bf16.msra.mxu0 0
        %4640 = vmatpush.bf16.msra.mxu0 0
        %4641 = vmatpush.bf16.msra.mxu0 0
        %4642 = vmatpush.bf16.msra.mxu0 0
        %4643 = vmatpush.bf16.msra.mxu0 0
        %4644 = vmatpush.bf16.msra.mxu0 %v4632
        %4645 = vmatpush.bf16.msra.mxu0 %v4631
        %4646 = vmatmul.bf16.gmra.mxu0 %v4636
        %v4647 = vpop.f32.mrf.mxu0
        %v4648 = vadd.f32 %v4607, %v4647
        %v4649 = vpop.f32.mrf.mxu0
        %4650 = vdwg.mxu0
        %v4651 = vmax.f32 %v4648, 0.0
        %v4652 = vpack.c.bf16 %v4651, %v4651
        %v4653 = vperm.slane %v548, 0
        %v4658 = vunpack.c.l.b16 %v543
        %v4659 = vunpack.c.l.b16 %v544
        %v4660 = vunpack.c.l.b16 %v545
        %v4661 = vunpack.c.l.b16 %v546
        %v4662 = vpack.c.b16 %v4659, %v4658
        %v4663 = vpack.c.b16 %v4661, %v4660
        %v4667 = vsel %vm1595, %v4652, 0
        %4669 = vmatpush.bf16.msra.mxu0 0
        %4670 = vmatpush.bf16.msra.mxu0 0
        %4671 = vmatpush.bf16.msra.mxu0 0
        %4672 = vmatpush.bf16.msra.mxu0 0
        %4673 = vmatpush.bf16.msra.mxu0 0
        %4674 = vmatpush.bf16.msra.mxu0 0
        %4675 = vmatpush.bf16.msra.mxu0 %v4663
        %4676 = vmatpush.bf16.msra.mxu0 %v4662
        %4677 = vmatmul.bf16.gmra.mxu0 %v4667
        %v4678 = vpop.f32.mrf.mxu0
        %v4679 = vadd.f32 %v4653, %v4678
        %v4680 = vpop.f32.mrf.mxu0
        %4681 = vdwg.mxu0
        %vm4682 = vcmp.lt.s32.totalorder %v2297, 8
        %v4683 = vsel %vm4682, %v4679, -1e+30
        %vm4684 = vcmask 1043456
        %v4685 = vsel %vm4684, %v4683, -inf
        %4686 = vmax.xlane.f32.xlu0 %v4685
        %v4687 = vpop.xlane.xlu0 %4686
        %v4688 = vsub.f32 %v4683, %v4687
        %v4689 = vmul.f32 %v4688, 1.442695
        %v4690 = vpow.pop %v4689
        %v4691 = vsel %vm4682, %v4690, 0.0
        %v4692 = vsel %vm4684, %v4691, 0.0
        %4693 = vadd.xlane.f32.xlu0 %v4692
        %v4694 = vpop.xlane.xlu0 %4693
        %v4695 = vlog2.pop %v4694
        %v4696 = vmul.f32 %v4695, 0.6931472
        %v4697 = vsub.f32 %v4688, %v4696
        %4698 = vst [vmem:[%s371] sm:$0xf] %v4697
        %s4699 = sand.u32 %s225, 1
        %s4700 = scalar_lea.sflag [#allocation6], %s4699
        %s4701 = sand.u32 %s225, 1
        %s4702 = smul.addr %s4701, 4
        %s4703 = scalar_lea.vmem [#allocation7], %s4702
        // Predicated region
        $region57: #{tpu_custom_call.1} parent=51 // pred_check
          %p4704 = pneg %p235
        $region58: #{tpu_custom_call.1} parent=51 // pred_check_branch
          %4706 = sbr.rel (%p4704) target = $region60
        $region59: #{tpu_custom_call.1} parent=51 // pred_region
          %4708 = vsyncadd %s4700, 0
          %s4709 = smul.addr %s34, 4
          %s4710 = scalar_lea.hbm %s9, %s4709
          %s4712 = sshll.u32 %s4703, 4
          %s4713 = int_to_ptr.vmem [resolvable:$true] %s4712
          %s4714 = sshll.u32 %s4710, 4
          %s4715 = int_to_ptr.hbm [resolvable:$true] %s4714
          %4717 = dma.vmem_to_hbm [thread:$0]  %s4713, 64, %s4715, %s4700
        $region60: #{tpu_custom_call.1} parent=51 // pred_fallthru
          _
      $region52: #{tpu_custom_call.1} parent=5 // pred_fallthru
        _
      %p4718 = scmp.le.s32.totalorder 2, %s29
      // Predicated region
      $region61: #{tpu_custom_call.1} parent=5 // pred_check
        %p4719 = pneg %p4718
      $region62: #{tpu_custom_call.1} parent=5 // pred_check_branch
        %4721 = sbr.rel (%p4719) target = $region64
      $region63: #{tpu_custom_call.1} parent=5 // pred_region
        %s4722 = ssub.s32 %s29, 2
        // Predicated region
        $region65: #{tpu_custom_call.1} parent=63 // pred_check
          %p4723 = pneg %p241
        $region66: #{tpu_custom_call.1} parent=63 // pred_check_branch
          %4725 = sbr.rel (%p4723) target = $region68
        $region67: #{tpu_custom_call.1} parent=63 // pred_region
          %s4726 = sand.u32 %s226, 1
          %s4727 = scalar_lea.sflag [#allocation6], %s4726
          %s4728 = sand.u32 %s226, 1
          %s4729 = smul.addr %s4728, 4
          %s4730 = scalar_lea.vmem [#allocation7], %s4729
          %4732 = dma.done %s4727, 64
        $region68: #{tpu_custom_call.1} parent=63 // pred_fallthru
          _
      $region64: #{tpu_custom_call.1} parent=5 // pred_fallthru
        _
    $region6: #{tpu_custom_call.1} parent=1 // loop_footer
      %s33 = sadd.s32 1, %s29
    $region7: #{tpu_custom_call.1} parent=1 // loop_footer_branch
      %28 = sbr.rel target = $region3
    $region8: #{tpu_custom_call.1} parent=1 // loop_exit
      _
    %4733 = vsyncpa [#allocation5], 1
    %s4734 = scalar_lea.sflag [#allocation5], 1
    %4735 = vsyncpa %s4734, 1
    %4736 = vsyncpa [#allocation6], 1
    %s4737 = scalar_lea.sflag [#allocation6], 1
    %4738 = vsyncpa %s4737, 1

</llo_original>
